<compile_context>
chip_gen: v5e
topology: v5e:2x2
jax: 0.10.0
libtpu: 0.0.40
codegen_flags: <defaults>
</compile_context>

<pallas_src>
import functools

import jax
import jax.numpy as jnp
from jax.experimental import pallas as pl
from jax.experimental.pallas import tpu as pltpu

# --- small, kernel-friendly hyperparameters (original: 512/512/8/8) ---
VOCAB_SIZE = 128      # len(chars) in the reference; synthetic here
N_EMBED    = 128
BLOCK_SIZE = 16
N_HEAD     = 4
N_LAYER    = 2
HEAD_SIZE  = N_EMBED // N_HEAD
LN_EPS     = 1e-5


def _layer_norm(x, g, b):
    mu = jnp.mean(x, axis=-1, keepdims=True)
    var = jnp.mean((x - mu) ** 2, axis=-1, keepdims=True)
    return (x - mu) * jax.lax.rsqrt(var + LN_EPS) * g + b


def _softmax_last(x):
    x = x - jnp.max(x, axis=-1, keepdims=True)
    p = jnp.exp(x)
    return p * pl.reciprocal(jnp.sum(p, axis=-1, keepdims=True), approx=True)


def _mm(a, w):
    """activation @ weight: bf16 MXU inputs, f32 accumulation.

    Weights arrive pre-cast to bf16 from the host; only the activation is cast.
    """
    return jnp.dot(a.astype(jnp.bfloat16), w, preferred_element_type=jnp.float32)


def model_kernel(idx_ref, emb_ref, vecs_ref, wqkv_ref, wp_ref, w1_ref, b1_ref,
                 w2_ref, lnf_ref, wlm_ref, blm_ref, o_ref, attn_ref,
                 *, batch, seq_len):
    """Entire model forward: embedding gather -> blocks -> ln_f -> lm_head."""
    M = batch * seq_len
    C = N_EMBED
    V = VOCAB_SIZE

    # ---- fused token + position embedding via one exact one-hot matmul ----
    # emb_ref rows [0:V] = token table, rows [V:V+T] = position table.
    ids = idx_ref[...]                                                  # (M, 1)
    col = jax.lax.broadcasted_iota(jnp.int32, (M, V + seq_len), 1)
    pos = jax.lax.broadcasted_iota(jnp.int32, (M, V + seq_len), 0) % seq_len
    onehot = (((col < V) & (ids == col)) |
              ((col >= V) & (pos + V == col))).astype(jnp.float32)      # two 1s/row
    x = jnp.dot(onehot, emb_ref[...], preferred_element_type=jnp.float32)  # (M, C)

    # ---- additive causal bias (0 / -1e30), built once, hoisted out of loops ----
    r = jax.lax.broadcasted_iota(jnp.int32, (seq_len, seq_len), 0)
    c = jax.lax.broadcasted_iota(jnp.int32, (seq_len, seq_len), 1)
    bias2d = jnp.where(r >= c, 0.0, -1e30).astype(jnp.float32)          # (T, T)
    bias = jnp.broadcast_to(bias2d[None, :, :], (batch, seq_len, seq_len))

    for l in range(N_LAYER):                      # static unroll over layers
        vl = vecs_ref[l]          # (6, C): ln1_g, ln1_b, bp, ln2_g, ln2_b, b2

        # --- multi-head causal self-attention on pre-LN input ---
        xn = _layer_norm(x, vl[0], vl[1])
        # Fused QKV projection; softmax scale already folded into Q columns.
        qkv = _mm(xn, wqkv_ref[l]).astype(jnp.bfloat16)                 # (M, 3C)
        q3 = qkv[:, :C].reshape(batch, seq_len, C)
        k3 = qkv[:, C:2 * C].reshape(batch, seq_len, C)
        v3 = qkv[:, 2 * C:].reshape(batch, seq_len, C)

        for h in range(N_HEAD):                   # static unroll over heads
            sl = slice(h * HEAD_SIZE, (h + 1) * HEAD_SIZE)
            wei = jnp.einsum('btd,bsd->bts', q3[:, :, sl], k3[:, :, sl],
                             preferred_element_type=jnp.float32)        # (B,T,T)
            wei = wei + bias
            p = _softmax_last(wei)                # dropout(p=0.2) -> identity
            oh = jnp.einsum('bts,bsd->btd', p.astype(jnp.bfloat16), v3[:, :, sl],
                            preferred_element_type=jnp.float32)         # (B,T,hs)
            attn_ref[:, sl] = oh.reshape(M, HEAD_SIZE)
        # Single full-K output projection over all heads.
        x = x + _mm(attn_ref[...], wp_ref[l]) + vl[2]                   # residual

        # --- feed-forward ---
        xn2 = _layer_norm(x, vl[3], vl[4])
        h1 = jnp.maximum(_mm(xn2, w1_ref[l]) + b1_ref[l], 0.0)          # ReLU
        x = x + _mm(h1, w2_ref[l]) + vl[5]                              # residual

    # --- final LayerNorm + lm_head ---
    xn = _layer_norm(x, lnf_ref[0], lnf_ref[1])
    o_ref[...] = _mm(xn, wlm_ref[...]) + blm_ref[...]


def bigram_forward(idx, params):
    """Forward pass; returns (logits, None) matching the targets=None path."""
    B, T = idx.shape
    M = B * T
    C = N_EMBED
    blocks = params["blocks"]
    # NOTE: reference scales scores by C**-0.5 with C = n_embed (not head_size).
    scale = float(C) ** -0.5

    def stack(name):
        return jnp.stack([blk[name] for blk in blocks], axis=0)

    # Host-side parameter packing (one-time glue in a real deployment):
    # fused QKV weight with the softmax scale folded into Q, all big weights bf16.
    wqkv = jnp.stack(
        [jnp.concatenate([blk["wq"] * scale, blk["wk"], blk["wv"]], axis=1)
         for blk in blocks], axis=0).astype(jnp.bfloat16)          # (L, C, 3C)
    wp = stack("wp").astype(jnp.bfloat16)                          # (L, C, C)
    w1 = stack("w1").astype(jnp.bfloat16)                          # (L, C, 4C)
    w2 = stack("w2").astype(jnp.bfloat16)                          # (L, 4C, C)
    wlm = params["w_lm"].astype(jnp.bfloat16)                      # (C, V)

    # Tiny per-layer C-vectors packed into one array: ln1_g/b, bp, ln2_g/b, b2.
    vecs = jnp.stack(
        [jnp.concatenate([blk["ln1_g"], blk["ln1_b"], blk["bp"],
                          blk["ln2_g"], blk["ln2_b"], blk["b2"]], axis=0)
         for blk in blocks], axis=0)                               # (L, 6, C) f32
    b1s = stack("b1")                                              # (L, 1, 4C) f32
    lnf = jnp.concatenate([params["lnf_g"], params["lnf_b"]], axis=0)   # (2, C)
    emb_table = jnp.concatenate(
        [params["tok_table"], params["pos_table"][:T]], axis=0)    # (V+T, C) f32
    idx2d = idx.reshape(M, 1).astype(jnp.int32)

    V = params["w_lm"].shape[1]
    # Whole model (~1 MiB of buffers) stays resident in VMEM: no grid needed.
    # M = B*T = 32 underfills the MXU rows; batching more sequences per call
    # (M -> 128/256) would be near-free throughput if the application allows it.
    logits2d = pl.pallas_call(
        functools.partial(model_kernel, batch=B, seq_len=T),
        out_shape=jax.ShapeDtypeStruct((M, V), jnp.float32),
        scratch_shapes=[pltpu.VMEM((M, C), jnp.float32)],          # per-layer head concat
        compiler_params=pltpu.CompilerParams(
            vmem_limit_bytes=8 * 1024 * 1024),                     # actual use ~1 MiB
    )(idx2d, emb_table, vecs, wqkv, wp, w1, b1s, w2, lnf, wlm, params["b_lm"])
    return logits2d.reshape(B, T, V), None


# ----------------------------- parameter init -----------------------------
def init_params(key):
    def nrm(k, shape, scale=0.02):
        return scale * jax.random.normal(k, shape, dtype=jnp.float32)

    keys = jax.random.split(key, 4 + N_LAYER)
    params = {
        "tok_table": nrm(keys[0], (VOCAB_SIZE, N_EMBED), 1.0),
        "pos_table": nrm(keys[1], (BLOCK_SIZE, N_EMBED), 1.0),
        "lnf_g": jnp.ones((1, N_EMBED), jnp.float32),
        "lnf_b": jnp.zeros((1, N_EMBED), jnp.float32),
        "w_lm": nrm(keys[2], (N_EMBED, VOCAB_SIZE)),
        "b_lm": jnp.zeros((1, VOCAB_SIZE), jnp.float32),
        "blocks": [],
    }
    for li in range(N_LAYER):
        bk = jax.random.split(keys[4 + li], 8)
        params["blocks"].append({
            "ln1_g": jnp.ones((1, N_EMBED), jnp.float32),
            "ln1_b": jnp.zeros((1, N_EMBED), jnp.float32),
            "wq": nrm(bk[0], (N_EMBED, N_EMBED)),
            "wk": nrm(bk[1], (N_EMBED, N_EMBED)),
            "wv": nrm(bk[2], (N_EMBED, N_EMBED)),
            "wp": nrm(bk[3], (N_EMBED, N_EMBED)),
            "bp": jnp.zeros((1, N_EMBED), jnp.float32),
            "ln2_g": jnp.ones((1, N_EMBED), jnp.float32),
            "ln2_b": jnp.zeros((1, N_EMBED), jnp.float32),
            "w1": nrm(bk[4], (N_EMBED, 4 * N_EMBED)),
            "b1": jnp.zeros((1, 4 * N_EMBED), jnp.float32),
            "w2": nrm(bk[5], (4 * N_EMBED, N_EMBED)),
            "b2": jnp.zeros((1, N_EMBED), jnp.float32),
        })
    return params


# ----------------------------- pure-JAX f32 reference -----------------------------
def ref_forward(idx, params):
    def ln(x, g, b):
        mu = jnp.mean(x, axis=-1, keepdims=True)
        var = jnp.mean((x - mu) ** 2, axis=-1, keepdims=True)
        return (x - mu) / jnp.sqrt(var + LN_EPS) * g + b

    B, T = idx.shape
    x = params["tok_table"][idx] + params["pos_table"][:T][None]
    tril = jnp.tril(jnp.ones((T, T), bool))
    for p in params["blocks"]:
        xn = ln(x, p["ln1_g"], p["ln1_b"])
        q = xn @ p["wq"]; k = xn @ p["wk"]; v = xn @ p["wv"]
        outs = []
        for h in range(N_HEAD):
            sl = slice(h * HEAD_SIZE, (h + 1) * HEAD_SIZE)
            wei = (q[..., sl] @ jnp.swapaxes(k[..., sl], -1, -2)) * (N_EMBED ** -0.5)
            wei = jnp.where(tril, wei, -jnp.inf)
            wei = jax.nn.softmax(wei, axis=-1)
            outs.append(wei @ v[..., sl])
        x = x + (jnp.concatenate(outs, -1) @ p["wp"] + p["bp"])
        xn2 = ln(x, p["ln2_g"], p["ln2_b"])
        x = x + (jnp.maximum(xn2 @ p["w1"] + p["b1"], 0.0) @ p["w2"] + p["b2"])
    x = ln(x, params["lnf_g"], params["lnf_b"])
    return x @ params["w_lm"] + params["b_lm"]


if __name__ == "__main__":
    key = jax.random.PRNGKey(0)
    pkey, ikey = jax.random.split(key)
    params = init_params(pkey)

    B, T = 2, BLOCK_SIZE
    idx = jax.random.randint(ikey, (B, T), 0, VOCAB_SIZE, dtype=jnp.int32)

    logits, loss = bigram_forward(idx, params)
    logits = jax.block_until_ready(logits)
    assert logits.shape == (B, T, VOCAB_SIZE)
    assert loss is None

    expected = jax.block_until_ready(ref_forward(idx, params))
    # Kernel uses bf16 MXU inputs with f32 accumulation and an approx EUP
    # reciprocal in softmax; reference is pure f32, so tolerance is loosened
    # (observed error ~1e-3).
    assert jnp.allclose(logits, expected, atol=2e-2, rtol=2e-2), (
        float(jnp.max(jnp.abs(logits - expected))))

    print("KERNEL_OK")
</pallas_src>

<mosaic_0001>
module attributes {stable_mosaic.version = 11 : i64} {
  func.func @model_kernel(%arg0: memref<32x1xi32, #tpu.memory_space<vmem>>, %arg1: memref<144x128xf32, #tpu.memory_space<vmem>>, %arg2: memref<2x6x128xf32, #tpu.memory_space<vmem>>, %arg3: memref<2x128x384xbf16, #tpu.memory_space<vmem>>, %arg4: memref<2x128x128xbf16, #tpu.memory_space<vmem>>, %arg5: memref<2x128x512xbf16, #tpu.memory_space<vmem>>, %arg6: memref<2x1x512xf32, #tpu.memory_space<vmem>>, %arg7: memref<2x512x128xbf16, #tpu.memory_space<vmem>>, %arg8: memref<2x128xf32, #tpu.memory_space<vmem>>, %arg9: memref<128x128xbf16, #tpu.memory_space<vmem>>, %arg10: memref<1x128xf32, #tpu.memory_space<vmem>>, %arg11: memref<32x128xf32, #tpu.memory_space<vmem>>, %arg12: memref<32x128xf32, #tpu.memory_space<vmem>>) attributes {dimension_semantics = [], scalar_prefetch = 0 : i64, scratch_operands = 1 : i64, tpu.core_type = #tpu.core_type<tc>} {
    %c0 = arith.constant 0 : index
    %c0_0 = arith.constant 0 : index
    %0 = vector.load %arg0[%c0, %c0_0] : memref<32x1xi32, #tpu.memory_space<vmem>>, vector<32x1xi32>
    %1 = tpu.iota {dimensions = array<i32: 1>} : vector<32x144xi32>
    %2 = tpu.iota {dimensions = array<i32: 0>} : vector<32x144xi32>
    %c16_i32 = arith.constant 16 : i32
    %c0_i32 = arith.constant 0 : i32
    %3 = arith.cmpi eq, %c16_i32, %c0_i32 : i32
    %c1_i32 = arith.constant 1 : i32
    %4 = arith.select %3, %c1_i32, %c16_i32 : i32
    %5 = vector.broadcast %4 : i32 to vector<32x144xi32>
    %6 = arith.remsi %2, %5 : vector<32x144xi32>
    %c0_i32_1 = arith.constant 0 : i32
    %7 = vector.broadcast %c0_i32_1 : i32 to vector<32x144xi32>
    %8 = arith.cmpi ne, %6, %7 : vector<32x144xi32>
    %c0_i32_2 = arith.constant 0 : i32
    %9 = vector.broadcast %c0_i32_2 : i32 to vector<32x144xi32>
    %10 = arith.cmpi slt, %6, %9 : vector<32x144xi32>
    %c0_i32_3 = arith.constant 0 : i32
    %11 = arith.cmpi slt, %4, %c0_i32_3 : i32
    %12 = vector.broadcast %11 : i1 to vector<32x144xi1>
    %13 = vector.broadcast %12 : vector<32x144xi1> to vector<32x144xi1>
    %14 = arith.xori %10, %13 : vector<32x144xi1>
    %15 = arith.andi %14, %8 : vector<32x144xi1>
    %16 = vector.broadcast %4 : i32 to vector<32x144xi32>
    %17 = arith.addi %6, %16 : vector<32x144xi32>
    %18 = arith.select %15, %17, %6 : vector<32x144xi1>, vector<32x144xi32>
    %c128_i32 = arith.constant 128 : i32
    %19 = vector.broadcast %c128_i32 : i32 to vector<32x144xi32>
    %20 = arith.cmpi slt, %1, %19 : vector<32x144xi32>
    %21 = vector.broadcast %0 : vector<32x1xi32> to vector<32x144xi32>
    %22 = arith.cmpi eq, %21, %1 : vector<32x144xi32>
    %23 = arith.andi %20, %22 : vector<32x144xi1>
    %c128_i32_4 = arith.constant 128 : i32
    %24 = vector.broadcast %c128_i32_4 : i32 to vector<32x144xi32>
    %25 = arith.cmpi sge, %1, %24 : vector<32x144xi32>
    %c128_i32_5 = arith.constant 128 : i32
    %26 = vector.broadcast %c128_i32_5 : i32 to vector<32x144xi32>
    %27 = arith.addi %18, %26 : vector<32x144xi32>
    %28 = arith.cmpi eq, %27, %1 : vector<32x144xi32>
    %29 = arith.andi %25, %28 : vector<32x144xi1>
    %30 = arith.ori %23, %29 : vector<32x144xi1>
    %31 = arith.extui %30 : vector<32x144xi1> to vector<32x144xi32>
    %32 = arith.sitofp %31 : vector<32x144xi32> to vector<32x144xf32>
    %c0_6 = arith.constant 0 : index
    %c0_7 = arith.constant 0 : index
    %33 = vector.load %arg1[%c0_6, %c0_7] : memref<144x128xf32, #tpu.memory_space<vmem>>, vector<144x128xf32>
    %cst = arith.constant dense<0.000000e+00> : vector<32x128xf32>
    %34 = tpu.matmul %32, %33, %cst {dimension_numbers = #tpu.dot_dimension_numbers<[1], [0], [0], [1], [0, 0, 1, 1], [], []>} : vector<32x144xf32>, vector<144x128xf32>, vector<32x128xf32> -> vector<32x128xf32>
    %35 = tpu.iota {dimensions = array<i32: 0>} : vector<16x16xi32>
    %36 = tpu.iota {dimensions = array<i32: 1>} : vector<16x16xi32>
    %37 = arith.cmpi sge, %35, %36 : vector<16x16xi32>
    %cst_8 = arith.constant 0.000000e+00 : f32
    %cst_9 = arith.constant -1.000000e+30 : f32
    %38 = vector.broadcast %cst_8 : f32 to vector<16x16xf32>
    %39 = vector.broadcast %cst_9 : f32 to vector<16x16xf32>
    %40 = arith.select %37, %38, %39 : vector<16x16xi1>, vector<16x16xf32>
    %41 = vector.shape_cast %40 : vector<16x16xf32> to vector<1x16x16xf32>
    %42 = vector.shape_cast %41 : vector<1x16x16xf32> to vector<1x16x16xf32>
    %43 = vector.broadcast %42 : vector<1x16x16xf32> to vector<2x16x16xf32>
    %c0_10 = arith.constant 0 : index
    %c0_11 = arith.constant 0 : index
    %c0_12 = arith.constant 0 : index
    %44 = vector.load %arg2[%c0_10, %c0_11, %c0_12] : memref<2x6x128xf32, #tpu.memory_space<vmem>>, vector<1x6x128xf32>
    %45 = vector.shape_cast %44 : vector<1x6x128xf32> to vector<6x128xf32>
    %46 = vector.extract_strided_slice %45 {offsets = [0, 0], sizes = [1, 128], strides = [1, 1]} : vector<6x128xf32> to vector<1x128xf32>
    %47 = vector.shape_cast %46 : vector<1x128xf32> to vector<128xf32>
    %48 = vector.extract_strided_slice %45 {offsets = [1, 0], sizes = [1, 128], strides = [1, 1]} : vector<6x128xf32> to vector<1x128xf32>
    %49 = vector.shape_cast %48 : vector<1x128xf32> to vector<128xf32>
    %cst_13 = arith.constant dense<0.000000e+00> : vector<32xf32>
    %50 = vector.multi_reduction <add>, %34, %cst_13 [1] : vector<32x128xf32> to vector<32xf32>
    %51 = vector.shape_cast %50 : vector<32xf32> to vector<32x1xf32>
    %cst_14 = arith.constant 1.280000e+02 : f32
    %52 = vector.broadcast %cst_14 : f32 to vector<32x1xf32>
    %53 = arith.divf %51, %52 : vector<32x1xf32>
    %54 = vector.broadcast %53 : vector<32x1xf32> to vector<32x128xf32>
    %55 = arith.subf %34, %54 : vector<32x128xf32>
    %56 = arith.mulf %55, %55 : vector<32x128xf32>
    %cst_15 = arith.constant dense<0.000000e+00> : vector<32xf32>
    %57 = vector.multi_reduction <add>, %56, %cst_15 [1] : vector<32x128xf32> to vector<32xf32>
    %58 = vector.shape_cast %57 : vector<32xf32> to vector<32x1xf32>
    %cst_16 = arith.constant 1.280000e+02 : f32
    %59 = vector.broadcast %cst_16 : f32 to vector<32x1xf32>
    %60 = arith.divf %58, %59 : vector<32x1xf32>
    %61 = vector.broadcast %53 : vector<32x1xf32> to vector<32x128xf32>
    %62 = arith.subf %34, %61 : vector<32x128xf32>
    %cst_17 = arith.constant 9.99999974E-6 : f32
    %63 = vector.broadcast %cst_17 : f32 to vector<32x1xf32>
    %64 = arith.addf %60, %63 : vector<32x1xf32>
    %65 = math.rsqrt %64 : vector<32x1xf32>
    %66 = vector.broadcast %65 : vector<32x1xf32> to vector<32x128xf32>
    %67 = arith.mulf %62, %66 : vector<32x128xf32>
    %68 = vector.shape_cast %47 : vector<128xf32> to vector<1x128xf32>
    %69 = vector.broadcast %68 : vector<1x128xf32> to vector<32x128xf32>
    %70 = arith.mulf %67, %69 : vector<32x128xf32>
    %71 = vector.shape_cast %49 : vector<128xf32> to vector<1x128xf32>
    %72 = vector.broadcast %71 : vector<1x128xf32> to vector<32x128xf32>
    %73 = arith.addf %70, %72 : vector<32x128xf32>
    %c0_18 = arith.constant 0 : index
    %c0_19 = arith.constant 0 : index
    %c0_20 = arith.constant 0 : index
    %74 = vector.load %arg3[%c0_18, %c0_19, %c0_20] : memref<2x128x384xbf16, #tpu.memory_space<vmem>>, vector<1x128x384xbf16>
    %75 = vector.shape_cast %74 : vector<1x128x384xbf16> to vector<128x384xbf16>
    %76 = arith.truncf %73 : vector<32x128xf32> to vector<32x128xbf16>
    %cst_21 = arith.constant dense<0.000000e+00> : vector<32x384xf32>
    %77 = tpu.matmul %76, %75, %cst_21 {dimension_numbers = #tpu.dot_dimension_numbers<[1], [0], [0], [1], [0, 0, 1, 1], [], []>} : vector<32x128xbf16>, vector<128x384xbf16>, vector<32x384xf32> -> vector<32x384xf32>
    %78 = arith.truncf %77 : vector<32x384xf32> to vector<32x384xbf16>
    %79 = vector.extract_strided_slice %78 {offsets = [0, 0], sizes = [32, 128], strides = [1, 1]} : vector<32x384xbf16> to vector<32x128xbf16>
    %80 = vector.shape_cast %79 : vector<32x128xbf16> to vector<2x16x128xbf16>
    %81 = vector.extract_strided_slice %78 {offsets = [0, 128], sizes = [32, 128], strides = [1, 1]} : vector<32x384xbf16> to vector<32x128xbf16>
    %82 = vector.shape_cast %81 : vector<32x128xbf16> to vector<2x16x128xbf16>
    %83 = vector.extract_strided_slice %78 {offsets = [0, 256], sizes = [32, 128], strides = [1, 1]} : vector<32x384xbf16> to vector<32x128xbf16>
    %84 = vector.shape_cast %83 : vector<32x128xbf16> to vector<2x16x128xbf16>
    %85 = vector.extract_strided_slice %80 {offsets = [0, 0, 0], sizes = [2, 16, 32], strides = [1, 1, 1]} : vector<2x16x128xbf16> to vector<2x16x32xbf16>
    %86 = vector.extract_strided_slice %82 {offsets = [0, 0, 0], sizes = [2, 16, 32], strides = [1, 1, 1]} : vector<2x16x128xbf16> to vector<2x16x32xbf16>
    "tpu.trace_start"() <{level = 10 : i32, message = "btd,bsd->bts"}> : () -> ()
    %cst_22 = arith.constant dense<0.000000e+00> : vector<2x16x16xf32>
    %87 = tpu.matmul %85, %86, %cst_22 {dimension_numbers = #tpu.dot_dimension_numbers<[2], [2], [1], [1], [0, 0, 0, 1, 1, 1], [0], [0]>} : vector<2x16x32xbf16>, vector<2x16x32xbf16>, vector<2x16x16xf32> -> vector<2x16x16xf32>
    "tpu.trace_stop"() : () -> ()
    %88 = arith.addf %87, %43 : vector<2x16x16xf32>
    %cst_23 = arith.constant dense<0xFF800000> : vector<2x16xf32>
    %89 = vector.multi_reduction <maximumf>, %88, %cst_23 [2] : vector<2x16x16xf32> to vector<2x16xf32>
    %90 = vector.shape_cast %89 : vector<2x16xf32> to vector<2x16x1xf32>
    %91 = vector.broadcast %90 : vector<2x16x1xf32> to vector<2x16x16xf32>
    %92 = arith.subf %88, %91 : vector<2x16x16xf32>
    %93 = math.exp %92 : vector<2x16x16xf32>
    %cst_24 = arith.constant dense<0.000000e+00> : vector<2x16xf32>
    %94 = vector.multi_reduction <add>, %93, %cst_24 [2] : vector<2x16x16xf32> to vector<2x16xf32>
    %95 = vector.shape_cast %94 : vector<2x16xf32> to vector<2x16x1xf32>
    %96 = tpu.reciprocal %95 {approx = true} : vector<2x16x1xf32> -> vector<2x16x1xf32>
    %97 = vector.broadcast %96 : vector<2x16x1xf32> to vector<2x16x16xf32>
    %98 = arith.mulf %93, %97 : vector<2x16x16xf32>
    %99 = arith.truncf %98 : vector<2x16x16xf32> to vector<2x16x16xbf16>
    %100 = vector.extract_strided_slice %84 {offsets = [0, 0, 0], sizes = [2, 16, 32], strides = [1, 1, 1]} : vector<2x16x128xbf16> to vector<2x16x32xbf16>
    "tpu.trace_start"() <{level = 10 : i32, message = "bts,bsd->btd"}> : () -> ()
    %cst_25 = arith.constant dense<0.000000e+00> : vector<2x16x32xf32>
    %101 = tpu.matmul %99, %100, %cst_25 {dimension_numbers = #tpu.dot_dimension_numbers<[2], [1], [1], [2], [0, 0, 0, 1, 1, 2], [0], [0]>} : vector<2x16x16xbf16>, vector<2x16x32xbf16>, vector<2x16x32xf32> -> vector<2x16x32xf32>
    "tpu.trace_stop"() : () -> ()
    %102 = vector.shape_cast %101 : vector<2x16x32xf32> to vector<32x32xf32>
    %c0_26 = arith.constant 0 : index
    %c0_27 = arith.constant 0 : index
    %103 = vector.load %arg12[%c0_26, %c0_27] : memref<32x128xf32, #tpu.memory_space<vmem>>, vector<32x32xf32>
    tpu.vector_store %arg12[%c0_26, %c0_27], %102 {strides = array<i32>} : memref<32x128xf32, #tpu.memory_space<vmem>>, vector<32x32xf32>,
    %104 = vector.extract_strided_slice %80 {offsets = [0, 0, 32], sizes = [2, 16, 32], strides = [1, 1, 1]} : vector<2x16x128xbf16> to vector<2x16x32xbf16>
    %105 = vector.extract_strided_slice %82 {offsets = [0, 0, 32], sizes = [2, 16, 32], strides = [1, 1, 1]} : vector<2x16x128xbf16> to vector<2x16x32xbf16>
    "tpu.trace_start"() <{level = 10 : i32, message = "btd,bsd->bts"}> : () -> ()
    %cst_28 = arith.constant dense<0.000000e+00> : vector<2x16x16xf32>
    %106 = tpu.matmul %104, %105, %cst_28 {dimension_numbers = #tpu.dot_dimension_numbers<[2], [2], [1], [1], [0, 0, 0, 1, 1, 1], [0], [0]>} : vector<2x16x32xbf16>, vector<2x16x32xbf16>, vector<2x16x16xf32> -> vector<2x16x16xf32>
    "tpu.trace_stop"() : () -> ()
    %107 = arith.addf %106, %43 : vector<2x16x16xf32>
    %cst_29 = arith.constant dense<0xFF800000> : vector<2x16xf32>
    %108 = vector.multi_reduction <maximumf>, %107, %cst_29 [2] : vector<2x16x16xf32> to vector<2x16xf32>
    %109 = vector.shape_cast %108 : vector<2x16xf32> to vector<2x16x1xf32>
    %110 = vector.broadcast %109 : vector<2x16x1xf32> to vector<2x16x16xf32>
    %111 = arith.subf %107, %110 : vector<2x16x16xf32>
    %112 = math.exp %111 : vector<2x16x16xf32>
    %cst_30 = arith.constant dense<0.000000e+00> : vector<2x16xf32>
    %113 = vector.multi_reduction <add>, %112, %cst_30 [2] : vector<2x16x16xf32> to vector<2x16xf32>
    %114 = vector.shape_cast %113 : vector<2x16xf32> to vector<2x16x1xf32>
    %115 = tpu.reciprocal %114 {approx = true} : vector<2x16x1xf32> -> vector<2x16x1xf32>
    %116 = vector.broadcast %115 : vector<2x16x1xf32> to vector<2x16x16xf32>
    %117 = arith.mulf %112, %116 : vector<2x16x16xf32>
    %118 = arith.truncf %117 : vector<2x16x16xf32> to vector<2x16x16xbf16>
    %119 = vector.extract_strided_slice %84 {offsets = [0, 0, 32], sizes = [2, 16, 32], strides = [1, 1, 1]} : vector<2x16x128xbf16> to vector<2x16x32xbf16>
    "tpu.trace_start"() <{level = 10 : i32, message = "bts,bsd->btd"}> : () -> ()
    %cst_31 = arith.constant dense<0.000000e+00> : vector<2x16x32xf32>
    %120 = tpu.matmul %118, %119, %cst_31 {dimension_numbers = #tpu.dot_dimension_numbers<[2], [1], [1], [2], [0, 0, 0, 1, 1, 2], [0], [0]>} : vector<2x16x16xbf16>, vector<2x16x32xbf16>, vector<2x16x32xf32> -> vector<2x16x32xf32>
    "tpu.trace_stop"() : () -> ()
    %121 = vector.shape_cast %120 : vector<2x16x32xf32> to vector<32x32xf32>
    %c0_32 = arith.constant 0 : index
    %c32 = arith.constant 32 : index
    %122 = vector.load %arg12[%c0_32, %c32] : memref<32x128xf32, #tpu.memory_space<vmem>>, vector<32x32xf32>
    tpu.vector_store %arg12[%c0_32, %c32], %121 {strides = array<i32>} : memref<32x128xf32, #tpu.memory_space<vmem>>, vector<32x32xf32>,
    %123 = vector.extract_strided_slice %80 {offsets = [0, 0, 64], sizes = [2, 16, 32], strides = [1, 1, 1]} : vector<2x16x128xbf16> to vector<2x16x32xbf16>
    %124 = vector.extract_strided_slice %82 {offsets = [0, 0, 64], sizes = [2, 16, 32], strides = [1, 1, 1]} : vector<2x16x128xbf16> to vector<2x16x32xbf16>
    "tpu.trace_start"() <{level = 10 : i32, message = "btd,bsd->bts"}> : () -> ()
    %cst_33 = arith.constant dense<0.000000e+00> : vector<2x16x16xf32>
    %125 = tpu.matmul %123, %124, %cst_33 {dimension_numbers = #tpu.dot_dimension_numbers<[2], [2], [1], [1], [0, 0, 0, 1, 1, 1], [0], [0]>} : vector<2x16x32xbf16>, vector<2x16x32xbf16>, vector<2x16x16xf32> -> vector<2x16x16xf32>
    "tpu.trace_stop"() : () -> ()
    %126 = arith.addf %125, %43 : vector<2x16x16xf32>
    %cst_34 = arith.constant dense<0xFF800000> : vector<2x16xf32>
    %127 = vector.multi_reduction <maximumf>, %126, %cst_34 [2] : vector<2x16x16xf32> to vector<2x16xf32>
    %128 = vector.shape_cast %127 : vector<2x16xf32> to vector<2x16x1xf32>
    %129 = vector.broadcast %128 : vector<2x16x1xf32> to vector<2x16x16xf32>
    %130 = arith.subf %126, %129 : vector<2x16x16xf32>
    %131 = math.exp %130 : vector<2x16x16xf32>
    %cst_35 = arith.constant dense<0.000000e+00> : vector<2x16xf32>
    %132 = vector.multi_reduction <add>, %131, %cst_35 [2] : vector<2x16x16xf32> to vector<2x16xf32>
    %133 = vector.shape_cast %132 : vector<2x16xf32> to vector<2x16x1xf32>
    %134 = tpu.reciprocal %133 {approx = true} : vector<2x16x1xf32> -> vector<2x16x1xf32>
    %135 = vector.broadcast %134 : vector<2x16x1xf32> to vector<2x16x16xf32>
    %136 = arith.mulf %131, %135 : vector<2x16x16xf32>
    %137 = arith.truncf %136 : vector<2x16x16xf32> to vector<2x16x16xbf16>
    %138 = vector.extract_strided_slice %84 {offsets = [0, 0, 64], sizes = [2, 16, 32], strides = [1, 1, 1]} : vector<2x16x128xbf16> to vector<2x16x32xbf16>
    "tpu.trace_start"() <{level = 10 : i32, message = "bts,bsd->btd"}> : () -> ()
    %cst_36 = arith.constant dense<0.000000e+00> : vector<2x16x32xf32>
    %139 = tpu.matmul %137, %138, %cst_36 {dimension_numbers = #tpu.dot_dimension_numbers<[2], [1], [1], [2], [0, 0, 0, 1, 1, 2], [0], [0]>} : vector<2x16x16xbf16>, vector<2x16x32xbf16>, vector<2x16x32xf32> -> vector<2x16x32xf32>
    "tpu.trace_stop"() : () -> ()
    %140 = vector.shape_cast %139 : vector<2x16x32xf32> to vector<32x32xf32>
    %c0_37 = arith.constant 0 : index
    %c64 = arith.constant 64 : index
    %141 = vector.load %arg12[%c0_37, %c64] : memref<32x128xf32, #tpu.memory_space<vmem>>, vector<32x32xf32>
    tpu.vector_store %arg12[%c0_37, %c64], %140 {strides = array<i32>} : memref<32x128xf32, #tpu.memory_space<vmem>>, vector<32x32xf32>,
    %142 = vector.extract_strided_slice %80 {offsets = [0, 0, 96], sizes = [2, 16, 32], strides = [1, 1, 1]} : vector<2x16x128xbf16> to vector<2x16x32xbf16>
    %143 = vector.extract_strided_slice %82 {offsets = [0, 0, 96], sizes = [2, 16, 32], strides = [1, 1, 1]} : vector<2x16x128xbf16> to vector<2x16x32xbf16>
    "tpu.trace_start"() <{level = 10 : i32, message = "btd,bsd->bts"}> : () -> ()
    %cst_38 = arith.constant dense<0.000000e+00> : vector<2x16x16xf32>
    %144 = tpu.matmul %142, %143, %cst_38 {dimension_numbers = #tpu.dot_dimension_numbers<[2], [2], [1], [1], [0, 0, 0, 1, 1, 1], [0], [0]>} : vector<2x16x32xbf16>, vector<2x16x32xbf16>, vector<2x16x16xf32> -> vector<2x16x16xf32>
    "tpu.trace_stop"() : () -> ()
    %145 = arith.addf %144, %43 : vector<2x16x16xf32>
    %cst_39 = arith.constant dense<0xFF800000> : vector<2x16xf32>
    %146 = vector.multi_reduction <maximumf>, %145, %cst_39 [2] : vector<2x16x16xf32> to vector<2x16xf32>
    %147 = vector.shape_cast %146 : vector<2x16xf32> to vector<2x16x1xf32>
    %148 = vector.broadcast %147 : vector<2x16x1xf32> to vector<2x16x16xf32>
    %149 = arith.subf %145, %148 : vector<2x16x16xf32>
    %150 = math.exp %149 : vector<2x16x16xf32>
    %cst_40 = arith.constant dense<0.000000e+00> : vector<2x16xf32>
    %151 = vector.multi_reduction <add>, %150, %cst_40 [2] : vector<2x16x16xf32> to vector<2x16xf32>
    %152 = vector.shape_cast %151 : vector<2x16xf32> to vector<2x16x1xf32>
    %153 = tpu.reciprocal %152 {approx = true} : vector<2x16x1xf32> -> vector<2x16x1xf32>
    %154 = vector.broadcast %153 : vector<2x16x1xf32> to vector<2x16x16xf32>
    %155 = arith.mulf %150, %154 : vector<2x16x16xf32>
    %156 = arith.truncf %155 : vector<2x16x16xf32> to vector<2x16x16xbf16>
    %157 = vector.extract_strided_slice %84 {offsets = [0, 0, 96], sizes = [2, 16, 32], strides = [1, 1, 1]} : vector<2x16x128xbf16> to vector<2x16x32xbf16>
    "tpu.trace_start"() <{level = 10 : i32, message = "bts,bsd->btd"}> : () -> ()
    %cst_41 = arith.constant dense<0.000000e+00> : vector<2x16x32xf32>
    %158 = tpu.matmul %156, %157, %cst_41 {dimension_numbers = #tpu.dot_dimension_numbers<[2], [1], [1], [2], [0, 0, 0, 1, 1, 2], [0], [0]>} : vector<2x16x16xbf16>, vector<2x16x32xbf16>, vector<2x16x32xf32> -> vector<2x16x32xf32>
    "tpu.trace_stop"() : () -> ()
    %159 = vector.shape_cast %158 : vector<2x16x32xf32> to vector<32x32xf32>
    %c0_42 = arith.constant 0 : index
    %c96 = arith.constant 96 : index
    %160 = vector.load %arg12[%c0_42, %c96] : memref<32x128xf32, #tpu.memory_space<vmem>>, vector<32x32xf32>
    tpu.vector_store %arg12[%c0_42, %c96], %159 {strides = array<i32>} : memref<32x128xf32, #tpu.memory_space<vmem>>, vector<32x32xf32>,
    %c0_43 = arith.constant 0 : index
    %c0_44 = arith.constant 0 : index
    %161 = vector.load %arg12[%c0_43, %c0_44] : memref<32x128xf32, #tpu.memory_space<vmem>>, vector<32x128xf32>
    %c0_45 = arith.constant 0 : index
    %c0_46 = arith.constant 0 : index
    %c0_47 = arith.constant 0 : index
    %162 = vector.load %arg4[%c0_45, %c0_46, %c0_47] : memref<2x128x128xbf16, #tpu.memory_space<vmem>>, vector<1x128x128xbf16>
    %163 = vector.shape_cast %162 : vector<1x128x128xbf16> to vector<128x128xbf16>
    %164 = arith.truncf %161 : vector<32x128xf32> to vector<32x128xbf16>
    %cst_48 = arith.constant dense<0.000000e+00> : vector<32x128xf32>
    %165 = tpu.matmul %164, %163, %cst_48 {dimension_numbers = #tpu.dot_dimension_numbers<[1], [0], [0], [1], [0, 0, 1, 1], [], []>} : vector<32x128xbf16>, vector<128x128xbf16>, vector<32x128xf32> -> vector<32x128xf32>
    %166 = arith.addf %34, %165 : vector<32x128xf32>
    %167 = vector.extract_strided_slice %45 {offsets = [2, 0], sizes = [1, 128], strides = [1, 1]} : vector<6x128xf32> to vector<1x128xf32>
    %168 = vector.shape_cast %167 : vector<1x128xf32> to vector<128xf32>
    %169 = vector.shape_cast %168 : vector<128xf32> to vector<1x128xf32>
    %170 = vector.broadcast %169 : vector<1x128xf32> to vector<32x128xf32>
    %171 = arith.addf %166, %170 : vector<32x128xf32>
    %172 = vector.extract_strided_slice %45 {offsets = [3, 0], sizes = [1, 128], strides = [1, 1]} : vector<6x128xf32> to vector<1x128xf32>
    %173 = vector.shape_cast %172 : vector<1x128xf32> to vector<128xf32>
    %174 = vector.extract_strided_slice %45 {offsets = [4, 0], sizes = [1, 128], strides = [1, 1]} : vector<6x128xf32> to vector<1x128xf32>
    %175 = vector.shape_cast %174 : vector<1x128xf32> to vector<128xf32>
    %cst_49 = arith.constant dense<0.000000e+00> : vector<32xf32>
    %176 = vector.multi_reduction <add>, %171, %cst_49 [1] : vector<32x128xf32> to vector<32xf32>
    %177 = vector.shape_cast %176 : vector<32xf32> to vector<32x1xf32>
    %cst_50 = arith.constant 1.280000e+02 : f32
    %178 = vector.broadcast %cst_50 : f32 to vector<32x1xf32>
    %179 = arith.divf %177, %178 : vector<32x1xf32>
    %180 = vector.broadcast %179 : vector<32x1xf32> to vector<32x128xf32>
    %181 = arith.subf %171, %180 : vector<32x128xf32>
    %182 = arith.mulf %181, %181 : vector<32x128xf32>
    %cst_51 = arith.constant dense<0.000000e+00> : vector<32xf32>
    %183 = vector.multi_reduction <add>, %182, %cst_51 [1] : vector<32x128xf32> to vector<32xf32>
    %184 = vector.shape_cast %183 : vector<32xf32> to vector<32x1xf32>
    %cst_52 = arith.constant 1.280000e+02 : f32
    %185 = vector.broadcast %cst_52 : f32 to vector<32x1xf32>
    %186 = arith.divf %184, %185 : vector<32x1xf32>
    %187 = vector.broadcast %179 : vector<32x1xf32> to vector<32x128xf32>
    %188 = arith.subf %171, %187 : vector<32x128xf32>
    %cst_53 = arith.constant 9.99999974E-6 : f32
    %189 = vector.broadcast %cst_53 : f32 to vector<32x1xf32>
    %190 = arith.addf %186, %189 : vector<32x1xf32>
    %191 = math.rsqrt %190 : vector<32x1xf32>
    %192 = vector.broadcast %191 : vector<32x1xf32> to vector<32x128xf32>
    %193 = arith.mulf %188, %192 : vector<32x128xf32>
    %194 = vector.shape_cast %173 : vector<128xf32> to vector<1x128xf32>
    %195 = vector.broadcast %194 : vector<1x128xf32> to vector<32x128xf32>
    %196 = arith.mulf %193, %195 : vector<32x128xf32>
    %197 = vector.shape_cast %175 : vector<128xf32> to vector<1x128xf32>
    %198 = vector.broadcast %197 : vector<1x128xf32> to vector<32x128xf32>
    %199 = arith.addf %196, %198 : vector<32x128xf32>
    %c0_54 = arith.constant 0 : index
    %c0_55 = arith.constant 0 : index
    %c0_56 = arith.constant 0 : index
    %200 = vector.load %arg5[%c0_54, %c0_55, %c0_56] : memref<2x128x512xbf16, #tpu.memory_space<vmem>>, vector<1x128x512xbf16>
    %201 = vector.shape_cast %200 : vector<1x128x512xbf16> to vector<128x512xbf16>
    %202 = arith.truncf %199 : vector<32x128xf32> to vector<32x128xbf16>
    %cst_57 = arith.constant dense<0.000000e+00> : vector<32x512xf32>
    %203 = tpu.matmul %202, %201, %cst_57 {dimension_numbers = #tpu.dot_dimension_numbers<[1], [0], [0], [1], [0, 0, 1, 1], [], []>} : vector<32x128xbf16>, vector<128x512xbf16>, vector<32x512xf32> -> vector<32x512xf32>
    %c0_58 = arith.constant 0 : index
    %c0_59 = arith.constant 0 : index
    %c0_60 = arith.constant 0 : index
    %204 = vector.load %arg6[%c0_58, %c0_59, %c0_60] : memref<2x1x512xf32, #tpu.memory_space<vmem>>, vector<1x1x512xf32>
    %205 = vector.shape_cast %204 : vector<1x1x512xf32> to vector<1x512xf32>
    %206 = vector.broadcast %205 : vector<1x512xf32> to vector<32x512xf32>
    %207 = arith.addf %203, %206 : vector<32x512xf32>
    %cst_61 = arith.constant 0.000000e+00 : f32
    %208 = vector.broadcast %cst_61 : f32 to vector<32x512xf32>
    %209 = arith.maximumf %207, %208 : vector<32x512xf32>
    %c0_62 = arith.constant 0 : index
    %c0_63 = arith.constant 0 : index
    %c0_64 = arith.constant 0 : index
    %210 = vector.load %arg7[%c0_62, %c0_63, %c0_64] : memref<2x512x128xbf16, #tpu.memory_space<vmem>>, vector<1x512x128xbf16>
    %211 = vector.shape_cast %210 : vector<1x512x128xbf16> to vector<512x128xbf16>
    %212 = arith.truncf %209 : vector<32x512xf32> to vector<32x512xbf16>
    %cst_65 = arith.constant dense<0.000000e+00> : vector<32x128xf32>
    %213 = tpu.matmul %212, %211, %cst_65 {dimension_numbers = #tpu.dot_dimension_numbers<[1], [0], [0], [1], [0, 0, 1, 1], [], []>} : vector<32x512xbf16>, vector<512x128xbf16>, vector<32x128xf32> -> vector<32x128xf32>
    %214 = arith.addf %171, %213 : vector<32x128xf32>
    %215 = vector.extract_strided_slice %45 {offsets = [5, 0], sizes = [1, 128], strides = [1, 1]} : vector<6x128xf32> to vector<1x128xf32>
    %216 = vector.shape_cast %215 : vector<1x128xf32> to vector<128xf32>
    %217 = vector.shape_cast %216 : vector<128xf32> to vector<1x128xf32>
    %218 = vector.broadcast %217 : vector<1x128xf32> to vector<32x128xf32>
    %219 = arith.addf %214, %218 : vector<32x128xf32>
    %c1 = arith.constant 1 : index
    %c0_66 = arith.constant 0 : index
    %c0_67 = arith.constant 0 : index
    %220 = vector.load %arg2[%c1, %c0_66, %c0_67] : memref<2x6x128xf32, #tpu.memory_space<vmem>>, vector<1x6x128xf32>
    %221 = vector.shape_cast %220 : vector<1x6x128xf32> to vector<6x128xf32>
    %222 = vector.extract_strided_slice %221 {offsets = [0, 0], sizes = [1, 128], strides = [1, 1]} : vector<6x128xf32> to vector<1x128xf32>
    %223 = vector.shape_cast %222 : vector<1x128xf32> to vector<128xf32>
    %224 = vector.extract_strided_slice %221 {offsets = [1, 0], sizes = [1, 128], strides = [1, 1]} : vector<6x128xf32> to vector<1x128xf32>
    %225 = vector.shape_cast %224 : vector<1x128xf32> to vector<128xf32>
    %cst_68 = arith.constant dense<0.000000e+00> : vector<32xf32>
    %226 = vector.multi_reduction <add>, %219, %cst_68 [1] : vector<32x128xf32> to vector<32xf32>
    %227 = vector.shape_cast %226 : vector<32xf32> to vector<32x1xf32>
    %cst_69 = arith.constant 1.280000e+02 : f32
    %228 = vector.broadcast %cst_69 : f32 to vector<32x1xf32>
    %229 = arith.divf %227, %228 : vector<32x1xf32>
    %230 = vector.broadcast %229 : vector<32x1xf32> to vector<32x128xf32>
    %231 = arith.subf %219, %230 : vector<32x128xf32>
    %232 = arith.mulf %231, %231 : vector<32x128xf32>
    %cst_70 = arith.constant dense<0.000000e+00> : vector<32xf32>
    %233 = vector.multi_reduction <add>, %232, %cst_70 [1] : vector<32x128xf32> to vector<32xf32>
    %234 = vector.shape_cast %233 : vector<32xf32> to vector<32x1xf32>
    %cst_71 = arith.constant 1.280000e+02 : f32
    %235 = vector.broadcast %cst_71 : f32 to vector<32x1xf32>
    %236 = arith.divf %234, %235 : vector<32x1xf32>
    %237 = vector.broadcast %229 : vector<32x1xf32> to vector<32x128xf32>
    %238 = arith.subf %219, %237 : vector<32x128xf32>
    %cst_72 = arith.constant 9.99999974E-6 : f32
    %239 = vector.broadcast %cst_72 : f32 to vector<32x1xf32>
    %240 = arith.addf %236, %239 : vector<32x1xf32>
    %241 = math.rsqrt %240 : vector<32x1xf32>
    %242 = vector.broadcast %241 : vector<32x1xf32> to vector<32x128xf32>
    %243 = arith.mulf %238, %242 : vector<32x128xf32>
    %244 = vector.shape_cast %223 : vector<128xf32> to vector<1x128xf32>
    %245 = vector.broadcast %244 : vector<1x128xf32> to vector<32x128xf32>
    %246 = arith.mulf %243, %245 : vector<32x128xf32>
    %247 = vector.shape_cast %225 : vector<128xf32> to vector<1x128xf32>
    %248 = vector.broadcast %247 : vector<1x128xf32> to vector<32x128xf32>
    %249 = arith.addf %246, %248 : vector<32x128xf32>
    %c1_73 = arith.constant 1 : index
    %c0_74 = arith.constant 0 : index
    %c0_75 = arith.constant 0 : index
    %250 = vector.load %arg3[%c1_73, %c0_74, %c0_75] : memref<2x128x384xbf16, #tpu.memory_space<vmem>>, vector<1x128x384xbf16>
    %251 = vector.shape_cast %250 : vector<1x128x384xbf16> to vector<128x384xbf16>
    %252 = arith.truncf %249 : vector<32x128xf32> to vector<32x128xbf16>
    %cst_76 = arith.constant dense<0.000000e+00> : vector<32x384xf32>
    %253 = tpu.matmul %252, %251, %cst_76 {dimension_numbers = #tpu.dot_dimension_numbers<[1], [0], [0], [1], [0, 0, 1, 1], [], []>} : vector<32x128xbf16>, vector<128x384xbf16>, vector<32x384xf32> -> vector<32x384xf32>
    %254 = arith.truncf %253 : vector<32x384xf32> to vector<32x384xbf16>
    %255 = vector.extract_strided_slice %254 {offsets = [0, 0], sizes = [32, 128], strides = [1, 1]} : vector<32x384xbf16> to vector<32x128xbf16>
    %256 = vector.shape_cast %255 : vector<32x128xbf16> to vector<2x16x128xbf16>
    %257 = vector.extract_strided_slice %254 {offsets = [0, 128], sizes = [32, 128], strides = [1, 1]} : vector<32x384xbf16> to vector<32x128xbf16>
    %258 = vector.shape_cast %257 : vector<32x128xbf16> to vector<2x16x128xbf16>
    %259 = vector.extract_strided_slice %254 {offsets = [0, 256], sizes = [32, 128], strides = [1, 1]} : vector<32x384xbf16> to vector<32x128xbf16>
    %260 = vector.shape_cast %259 : vector<32x128xbf16> to vector<2x16x128xbf16>
    %261 = vector.extract_strided_slice %256 {offsets = [0, 0, 0], sizes = [2, 16, 32], strides = [1, 1, 1]} : vector<2x16x128xbf16> to vector<2x16x32xbf16>
    %262 = vector.extract_strided_slice %258 {offsets = [0, 0, 0], sizes = [2, 16, 32], strides = [1, 1, 1]} : vector<2x16x128xbf16> to vector<2x16x32xbf16>
    "tpu.trace_start"() <{level = 10 : i32, message = "btd,bsd->bts"}> : () -> ()
    %cst_77 = arith.constant dense<0.000000e+00> : vector<2x16x16xf32>
    %263 = tpu.matmul %261, %262, %cst_77 {dimension_numbers = #tpu.dot_dimension_numbers<[2], [2], [1], [1], [0, 0, 0, 1, 1, 1], [0], [0]>} : vector<2x16x32xbf16>, vector<2x16x32xbf16>, vector<2x16x16xf32> -> vector<2x16x16xf32>
    "tpu.trace_stop"() : () -> ()
    %264 = arith.addf %263, %43 : vector<2x16x16xf32>
    %cst_78 = arith.constant dense<0xFF800000> : vector<2x16xf32>
    %265 = vector.multi_reduction <maximumf>, %264, %cst_78 [2] : vector<2x16x16xf32> to vector<2x16xf32>
    %266 = vector.shape_cast %265 : vector<2x16xf32> to vector<2x16x1xf32>
    %267 = vector.broadcast %266 : vector<2x16x1xf32> to vector<2x16x16xf32>
    %268 = arith.subf %264, %267 : vector<2x16x16xf32>
    %269 = math.exp %268 : vector<2x16x16xf32>
    %cst_79 = arith.constant dense<0.000000e+00> : vector<2x16xf32>
    %270 = vector.multi_reduction <add>, %269, %cst_79 [2] : vector<2x16x16xf32> to vector<2x16xf32>
    %271 = vector.shape_cast %270 : vector<2x16xf32> to vector<2x16x1xf32>
    %272 = tpu.reciprocal %271 {approx = true} : vector<2x16x1xf32> -> vector<2x16x1xf32>
    %273 = vector.broadcast %272 : vector<2x16x1xf32> to vector<2x16x16xf32>
    %274 = arith.mulf %269, %273 : vector<2x16x16xf32>
    %275 = arith.truncf %274 : vector<2x16x16xf32> to vector<2x16x16xbf16>
    %276 = vector.extract_strided_slice %260 {offsets = [0, 0, 0], sizes = [2, 16, 32], strides = [1, 1, 1]} : vector<2x16x128xbf16> to vector<2x16x32xbf16>
    "tpu.trace_start"() <{level = 10 : i32, message = "bts,bsd->btd"}> : () -> ()
    %cst_80 = arith.constant dense<0.000000e+00> : vector<2x16x32xf32>
    %277 = tpu.matmul %275, %276, %cst_80 {dimension_numbers = #tpu.dot_dimension_numbers<[2], [1], [1], [2], [0, 0, 0, 1, 1, 2], [0], [0]>} : vector<2x16x16xbf16>, vector<2x16x32xbf16>, vector<2x16x32xf32> -> vector<2x16x32xf32>
    "tpu.trace_stop"() : () -> ()
    %278 = vector.shape_cast %277 : vector<2x16x32xf32> to vector<32x32xf32>
    %c0_81 = arith.constant 0 : index
    %c0_82 = arith.constant 0 : index
    %279 = vector.load %arg12[%c0_81, %c0_82] : memref<32x128xf32, #tpu.memory_space<vmem>>, vector<32x32xf32>
    tpu.vector_store %arg12[%c0_81, %c0_82], %278 {strides = array<i32>} : memref<32x128xf32, #tpu.memory_space<vmem>>, vector<32x32xf32>,
    %280 = vector.extract_strided_slice %256 {offsets = [0, 0, 32], sizes = [2, 16, 32], strides = [1, 1, 1]} : vector<2x16x128xbf16> to vector<2x16x32xbf16>
    %281 = vector.extract_strided_slice %258 {offsets = [0, 0, 32], sizes = [2, 16, 32], strides = [1, 1, 1]} : vector<2x16x128xbf16> to vector<2x16x32xbf16>
    "tpu.trace_start"() <{level = 10 : i32, message = "btd,bsd->bts"}> : () -> ()
    %cst_83 = arith.constant dense<0.000000e+00> : vector<2x16x16xf32>
    %282 = tpu.matmul %280, %281, %cst_83 {dimension_numbers = #tpu.dot_dimension_numbers<[2], [2], [1], [1], [0, 0, 0, 1, 1, 1], [0], [0]>} : vector<2x16x32xbf16>, vector<2x16x32xbf16>, vector<2x16x16xf32> -> vector<2x16x16xf32>
    "tpu.trace_stop"() : () -> ()
    %283 = arith.addf %282, %43 : vector<2x16x16xf32>
    %cst_84 = arith.constant dense<0xFF800000> : vector<2x16xf32>
    %284 = vector.multi_reduction <maximumf>, %283, %cst_84 [2] : vector<2x16x16xf32> to vector<2x16xf32>
    %285 = vector.shape_cast %284 : vector<2x16xf32> to vector<2x16x1xf32>
    %286 = vector.broadcast %285 : vector<2x16x1xf32> to vector<2x16x16xf32>
    %287 = arith.subf %283, %286 : vector<2x16x16xf32>
    %288 = math.exp %287 : vector<2x16x16xf32>
    %cst_85 = arith.constant dense<0.000000e+00> : vector<2x16xf32>
    %289 = vector.multi_reduction <add>, %288, %cst_85 [2] : vector<2x16x16xf32> to vector<2x16xf32>
    %290 = vector.shape_cast %289 : vector<2x16xf32> to vector<2x16x1xf32>
    %291 = tpu.reciprocal %290 {approx = true} : vector<2x16x1xf32> -> vector<2x16x1xf32>
    %292 = vector.broadcast %291 : vector<2x16x1xf32> to vector<2x16x16xf32>
    %293 = arith.mulf %288, %292 : vector<2x16x16xf32>
    %294 = arith.truncf %293 : vector<2x16x16xf32> to vector<2x16x16xbf16>
    %295 = vector.extract_strided_slice %260 {offsets = [0, 0, 32], sizes = [2, 16, 32], strides = [1, 1, 1]} : vector<2x16x128xbf16> to vector<2x16x32xbf16>
    "tpu.trace_start"() <{level = 10 : i32, message = "bts,bsd->btd"}> : () -> ()
    %cst_86 = arith.constant dense<0.000000e+00> : vector<2x16x32xf32>
    %296 = tpu.matmul %294, %295, %cst_86 {dimension_numbers = #tpu.dot_dimension_numbers<[2], [1], [1], [2], [0, 0, 0, 1, 1, 2], [0], [0]>} : vector<2x16x16xbf16>, vector<2x16x32xbf16>, vector<2x16x32xf32> -> vector<2x16x32xf32>
    "tpu.trace_stop"() : () -> ()
    %297 = vector.shape_cast %296 : vector<2x16x32xf32> to vector<32x32xf32>
    %c0_87 = arith.constant 0 : index
    %c32_88 = arith.constant 32 : index
    %298 = vector.load %arg12[%c0_87, %c32_88] : memref<32x128xf32, #tpu.memory_space<vmem>>, vector<32x32xf32>
    tpu.vector_store %arg12[%c0_87, %c32_88], %297 {strides = array<i32>} : memref<32x128xf32, #tpu.memory_space<vmem>>, vector<32x32xf32>,
    %299 = vector.extract_strided_slice %256 {offsets = [0, 0, 64], sizes = [2, 16, 32], strides = [1, 1, 1]} : vector<2x16x128xbf16> to vector<2x16x32xbf16>
    %300 = vector.extract_strided_slice %258 {offsets = [0, 0, 64], sizes = [2, 16, 32], strides = [1, 1, 1]} : vector<2x16x128xbf16> to vector<2x16x32xbf16>
    "tpu.trace_start"() <{level = 10 : i32, message = "btd,bsd->bts"}> : () -> ()
    %cst_89 = arith.constant dense<0.000000e+00> : vector<2x16x16xf32>
    %301 = tpu.matmul %299, %300, %cst_89 {dimension_numbers = #tpu.dot_dimension_numbers<[2], [2], [1], [1], [0, 0, 0, 1, 1, 1], [0], [0]>} : vector<2x16x32xbf16>, vector<2x16x32xbf16>, vector<2x16x16xf32> -> vector<2x16x16xf32>
    "tpu.trace_stop"() : () -> ()
    %302 = arith.addf %301, %43 : vector<2x16x16xf32>
    %cst_90 = arith.constant dense<0xFF800000> : vector<2x16xf32>
    %303 = vector.multi_reduction <maximumf>, %302, %cst_90 [2] : vector<2x16x16xf32> to vector<2x16xf32>
    %304 = vector.shape_cast %303 : vector<2x16xf32> to vector<2x16x1xf32>
    %305 = vector.broadcast %304 : vector<2x16x1xf32> to vector<2x16x16xf32>
    %306 = arith.subf %302, %305 : vector<2x16x16xf32>
    %307 = math.exp %306 : vector<2x16x16xf32>
    %cst_91 = arith.constant dense<0.000000e+00> : vector<2x16xf32>
    %308 = vector.multi_reduction <add>, %307, %cst_91 [2] : vector<2x16x16xf32> to vector<2x16xf32>
    %309 = vector.shape_cast %308 : vector<2x16xf32> to vector<2x16x1xf32>
    %310 = tpu.reciprocal %309 {approx = true} : vector<2x16x1xf32> -> vector<2x16x1xf32>
    %311 = vector.broadcast %310 : vector<2x16x1xf32> to vector<2x16x16xf32>
    %312 = arith.mulf %307, %311 : vector<2x16x16xf32>
    %313 = arith.truncf %312 : vector<2x16x16xf32> to vector<2x16x16xbf16>
    %314 = vector.extract_strided_slice %260 {offsets = [0, 0, 64], sizes = [2, 16, 32], strides = [1, 1, 1]} : vector<2x16x128xbf16> to vector<2x16x32xbf16>
    "tpu.trace_start"() <{level = 10 : i32, message = "bts,bsd->btd"}> : () -> ()
    %cst_92 = arith.constant dense<0.000000e+00> : vector<2x16x32xf32>
    %315 = tpu.matmul %313, %314, %cst_92 {dimension_numbers = #tpu.dot_dimension_numbers<[2], [1], [1], [2], [0, 0, 0, 1, 1, 2], [0], [0]>} : vector<2x16x16xbf16>, vector<2x16x32xbf16>, vector<2x16x32xf32> -> vector<2x16x32xf32>
    "tpu.trace_stop"() : () -> ()
    %316 = vector.shape_cast %315 : vector<2x16x32xf32> to vector<32x32xf32>
    %c0_93 = arith.constant 0 : index
    %c64_94 = arith.constant 64 : index
    %317 = vector.load %arg12[%c0_93, %c64_94] : memref<32x128xf32, #tpu.memory_space<vmem>>, vector<32x32xf32>
    tpu.vector_store %arg12[%c0_93, %c64_94], %316 {strides = array<i32>} : memref<32x128xf32, #tpu.memory_space<vmem>>, vector<32x32xf32>,
    %318 = vector.extract_strided_slice %256 {offsets = [0, 0, 96], sizes = [2, 16, 32], strides = [1, 1, 1]} : vector<2x16x128xbf16> to vector<2x16x32xbf16>
    %319 = vector.extract_strided_slice %258 {offsets = [0, 0, 96], sizes = [2, 16, 32], strides = [1, 1, 1]} : vector<2x16x128xbf16> to vector<2x16x32xbf16>
    "tpu.trace_start"() <{level = 10 : i32, message = "btd,bsd->bts"}> : () -> ()
    %cst_95 = arith.constant dense<0.000000e+00> : vector<2x16x16xf32>
    %320 = tpu.matmul %318, %319, %cst_95 {dimension_numbers = #tpu.dot_dimension_numbers<[2], [2], [1], [1], [0, 0, 0, 1, 1, 1], [0], [0]>} : vector<2x16x32xbf16>, vector<2x16x32xbf16>, vector<2x16x16xf32> -> vector<2x16x16xf32>
    "tpu.trace_stop"() : () -> ()
    %321 = arith.addf %320, %43 : vector<2x16x16xf32>
    %cst_96 = arith.constant dense<0xFF800000> : vector<2x16xf32>
    %322 = vector.multi_reduction <maximumf>, %321, %cst_96 [2] : vector<2x16x16xf32> to vector<2x16xf32>
    %323 = vector.shape_cast %322 : vector<2x16xf32> to vector<2x16x1xf32>
    %324 = vector.broadcast %323 : vector<2x16x1xf32> to vector<2x16x16xf32>
    %325 = arith.subf %321, %324 : vector<2x16x16xf32>
    %326 = math.exp %325 : vector<2x16x16xf32>
    %cst_97 = arith.constant dense<0.000000e+00> : vector<2x16xf32>
    %327 = vector.multi_reduction <add>, %326, %cst_97 [2] : vector<2x16x16xf32> to vector<2x16xf32>
    %328 = vector.shape_cast %327 : vector<2x16xf32> to vector<2x16x1xf32>
    %329 = tpu.reciprocal %328 {approx = true} : vector<2x16x1xf32> -> vector<2x16x1xf32>
    %330 = vector.broadcast %329 : vector<2x16x1xf32> to vector<2x16x16xf32>
    %331 = arith.mulf %326, %330 : vector<2x16x16xf32>
    %332 = arith.truncf %331 : vector<2x16x16xf32> to vector<2x16x16xbf16>
    %333 = vector.extract_strided_slice %260 {offsets = [0, 0, 96], sizes = [2, 16, 32], strides = [1, 1, 1]} : vector<2x16x128xbf16> to vector<2x16x32xbf16>
    "tpu.trace_start"() <{level = 10 : i32, message = "bts,bsd->btd"}> : () -> ()
    %cst_98 = arith.constant dense<0.000000e+00> : vector<2x16x32xf32>
    %334 = tpu.matmul %332, %333, %cst_98 {dimension_numbers = #tpu.dot_dimension_numbers<[2], [1], [1], [2], [0, 0, 0, 1, 1, 2], [0], [0]>} : vector<2x16x16xbf16>, vector<2x16x32xbf16>, vector<2x16x32xf32> -> vector<2x16x32xf32>
    "tpu.trace_stop"() : () -> ()
    %335 = vector.shape_cast %334 : vector<2x16x32xf32> to vector<32x32xf32>
    %c0_99 = arith.constant 0 : index
    %c96_100 = arith.constant 96 : index
    %336 = vector.load %arg12[%c0_99, %c96_100] : memref<32x128xf32, #tpu.memory_space<vmem>>, vector<32x32xf32>
    tpu.vector_store %arg12[%c0_99, %c96_100], %335 {strides = array<i32>} : memref<32x128xf32, #tpu.memory_space<vmem>>, vector<32x32xf32>,
    %c0_101 = arith.constant 0 : index
    %c0_102 = arith.constant 0 : index
    %337 = vector.load %arg12[%c0_101, %c0_102] : memref<32x128xf32, #tpu.memory_space<vmem>>, vector<32x128xf32>
    %c1_103 = arith.constant 1 : index
    %c0_104 = arith.constant 0 : index
    %c0_105 = arith.constant 0 : index
    %338 = vector.load %arg4[%c1_103, %c0_104, %c0_105] : memref<2x128x128xbf16, #tpu.memory_space<vmem>>, vector<1x128x128xbf16>
    %339 = vector.shape_cast %338 : vector<1x128x128xbf16> to vector<128x128xbf16>
    %340 = arith.truncf %337 : vector<32x128xf32> to vector<32x128xbf16>
    %cst_106 = arith.constant dense<0.000000e+00> : vector<32x128xf32>
    %341 = tpu.matmul %340, %339, %cst_106 {dimension_numbers = #tpu.dot_dimension_numbers<[1], [0], [0], [1], [0, 0, 1, 1], [], []>} : vector<32x128xbf16>, vector<128x128xbf16>, vector<32x128xf32> -> vector<32x128xf32>
    %342 = arith.addf %219, %341 : vector<32x128xf32>
    %343 = vector.extract_strided_slice %221 {offsets = [2, 0], sizes = [1, 128], strides = [1, 1]} : vector<6x128xf32> to vector<1x128xf32>
    %344 = vector.shape_cast %343 : vector<1x128xf32> to vector<128xf32>
    %345 = vector.shape_cast %344 : vector<128xf32> to vector<1x128xf32>
    %346 = vector.broadcast %345 : vector<1x128xf32> to vector<32x128xf32>
    %347 = arith.addf %342, %346 : vector<32x128xf32>
    %348 = vector.extract_strided_slice %221 {offsets = [3, 0], sizes = [1, 128], strides = [1, 1]} : vector<6x128xf32> to vector<1x128xf32>
    %349 = vector.shape_cast %348 : vector<1x128xf32> to vector<128xf32>
    %350 = vector.extract_strided_slice %221 {offsets = [4, 0], sizes = [1, 128], strides = [1, 1]} : vector<6x128xf32> to vector<1x128xf32>
    %351 = vector.shape_cast %350 : vector<1x128xf32> to vector<128xf32>
    %cst_107 = arith.constant dense<0.000000e+00> : vector<32xf32>
    %352 = vector.multi_reduction <add>, %347, %cst_107 [1] : vector<32x128xf32> to vector<32xf32>
    %353 = vector.shape_cast %352 : vector<32xf32> to vector<32x1xf32>
    %cst_108 = arith.constant 1.280000e+02 : f32
    %354 = vector.broadcast %cst_108 : f32 to vector<32x1xf32>
    %355 = arith.divf %353, %354 : vector<32x1xf32>
    %356 = vector.broadcast %355 : vector<32x1xf32> to vector<32x128xf32>
    %357 = arith.subf %347, %356 : vector<32x128xf32>
    %358 = arith.mulf %357, %357 : vector<32x128xf32>
    %cst_109 = arith.constant dense<0.000000e+00> : vector<32xf32>
    %359 = vector.multi_reduction <add>, %358, %cst_109 [1] : vector<32x128xf32> to vector<32xf32>
    %360 = vector.shape_cast %359 : vector<32xf32> to vector<32x1xf32>
    %cst_110 = arith.constant 1.280000e+02 : f32
    %361 = vector.broadcast %cst_110 : f32 to vector<32x1xf32>
    %362 = arith.divf %360, %361 : vector<32x1xf32>
    %363 = vector.broadcast %355 : vector<32x1xf32> to vector<32x128xf32>
    %364 = arith.subf %347, %363 : vector<32x128xf32>
    %cst_111 = arith.constant 9.99999974E-6 : f32
    %365 = vector.broadcast %cst_111 : f32 to vector<32x1xf32>
    %366 = arith.addf %362, %365 : vector<32x1xf32>
    %367 = math.rsqrt %366 : vector<32x1xf32>
    %368 = vector.broadcast %367 : vector<32x1xf32> to vector<32x128xf32>
    %369 = arith.mulf %364, %368 : vector<32x128xf32>
    %370 = vector.shape_cast %349 : vector<128xf32> to vector<1x128xf32>
    %371 = vector.broadcast %370 : vector<1x128xf32> to vector<32x128xf32>
    %372 = arith.mulf %369, %371 : vector<32x128xf32>
    %373 = vector.shape_cast %351 : vector<128xf32> to vector<1x128xf32>
    %374 = vector.broadcast %373 : vector<1x128xf32> to vector<32x128xf32>
    %375 = arith.addf %372, %374 : vector<32x128xf32>
    %c1_112 = arith.constant 1 : index
    %c0_113 = arith.constant 0 : index
    %c0_114 = arith.constant 0 : index
    %376 = vector.load %arg5[%c1_112, %c0_113, %c0_114] : memref<2x128x512xbf16, #tpu.memory_space<vmem>>, vector<1x128x512xbf16>
    %377 = vector.shape_cast %376 : vector<1x128x512xbf16> to vector<128x512xbf16>
    %378 = arith.truncf %375 : vector<32x128xf32> to vector<32x128xbf16>
    %cst_115 = arith.constant dense<0.000000e+00> : vector<32x512xf32>
    %379 = tpu.matmul %378, %377, %cst_115 {dimension_numbers = #tpu.dot_dimension_numbers<[1], [0], [0], [1], [0, 0, 1, 1], [], []>} : vector<32x128xbf16>, vector<128x512xbf16>, vector<32x512xf32> -> vector<32x512xf32>
    %c1_116 = arith.constant 1 : index
    %c0_117 = arith.constant 0 : index
    %c0_118 = arith.constant 0 : index
    %380 = vector.load %arg6[%c1_116, %c0_117, %c0_118] : memref<2x1x512xf32, #tpu.memory_space<vmem>>, vector<1x1x512xf32>
    %381 = vector.shape_cast %380 : vector<1x1x512xf32> to vector<1x512xf32>
    %382 = vector.broadcast %381 : vector<1x512xf32> to vector<32x512xf32>
    %383 = arith.addf %379, %382 : vector<32x512xf32>
    %cst_119 = arith.constant 0.000000e+00 : f32
    %384 = vector.broadcast %cst_119 : f32 to vector<32x512xf32>
    %385 = arith.maximumf %383, %384 : vector<32x512xf32>
    %c1_120 = arith.constant 1 : index
    %c0_121 = arith.constant 0 : index
    %c0_122 = arith.constant 0 : index
    %386 = vector.load %arg7[%c1_120, %c0_121, %c0_122] : memref<2x512x128xbf16, #tpu.memory_space<vmem>>, vector<1x512x128xbf16>
    %387 = vector.shape_cast %386 : vector<1x512x128xbf16> to vector<512x128xbf16>
    %388 = arith.truncf %385 : vector<32x512xf32> to vector<32x512xbf16>
    %cst_123 = arith.constant dense<0.000000e+00> : vector<32x128xf32>
    %389 = tpu.matmul %388, %387, %cst_123 {dimension_numbers = #tpu.dot_dimension_numbers<[1], [0], [0], [1], [0, 0, 1, 1], [], []>} : vector<32x512xbf16>, vector<512x128xbf16>, vector<32x128xf32> -> vector<32x128xf32>
    %390 = arith.addf %347, %389 : vector<32x128xf32>
    %391 = vector.extract_strided_slice %221 {offsets = [5, 0], sizes = [1, 128], strides = [1, 1]} : vector<6x128xf32> to vector<1x128xf32>
    %392 = vector.shape_cast %391 : vector<1x128xf32> to vector<128xf32>
    %393 = vector.shape_cast %392 : vector<128xf32> to vector<1x128xf32>
    %394 = vector.broadcast %393 : vector<1x128xf32> to vector<32x128xf32>
    %395 = arith.addf %390, %394 : vector<32x128xf32>
    %c0_124 = arith.constant 0 : index
    %c0_125 = arith.constant 0 : index
    %396 = vector.load %arg8[%c0_124, %c0_125] : memref<2x128xf32, #tpu.memory_space<vmem>>, vector<1x128xf32>
    %397 = vector.shape_cast %396 : vector<1x128xf32> to vector<128xf32>
    %c1_126 = arith.constant 1 : index
    %c0_127 = arith.constant 0 : index
    %398 = vector.load %arg8[%c1_126, %c0_127] : memref<2x128xf32, #tpu.memory_space<vmem>>, vector<1x128xf32>
    %399 = vector.shape_cast %398 : vector<1x128xf32> to vector<128xf32>
    %cst_128 = arith.constant dense<0.000000e+00> : vector<32xf32>
    %400 = vector.multi_reduction <add>, %395, %cst_128 [1] : vector<32x128xf32> to vector<32xf32>
    %401 = vector.shape_cast %400 : vector<32xf32> to vector<32x1xf32>
    %cst_129 = arith.constant 1.280000e+02 : f32
    %402 = vector.broadcast %cst_129 : f32 to vector<32x1xf32>
    %403 = arith.divf %401, %402 : vector<32x1xf32>
    %404 = vector.broadcast %403 : vector<32x1xf32> to vector<32x128xf32>
    %405 = arith.subf %395, %404 : vector<32x128xf32>
    %406 = arith.mulf %405, %405 : vector<32x128xf32>
    %cst_130 = arith.constant dense<0.000000e+00> : vector<32xf32>
    %407 = vector.multi_reduction <add>, %406, %cst_130 [1] : vector<32x128xf32> to vector<32xf32>
    %408 = vector.shape_cast %407 : vector<32xf32> to vector<32x1xf32>
    %cst_131 = arith.constant 1.280000e+02 : f32
    %409 = vector.broadcast %cst_131 : f32 to vector<32x1xf32>
    %410 = arith.divf %408, %409 : vector<32x1xf32>
    %411 = vector.broadcast %403 : vector<32x1xf32> to vector<32x128xf32>
    %412 = arith.subf %395, %411 : vector<32x128xf32>
    %cst_132 = arith.constant 9.99999974E-6 : f32
    %413 = vector.broadcast %cst_132 : f32 to vector<32x1xf32>
    %414 = arith.addf %410, %413 : vector<32x1xf32>
    %415 = math.rsqrt %414 : vector<32x1xf32>
    %416 = vector.broadcast %415 : vector<32x1xf32> to vector<32x128xf32>
    %417 = arith.mulf %412, %416 : vector<32x128xf32>
    %418 = vector.shape_cast %397 : vector<128xf32> to vector<1x128xf32>
    %419 = vector.broadcast %418 : vector<1x128xf32> to vector<32x128xf32>
    %420 = arith.mulf %417, %419 : vector<32x128xf32>
    %421 = vector.shape_cast %399 : vector<128xf32> to vector<1x128xf32>
    %422 = vector.broadcast %421 : vector<1x128xf32> to vector<32x128xf32>
    %423 = arith.addf %420, %422 : vector<32x128xf32>
    %c0_133 = arith.constant 0 : index
    %c0_134 = arith.constant 0 : index
    %424 = vector.load %arg9[%c0_133, %c0_134] : memref<128x128xbf16, #tpu.memory_space<vmem>>, vector<128x128xbf16>
    %425 = arith.truncf %423 : vector<32x128xf32> to vector<32x128xbf16>
    %cst_135 = arith.constant dense<0.000000e+00> : vector<32x128xf32>
    %426 = tpu.matmul %425, %424, %cst_135 {dimension_numbers = #tpu.dot_dimension_numbers<[1], [0], [0], [1], [0, 0, 1, 1], [], []>} : vector<32x128xbf16>, vector<128x128xbf16>, vector<32x128xf32> -> vector<32x128xf32>
    %c0_136 = arith.constant 0 : index
    %c0_137 = arith.constant 0 : index
    %427 = vector.load %arg10[%c0_136, %c0_137] : memref<1x128xf32, #tpu.memory_space<vmem>>, vector<1x128xf32>
    %428 = vector.broadcast %427 : vector<1x128xf32> to vector<32x128xf32>
    %429 = arith.addf %426, %428 : vector<32x128xf32>
    %c0_138 = arith.constant 0 : index
    %c0_139 = arith.constant 0 : index
    %430 = vector.load %arg11[%c0_138, %c0_139] : memref<32x128xf32, #tpu.memory_space<vmem>>, vector<32x128xf32>
    tpu.vector_store %arg11[%c0_138, %c0_139], %429 {strides = array<i32>} : memref<32x128xf32, #tpu.memory_space<vmem>>, vector<32x128xf32>,
    return
  }
}

</mosaic_0001>

<llo_original>
// kernel: tpu_custom_call.1
$region0: #{tpu_custom_call.1}
  #allocation0 [shape = 'u32[]', space=smem, size = 0x4, offset = 0x4, fixed_abs, tag = 'smem constant byte address 0x4 - core index']
  #allocation1 [shape = 'u32[72,128]{1,0:T(1,128)}', space=vmem, size = 0x9000, scoped, tag = 'internal scratch']
  #allocation2 [shape = 'f32[32,128]{1,0:T(8,128)}', space=vmem, size = 0x4000, scoped, tag = 'scratch operand']
  %s0 = inlined_call_operand.vmem [shape: s32[32,1], index: 0, kind: input, shape index: {}]
  %s1 = inlined_call_operand.hbm [shape: f32[144,128], index: 1, kind: input, shape index: {}]
  %s2 = inlined_call_operand.vmem [shape: f32[2,6,128], index: 2, kind: input, shape index: {}]
  %s3 = inlined_call_operand.hbm [shape: bf16[2,128,384], index: 3, kind: input, shape index: {}]
  %s4 = inlined_call_operand.hbm [shape: bf16[2,128,128], index: 4, kind: input, shape index: {}]
  %s5 = inlined_call_operand.hbm [shape: bf16[2,128,512], index: 5, kind: input, shape index: {}]
  %s6 = inlined_call_operand.vmem [shape: f32[2,1,512], index: 6, kind: input, shape index: {}]
  %s7 = inlined_call_operand.hbm [shape: bf16[2,512,128], index: 7, kind: input, shape index: {}]
  %s8 = inlined_call_operand.vmem [shape: f32[2,128], index: 8, kind: input, shape index: {}]
  %s9 = inlined_call_operand.hbm [shape: bf16[128,128], index: 9, kind: input, shape index: {}]
  %s10 = inlined_call_operand.vmem [shape: f32[1,128], index: 10, kind: input, shape index: {}]
  %s11 = inlined_call_operand.hbm [shape: f32[32,128], index: 11, kind: output, shape index: {}]
  %s12 = sld [smem:[#allocation0]]
  $region78: #{tpu_custom_call.1} parent=0
    _
  %s14 = ssub.s32 1, %s12
  %s15 = scalar_select 0, %s14, %s12
  $region1: #{tpu_custom_call.1} parent=0
    #allocation3 [shape = 'u8[73728]{0}', space=vmem, size = 0x12000, scoped, tag = 'input window, operand 1, single buffered']
    #allocation4 [shape = 's32[1]{0}', space=sflag, size = 0x4, scoped, tag = 'scoped memory for tpu_custom_call.1']
    #allocation5 [shape = 's32[1]{0}', space=sflag, size = 0x4, scoped, tag = 'scoped memory for tpu_custom_call.1']
    #allocation6 [shape = 'u8[196608]{0}', space=vmem, size = 0x30000, scoped, tag = 'input window, operand 3, single buffered']
    #allocation7 [shape = 's32[1]{0}', space=sflag, size = 0x4, scoped, tag = 'scoped memory for tpu_custom_call.1']
    #allocation8 [shape = 'u8[65536]{0}', space=vmem, size = 0x10000, scoped, tag = 'input window, operand 4, single buffered']
    #allocation9 [shape = 'u8[262144]{0}', space=vmem, size = 0x40000, scoped, tag = 'input window, operand 5, single buffered']
    #allocation10 [shape = 's32[1]{0}', space=sflag, size = 0x4, scoped, tag = 'scoped memory for tpu_custom_call.1']
    #allocation11 [shape = 'u8[262144]{0}', space=vmem, size = 0x40000, scoped, tag = 'input window, operand 7, single buffered']
    #allocation12 [shape = 'u8[32768]{0}', space=vmem, size = 0x8000, scoped, tag = 'input window, operand 9, single buffered']
    #allocation13 [shape = 's32[1]{0}', space=sflag, size = 0x4, scoped, tag = 'scoped memory for tpu_custom_call.1']
    #allocation14 [shape = 'u8[16384]{0}', space=vmem, size = 0x4000, scoped, tag = 'output window, operand 0, single buffered']
    %16 = vsyncpa [#allocation4], 0
    %17 = vsyncpa [#allocation7], 0
    %18 = vsyncpa [#allocation10], 0
    %19 = vsyncpa [#allocation13], 0
    %20 = vsyncpa [#allocation5], 0
    // Predicated region
    $region2: #{tpu_custom_call.1} parent=1 // pred_check
      _
    $region3: #{tpu_custom_call.1} parent=1 // pred_check_branch
      %22 = sbr.rel (0) target = $region5
    $region4: #{tpu_custom_call.1} parent=1 // pred_region
      _
    $region5: #{tpu_custom_call.1} parent=1 // pred_fallthru
      _
    // Predicated region
    $region6: #{tpu_custom_call.1} parent=1 // pred_check
      _
    $region7: #{tpu_custom_call.1} parent=1 // pred_check_branch
      %24 = sbr.rel (0) target = $region9
    $region8: #{tpu_custom_call.1} parent=1 // pred_region
      %26 = vsyncadd [#allocation4], 0
      %s27 = sshll.u32 %s1, 4
      %s28 = int_to_ptr.hbm [resolvable:$true] %s27
      %s29 = sshll.u32 [#allocation3], 4
      %s30 = int_to_ptr.vmem [resolvable:$true] %s29
      %35 = dma.hbm_to_vmem [thread:$0]  %s28, 2304, %s30, [#allocation4], 128, 128, 8
    $region9: #{tpu_custom_call.1} parent=1 // pred_fallthru
      _
    // Predicated region
    $region10: #{tpu_custom_call.1} parent=1 // pred_check
      _
    $region11: #{tpu_custom_call.1} parent=1 // pred_check_branch
      %37 = sbr.rel (0) target = $region13
    $region12: #{tpu_custom_call.1} parent=1 // pred_region
      _
    $region13: #{tpu_custom_call.1} parent=1 // pred_fallthru
      _
    // Predicated region
    $region14: #{tpu_custom_call.1} parent=1 // pred_check
      _
    $region15: #{tpu_custom_call.1} parent=1 // pred_check_branch
      %39 = sbr.rel (0) target = $region17
    $region16: #{tpu_custom_call.1} parent=1 // pred_region
      %41 = vsyncadd [#allocation7], 0
      %s42 = sshll.u32 %s3, 4
      %s43 = int_to_ptr.hbm [resolvable:$true] %s42
      %s44 = sshll.u32 [#allocation6], 4
      %s45 = int_to_ptr.vmem [resolvable:$true] %s44
      %50 = dma.hbm_to_vmem [thread:$0]  %s43, 6144, %s45, [#allocation7], 192, 192, 12
    $region17: #{tpu_custom_call.1} parent=1 // pred_fallthru
      _
    // Predicated region
    $region18: #{tpu_custom_call.1} parent=1 // pred_check
      _
    $region19: #{tpu_custom_call.1} parent=1 // pred_check_branch
      %52 = sbr.rel (0) target = $region21
    $region20: #{tpu_custom_call.1} parent=1 // pred_region
      %54 = vsyncadd [#allocation7], 0
      %s55 = sshll.u32 %s4, 4
      %s56 = int_to_ptr.hbm [resolvable:$true] %s55
      %s57 = sshll.u32 [#allocation8], 4
      %s58 = int_to_ptr.vmem [resolvable:$true] %s57
      %63 = dma.hbm_to_vmem [thread:$0]  %s56, 2048, %s58, [#allocation7], 64, 64, 4
    $region21: #{tpu_custom_call.1} parent=1 // pred_fallthru
      _
    // Predicated region
    $region22: #{tpu_custom_call.1} parent=1 // pred_check
      _
    $region23: #{tpu_custom_call.1} parent=1 // pred_check_branch
      %65 = sbr.rel (0) target = $region25
    $region24: #{tpu_custom_call.1} parent=1 // pred_region
      %67 = vsyncadd [#allocation10], 0
      %s68 = sshll.u32 %s5, 4
      %s69 = int_to_ptr.hbm [resolvable:$true] %s68
      %s70 = sshll.u32 [#allocation9], 4
      %s71 = int_to_ptr.vmem [resolvable:$true] %s70
      %76 = dma.hbm_to_vmem [thread:$0]  %s69, 8192, %s71, [#allocation10], 256, 256, 16
    $region25: #{tpu_custom_call.1} parent=1 // pred_fallthru
      _
    // Predicated region
    $region26: #{tpu_custom_call.1} parent=1 // pred_check
      _
    $region27: #{tpu_custom_call.1} parent=1 // pred_check_branch
      %78 = sbr.rel (0) target = $region29
    $region28: #{tpu_custom_call.1} parent=1 // pred_region
      _
    $region29: #{tpu_custom_call.1} parent=1 // pred_fallthru
      _
    // Predicated region
    $region30: #{tpu_custom_call.1} parent=1 // pred_check
      _
    $region31: #{tpu_custom_call.1} parent=1 // pred_check_branch
      %80 = sbr.rel (0) target = $region33
    $region32: #{tpu_custom_call.1} parent=1 // pred_region
      %82 = vsyncadd [#allocation10], 0
      %s83 = sshll.u32 %s7, 4
      %s84 = int_to_ptr.hbm [resolvable:$true] %s83
      %s85 = sshll.u32 [#allocation11], 4
      %s86 = int_to_ptr.vmem [resolvable:$true] %s85
      %91 = dma.hbm_to_vmem [thread:$0]  %s84, 8192, %s86, [#allocation10], 64, 64, 4
    $region33: #{tpu_custom_call.1} parent=1 // pred_fallthru
      _
    // Predicated region
    $region34: #{tpu_custom_call.1} parent=1 // pred_check
      _
    $region35: #{tpu_custom_call.1} parent=1 // pred_check_branch
      %93 = sbr.rel (0) target = $region37
    $region36: #{tpu_custom_call.1} parent=1 // pred_region
      _
    $region37: #{tpu_custom_call.1} parent=1 // pred_fallthru
      _
    // Predicated region
    $region38: #{tpu_custom_call.1} parent=1 // pred_check
      _
    $region39: #{tpu_custom_call.1} parent=1 // pred_check_branch
      %95 = sbr.rel (0) target = $region41
    $region40: #{tpu_custom_call.1} parent=1 // pred_region
      %97 = vsyncadd [#allocation13], 0
      %s98 = sshll.u32 %s9, 4
      %s99 = int_to_ptr.hbm [resolvable:$true] %s98
      %s100 = sshll.u32 [#allocation12], 4
      %s101 = int_to_ptr.vmem [resolvable:$true] %s100
      %106 = dma.hbm_to_vmem [thread:$0]  %s99, 1024, %s101, [#allocation13], 64, 64, 4
    $region41: #{tpu_custom_call.1} parent=1 // pred_fallthru
      _
    // Predicated region
    $region42: #{tpu_custom_call.1} parent=1 // pred_check
      _
    $region43: #{tpu_custom_call.1} parent=1 // pred_check_branch
      %108 = sbr.rel (0) target = $region45
    $region44: #{tpu_custom_call.1} parent=1 // pred_region
      _
    $region45: #{tpu_custom_call.1} parent=1 // pred_fallthru
      _
    // Predicated region
    $region46: #{tpu_custom_call.1} parent=1 // pred_check
      _
    $region47: #{tpu_custom_call.1} parent=1 // pred_check_branch
      %110 = sbr.rel (0) target = $region49
    $region48: #{tpu_custom_call.1} parent=1 // pred_region
      %112 = dma.done [#allocation4], 2304
    $region49: #{tpu_custom_call.1} parent=1 // pred_fallthru
      _
    // Predicated region
    $region50: #{tpu_custom_call.1} parent=1 // pred_check
      _
    $region51: #{tpu_custom_call.1} parent=1 // pred_check_branch
      %114 = sbr.rel (0) target = $region53
    $region52: #{tpu_custom_call.1} parent=1 // pred_region
      %116 = dma.done [#allocation7], 6144
    $region53: #{tpu_custom_call.1} parent=1 // pred_fallthru
      _
    // Predicated region
    $region54: #{tpu_custom_call.1} parent=1 // pred_check
      _
    $region55: #{tpu_custom_call.1} parent=1 // pred_check_branch
      %118 = sbr.rel (0) target = $region57
    $region56: #{tpu_custom_call.1} parent=1 // pred_region
      %120 = dma.done [#allocation7], 2048
    $region57: #{tpu_custom_call.1} parent=1 // pred_fallthru
      _
    // Predicated region
    $region58: #{tpu_custom_call.1} parent=1 // pred_check
      _
    $region59: #{tpu_custom_call.1} parent=1 // pred_check_branch
      %122 = sbr.rel (0) target = $region61
    $region60: #{tpu_custom_call.1} parent=1 // pred_region
      %124 = dma.done [#allocation10], 8192
    $region61: #{tpu_custom_call.1} parent=1 // pred_fallthru
      _
    // Predicated region
    $region62: #{tpu_custom_call.1} parent=1 // pred_check
      _
    $region63: #{tpu_custom_call.1} parent=1 // pred_check_branch
      %126 = sbr.rel (0) target = $region65
    $region64: #{tpu_custom_call.1} parent=1 // pred_region
      %128 = dma.done [#allocation10], 8192
    $region65: #{tpu_custom_call.1} parent=1 // pred_fallthru
      _
    // Predicated region
    $region66: #{tpu_custom_call.1} parent=1 // pred_check
      _
    $region67: #{tpu_custom_call.1} parent=1 // pred_check_branch
      %130 = sbr.rel (0) target = $region69
    $region68: #{tpu_custom_call.1} parent=1 // pred_region
      %132 = dma.done [#allocation13], 1024
    $region69: #{tpu_custom_call.1} parent=1 // pred_fallthru
      _
    %v134 = vld [vmem:[%s0] sm:$0xff]
    %v135 = vld [vmem:[%s0 + $0x8] sm:$0xff]
    %v136 = vld [vmem:[%s0 + $0x10] sm:$0xff]
    %v137 = vld [vmem:[%s0 + $0x18] sm:$0xff]
    %v138 = vlaneseq
    %v139 = vand.u32 %v138, 127
    %v140 = vadd.s32 %v139, 128
    %v141 = vlaneseq
    %v142 = vshrl.u32 %v141, 7
    %v143 = vadd.s32 %v142, 8
    %v144 = vadd.s32 %v142, 16
    %v145 = vadd.s32 %v142, 24
    %vm146 = vcmp.lt.s32.totalorder %v142, 0
    %v147 = vsub.s32 0, %v142
    %v148 = vsel %vm146, %v147, %v142
    %v149 = vshrl.u32 %v148, 4
    %v150 = vand.u32 %v148, 15
    %v151 = vsub.s32 0, %v150
    %v152 = vsel %vm146, %v151, %v150
    %vm153 = vcmp.lt.s32.totalorder %v143, 0
    %v154 = vsub.s32 0, %v143
    %v155 = vsel %vm153, %v154, %v143
    %v156 = vshrl.u32 %v155, 4
    %v157 = vand.u32 %v155, 15
    %v158 = vsub.s32 0, %v157
    %v159 = vsel %vm153, %v158, %v157
    %vm160 = vcmp.lt.s32.totalorder %v144, 0
    %v161 = vsub.s32 0, %v144
    %v162 = vsel %vm160, %v161, %v144
    %v163 = vshrl.u32 %v162, 4
    %v164 = vand.u32 %v162, 15
    %v165 = vsub.s32 0, %v164
    %v166 = vsel %vm160, %v165, %v164
    %vm167 = vcmp.lt.s32.totalorder %v145, 0
    %v168 = vsub.s32 0, %v145
    %v169 = vsel %vm167, %v168, %v145
    %v170 = vshrl.u32 %v169, 4
    %v171 = vand.u32 %v169, 15
    %v172 = vsub.s32 0, %v171
    %v173 = vsel %vm167, %v172, %v171
    %vm174 = vcmp.ne.s32.totalorder %v152, 0
    %vm175 = vcmp.ne.s32.totalorder %v159, 0
    %vm176 = vcmp.ne.s32.totalorder %v166, 0
    %vm177 = vcmp.ne.s32.totalorder %v173, 0
    %vm178 = vcmp.lt.s32.totalorder %v152, 0
    %vm179 = vcmp.lt.s32.totalorder %v159, 0
    %vm180 = vcmp.lt.s32.totalorder %v166, 0
    %vm181 = vcmp.lt.s32.totalorder %v173, 0
    %vm182 = vmand %vm178, %vm174
    %vm183 = vmand %vm179, %vm175
    %vm184 = vmand %vm180, %vm176
    %vm185 = vmand %vm181, %vm177
    %v186 = vadd.s32 %v152, 16
    %v187 = vadd.s32 %v159, 16
    %v188 = vadd.s32 %v166, 16
    %v189 = vadd.s32 %v173, 16
    %v190 = vsel %vm182, %v186, %v152
    %v191 = vsel %vm183, %v187, %v159
    %v192 = vsel %vm184, %v188, %v166
    %v193 = vsel %vm185, %v189, %v173
    %vm194 = vcmp.lt.s32.totalorder %v139, 128
    %vm195 = vcmp.lt.s32.totalorder %v140, 128
    %196 = vset.pattern.permute.xlu0 0
    %197 = vperm.xlu0 %196, %v134
    %v198 = vpop.permute.xlu0 %197
    %199 = vset.pattern.permute.xlu0 0
    %200 = vperm.xlu0 %199, %v135
    %v201 = vpop.permute.xlu0 %200
    %202 = vset.pattern.permute.xlu0 0
    %203 = vperm.xlu0 %202, %v136
    %v204 = vpop.permute.xlu0 %203
    %205 = vset.pattern.permute.xlu0 0
    %206 = vperm.xlu0 %205, %v137
    %v207 = vpop.permute.xlu0 %206
    %vm208 = vcmp.eq.s32.totalorder %v198, %v139
    %vm209 = vcmp.eq.s32.totalorder %v198, %v140
    %vm210 = vcmp.eq.s32.totalorder %v201, %v139
    %vm211 = vcmp.eq.s32.totalorder %v201, %v140
    %vm212 = vcmp.eq.s32.totalorder %v204, %v139
    %vm213 = vcmp.eq.s32.totalorder %v204, %v140
    %vm214 = vcmp.eq.s32.totalorder %v207, %v139
    %vm215 = vcmp.eq.s32.totalorder %v207, %v140
    %vm216 = vmand %vm194, %vm208
    %vm217 = vmand %vm195, %vm209
    %vm218 = vmand %vm194, %vm210
    %vm219 = vmand %vm195, %vm211
    %vm220 = vmand %vm194, %vm212
    %vm221 = vmand %vm195, %vm213
    %vm222 = vmand %vm194, %vm214
    %vm223 = vmand %vm195, %vm215
    %vm224 = vcmp.ge.s32.totalorder %v139, 128
    %vm225 = vcmp.ge.s32.totalorder %v140, 128
    %v226 = vadd.s32 %v190, 128
    %v227 = vadd.s32 %v191, 128
    %v228 = vadd.s32 %v192, 128
    %v229 = vadd.s32 %v193, 128
    %vm230 = vcmp.eq.s32.totalorder %v226, %v139
    %vm231 = vcmp.eq.s32.totalorder %v226, %v140
    %vm232 = vcmp.eq.s32.totalorder %v227, %v139
    %vm233 = vcmp.eq.s32.totalorder %v227, %v140
    %vm234 = vcmp.eq.s32.totalorder %v228, %v139
    %vm235 = vcmp.eq.s32.totalorder %v228, %v140
    %vm236 = vcmp.eq.s32.totalorder %v229, %v139
    %vm237 = vcmp.eq.s32.totalorder %v229, %v140
    %vm238 = vmand %vm224, %vm230
    %vm239 = vmand %vm225, %vm231
    %vm240 = vmand %vm224, %vm232
    %vm241 = vmand %vm225, %vm233
    %vm242 = vmand %vm224, %vm234
    %vm243 = vmand %vm225, %vm235
    %vm244 = vmand %vm224, %vm236
    %vm245 = vmand %vm225, %vm237
    %vm246 = vmor %vm216, %vm238
    %vm247 = vmor %vm217, %vm239
    %vm248 = vmor %vm218, %vm240
    %vm249 = vmor %vm219, %vm241
    %vm250 = vmor %vm220, %vm242
    %vm251 = vmor %vm221, %vm243
    %vm252 = vmor %vm222, %vm244
    %vm253 = vmor %vm223, %vm245
    %v254 = vsel %vm246, 1, 0
    %v255 = vsel %vm247, 1, 0
    %v256 = vsel %vm248, 1, 0
    %v257 = vsel %vm249, 1, 0
    %v258 = vsel %vm250, 1, 0
    %v259 = vsel %vm251, 1, 0
    %v260 = vsel %vm252, 1, 0
    %v261 = vsel %vm253, 1, 0
    %v262 = vcvt.s32.f32 %v254
    %v263 = vcvt.s32.f32 %v255
    %v264 = vcvt.s32.f32 %v256
    %v265 = vcvt.s32.f32 %v257
    %v266 = vcvt.s32.f32 %v258
    %v267 = vcvt.s32.f32 %v259
    %v268 = vcvt.s32.f32 %v260
    %v269 = vcvt.s32.f32 %v261
    %v270 = vld [vmem:[#allocation3] sm:$0xff]
    %v271 = vld [vmem:[#allocation3 + $0x8] sm:$0xff]
    %v272 = vld [vmem:[#allocation3 + $0x10] sm:$0xff]
    %v273 = vld [vmem:[#allocation3 + $0x18] sm:$0xff]
    %v274 = vld [vmem:[#allocation3 + $0x20] sm:$0xff]
    %v275 = vld [vmem:[#allocation3 + $0x28] sm:$0xff]
    %v276 = vld [vmem:[#allocation3 + $0x30] sm:$0xff]
    %v277 = vld [vmem:[#allocation3 + $0x38] sm:$0xff]
    %v278 = vld [vmem:[#allocation3 + $0x40] sm:$0xff]
    %v279 = vld [vmem:[#allocation3 + $0x48] sm:$0xff]
    %v280 = vld [vmem:[#allocation3 + $0x50] sm:$0xff]
    %v281 = vld [vmem:[#allocation3 + $0x58] sm:$0xff]
    %v282 = vld [vmem:[#allocation3 + $0x60] sm:$0xff]
    %v283 = vld [vmem:[#allocation3 + $0x68] sm:$0xff]
    %v284 = vld [vmem:[#allocation3 + $0x70] sm:$0xff]
    %v285 = vld [vmem:[#allocation3 + $0x78] sm:$0xff]
    %v286 = vld [vmem:[#allocation3 + $0x80] sm:$0xff]
    %v287 = vld [vmem:[#allocation3 + $0x88] sm:$0xff]
    %vm288 = vcmask 130048
    %v290 = vsel %vm288, %v263, 0
    %v293 = vsel %vm288, %v265, 0
    %v296 = vsel %vm288, %v267, 0
    %v299 = vsel %vm288, %v269, 0
    %301 = vmatpush.msra.mxu0 %v285
    %302 = vmatpush.msra.mxu0 %v284
    %303 = vmatpush.msra.mxu0 %v283
    %304 = vmatpush.msra.mxu0 %v282
    %305 = vmatpush.msra.mxu0 %v281
    %306 = vmatpush.msra.mxu0 %v280
    %307 = vmatpush.msra.mxu0 %v279
    %308 = vmatpush.msra.mxu0 %v278
    %309 = vmatpush.msra.mxu0 %v277
    %310 = vmatpush.msra.mxu0 %v276
    %311 = vmatpush.msra.mxu0 %v275
    %312 = vmatpush.msra.mxu0 %v274
    %313 = vmatpush.msra.mxu0 %v273
    %314 = vmatpush.msra.mxu0 %v272
    %315 = vmatpush.msra.mxu0 %v271
    %316 = vmatpush.msra.mxu0 %v270
    %317 = vmatmul.f32.gmra.mxu0 %v262
    %v318 = vpop.f32.mrf.mxu0
    %v319 = vadd.f32 0.0, %v318
    %320 = vmatmul.f32.gmra.mxu0 %v264
    %v321 = vpop.f32.mrf.mxu0
    %v322 = vadd.f32 0.0, %v321
    %323 = vmatmul.f32.gmra.mxu0 %v266
    %v324 = vpop.f32.mrf.mxu0
    %v325 = vadd.f32 0.0, %v324
    %326 = vmatmul.f32.gmra.mxu0 %v268
    %v327 = vpop.f32.mrf.mxu0
    %v328 = vadd.f32 0.0, %v327
    %329 = vdwg.mxu0
    %330 = vmatpush.msra.mxu0 0.0
    %331 = vmatpush.msra.mxu0 0.0
    %332 = vmatpush.msra.mxu0 0.0
    %333 = vmatpush.msra.mxu0 0.0
    %334 = vmatpush.msra.mxu0 0.0
    %335 = vmatpush.msra.mxu0 0.0
    %336 = vmatpush.msra.mxu0 0.0
    %337 = vmatpush.msra.mxu0 0.0
    %338 = vmatpush.msra.mxu0 0.0
    %339 = vmatpush.msra.mxu0 0.0
    %340 = vmatpush.msra.mxu0 0.0
    %341 = vmatpush.msra.mxu0 0.0
    %342 = vmatpush.msra.mxu0 0.0
    %343 = vmatpush.msra.mxu0 0.0
    %344 = vmatpush.msra.mxu0 %v287
    %345 = vmatpush.msra.mxu0 %v286
    %346 = vmatmul.f32.gmra.mxu0 %v290
    %v347 = vpop.f32.mrf.mxu0
    %v348 = vadd.f32 %v319, %v347
    %349 = vmatmul.f32.gmra.mxu0 %v293
    %v350 = vpop.f32.mrf.mxu0
    %v351 = vadd.f32 %v322, %v350
    %352 = vmatmul.f32.gmra.mxu0 %v296
    %v353 = vpop.f32.mrf.mxu0
    %v354 = vadd.f32 %v325, %v353
    %355 = vmatmul.f32.gmra.mxu0 %v299
    %v356 = vpop.f32.mrf.mxu0
    %v357 = vadd.f32 %v328, %v356
    %358 = vdwg.mxu0
    %vm359 = vcmp.ge.s32.totalorder %v142, %v139
    %vm360 = vcmp.ge.s32.totalorder %v143, %v139
    %v361 = vsel %vm359, 0.0, -1e+30
    %v362 = vsel %vm360, 0.0, -1e+30
    %v363 = vld [vmem:[%s2] sm:$0x3f]
    %364 = vadd.xlane.f32.xlu0 %v348
    %v365 = vpop.xlane.xlu0 %364
    %366 = vadd.xlane.f32.xlu0 %v351
    %v367 = vpop.xlane.xlu0 %366
    %368 = vadd.xlane.f32.xlu0 %v354
    %v369 = vpop.xlane.xlu0 %368
    %370 = vadd.xlane.f32.xlu0 %v357
    %v371 = vpop.xlane.xlu0 %370
    %v372 = vrcp.pop 128.0
    %v373 = vmul.f32 128.0, %v372
    %v374 = vsub.f32 1.0, %v373
    %v375 = vmul.f32 %v372, %v374
    %v376 = vadd.f32 %v372, %v375
    %vm377 = vweird.f32 %v372
    %v378 = vsel %vm377, %v372, %v376
    %v379 = vmul.f32 %v365, %v378
    %v380 = vmul.f32 %v367, %v378
    %v381 = vmul.f32 %v369, %v378
    %v382 = vmul.f32 %v371, %v378
    %v383 = vsub.f32 %v348, %v379
    %v384 = vsub.f32 %v351, %v380
    %v385 = vsub.f32 %v354, %v381
    %v386 = vsub.f32 %v357, %v382
    %v387 = vmul.f32 %v383, %v383
    %v388 = vmul.f32 %v384, %v384
    %v389 = vmul.f32 %v385, %v385
    %v390 = vmul.f32 %v386, %v386
    %391 = vadd.xlane.f32.xlu0 %v387
    %v392 = vpop.xlane.xlu0 %391
    %393 = vadd.xlane.f32.xlu0 %v388
    %v394 = vpop.xlane.xlu0 %393
    %395 = vadd.xlane.f32.xlu0 %v389
    %v396 = vpop.xlane.xlu0 %395
    %397 = vadd.xlane.f32.xlu0 %v390
    %v398 = vpop.xlane.xlu0 %397
    %v399 = vmul.f32 %v392, %v378
    %v400 = vmul.f32 %v394, %v378
    %v401 = vmul.f32 %v396, %v378
    %v402 = vmul.f32 %v398, %v378
    %v403 = vadd.f32 %v399, 1e-05
    %v404 = vadd.f32 %v400, 1e-05
    %v405 = vadd.f32 %v401, 1e-05
    %v406 = vadd.f32 %v402, 1e-05
    %v407 = vrsqrt.pop %v403
    %v408 = vmul.f32 %v407, %v403
    %v409 = vmul.f32 %v408, %v407
    %v410 = vmul.f32 0.5, %v409
    %v411 = vsub.f32 1.5, %v410
    %v412 = vmul.f32 %v407, %v411
    %vm413 = vweird.f32 %v403
    %vm414 = vweird.f32 %v407
    %vm415 = vmor %vm413, %vm414
    %v416 = vsel %vm415, %v407, %v412
    %v417 = vrsqrt.pop %v404
    %v418 = vmul.f32 %v417, %v404
    %v419 = vmul.f32 %v418, %v417
    %v420 = vmul.f32 0.5, %v419
    %v421 = vsub.f32 1.5, %v420
    %v422 = vmul.f32 %v417, %v421
    %vm423 = vweird.f32 %v404
    %vm424 = vweird.f32 %v417
    %vm425 = vmor %vm423, %vm424
    %v426 = vsel %vm425, %v417, %v422
    %v427 = vrsqrt.pop %v405
    %v428 = vmul.f32 %v427, %v405
    %v429 = vmul.f32 %v428, %v427
    %v430 = vmul.f32 0.5, %v429
    %v431 = vsub.f32 1.5, %v430
    %v432 = vmul.f32 %v427, %v431
    %vm433 = vweird.f32 %v405
    %vm434 = vweird.f32 %v427
    %vm435 = vmor %vm433, %vm434
    %v436 = vsel %vm435, %v427, %v432
    %v437 = vrsqrt.pop %v406
    %v438 = vmul.f32 %v437, %v406
    %v439 = vmul.f32 %v438, %v437
    %v440 = vmul.f32 0.5, %v439
    %v441 = vsub.f32 1.5, %v440
    %v442 = vmul.f32 %v437, %v441
    %vm443 = vweird.f32 %v406
    %vm444 = vweird.f32 %v437
    %vm445 = vmor %vm443, %vm444
    %v446 = vsel %vm445, %v437, %v442
    %v447 = vmul.f32 %v383, %v416
    %v448 = vmul.f32 %v384, %v426
    %v449 = vmul.f32 %v385, %v436
    %v450 = vmul.f32 %v386, %v446
    %v451 = vperm.slane %v363, 0
    %v452 = vmul.f32 %v447, %v451
    %v453 = vmul.f32 %v448, %v451
    %v454 = vmul.f32 %v449, %v451
    %v455 = vmul.f32 %v450, %v451
    %v456 = vperm.slane %v363, 1
    %v457 = vadd.f32 %v452, %v456
    %v458 = vadd.f32 %v453, %v456
    %v459 = vadd.f32 %v454, %v456
    %v460 = vadd.f32 %v455, %v456
    %v461 = vld [vmem:[#allocation6] sm:$0xff]
    %v462 = vld [vmem:[#allocation6 + $0x8] sm:$0xf]
    %v463 = vld [vmem:[#allocation6 + $0xc] sm:$0xff]
    %v464 = vld [vmem:[#allocation6 + $0x14] sm:$0xf]
    %v465 = vld [vmem:[#allocation6 + $0x18] sm:$0xff]
    %v466 = vld [vmem:[#allocation6 + $0x20] sm:$0xf]
    %v467 = vld [vmem:[#allocation6 + $0x24] sm:$0xff]
    %v468 = vld [vmem:[#allocation6 + $0x2c] sm:$0xf]
    %v469 = vld [vmem:[#allocation6 + $0x30] sm:$0xff]
    %v470 = vld [vmem:[#allocation6 + $0x38] sm:$0xf]
    %v471 = vld [vmem:[#allocation6 + $0x3c] sm:$0xff]
    %v472 = vld [vmem:[#allocation6 + $0x44] sm:$0xf]
    %v473 = vld [vmem:[#allocation6 + $0x48] sm:$0xff]
    %v474 = vld [vmem:[#allocation6 + $0x50] sm:$0xf]
    %v475 = vld [vmem:[#allocation6 + $0x54] sm:$0xff]
    %v476 = vld [vmem:[#allocation6 + $0x5c] sm:$0xf]
    %v477 = vld [vmem:[#allocation6 + $0x60] sm:$0xff]
    %v478 = vld [vmem:[#allocation6 + $0x68] sm:$0xf]
    %v479 = vld [vmem:[#allocation6 + $0x6c] sm:$0xff]
    %v480 = vld [vmem:[#allocation6 + $0x74] sm:$0xf]
    %v481 = vld [vmem:[#allocation6 + $0x78] sm:$0xff]
    %v482 = vld [vmem:[#allocation6 + $0x80] sm:$0xf]
    %v483 = vld [vmem:[#allocation6 + $0x84] sm:$0xff]
    %v484 = vld [vmem:[#allocation6 + $0x8c] sm:$0xf]
    %v485 = vld [vmem:[#allocation6 + $0x90] sm:$0xff]
    %v486 = vld [vmem:[#allocation6 + $0x98] sm:$0xf]
    %v487 = vld [vmem:[#allocation6 + $0x9c] sm:$0xff]
    %v488 = vld [vmem:[#allocation6 + $0xa4] sm:$0xf]
    %v489 = vld [vmem:[#allocation6 + $0xa8] sm:$0xff]
    %v490 = vld [vmem:[#allocation6 + $0xb0] sm:$0xf]
    %v491 = vld [vmem:[#allocation6 + $0xb4] sm:$0xff]
    %v492 = vld [vmem:[#allocation6 + $0xbc] sm:$0xf]
    %v493 = vpack.c.bf16 %v458, %v457
    %v494 = vpack.c.bf16 %v460, %v459
    %v527 = vunpack.c.l.b16 %v461
    %v528 = vunpack.c.h.b16 %v461
    %v529 = vunpack.c.l.b16 %v462
    %v530 = vunpack.c.l.b16 %v463
    %v531 = vunpack.c.h.b16 %v463
    %v532 = vunpack.c.l.b16 %v464
    %v533 = vunpack.c.l.b16 %v465
    %v534 = vunpack.c.h.b16 %v465
    %v535 = vunpack.c.l.b16 %v466
    %v536 = vunpack.c.l.b16 %v467
    %v537 = vunpack.c.h.b16 %v467
    %v538 = vunpack.c.l.b16 %v468
    %v539 = vunpack.c.l.b16 %v469
    %v540 = vunpack.c.h.b16 %v469
    %v541 = vunpack.c.l.b16 %v470
    %v542 = vunpack.c.l.b16 %v471
    %v543 = vunpack.c.h.b16 %v471
    %v544 = vunpack.c.l.b16 %v472
    %v545 = vunpack.c.l.b16 %v473
    %v546 = vunpack.c.h.b16 %v473
    %v547 = vunpack.c.l.b16 %v474
    %v548 = vunpack.c.l.b16 %v475
    %v549 = vunpack.c.h.b16 %v475
    %v550 = vunpack.c.l.b16 %v476
    %v551 = vunpack.c.l.b16 %v477
    %v552 = vunpack.c.h.b16 %v477
    %v553 = vunpack.c.l.b16 %v478
    %v554 = vunpack.c.l.b16 %v479
    %v555 = vunpack.c.h.b16 %v479
    %v556 = vunpack.c.l.b16 %v480
    %v557 = vunpack.c.l.b16 %v481
    %v558 = vunpack.c.h.b16 %v481
    %v559 = vunpack.c.l.b16 %v482
    %v560 = vunpack.c.l.b16 %v483
    %v561 = vunpack.c.h.b16 %v483
    %v562 = vunpack.c.l.b16 %v484
    %v563 = vunpack.c.l.b16 %v485
    %v564 = vunpack.c.h.b16 %v485
    %v565 = vunpack.c.l.b16 %v486
    %v566 = vunpack.c.l.b16 %v487
    %v567 = vunpack.c.h.b16 %v487
    %v568 = vunpack.c.l.b16 %v488
    %v569 = vunpack.c.l.b16 %v489
    %v570 = vunpack.c.h.b16 %v489
    %v571 = vunpack.c.l.b16 %v490
    %v572 = vunpack.c.l.b16 %v491
    %v573 = vunpack.c.h.b16 %v491
    %v574 = vunpack.c.l.b16 %v492
    %v575 = vpack.c.b16 %v530, %v527
    %v576 = vpack.c.b16 %v531, %v528
    %v577 = vpack.c.b16 %v532, %v529
    %v578 = vpack.c.b16 %v536, %v533
    %v579 = vpack.c.b16 %v537, %v534
    %v580 = vpack.c.b16 %v538, %v535
    %v581 = vpack.c.b16 %v542, %v539
    %v582 = vpack.c.b16 %v543, %v540
    %v583 = vpack.c.b16 %v544, %v541
    %v584 = vpack.c.b16 %v548, %v545
    %v585 = vpack.c.b16 %v549, %v546
    %v586 = vpack.c.b16 %v550, %v547
    %v587 = vpack.c.b16 %v554, %v551
    %v588 = vpack.c.b16 %v555, %v552
    %v589 = vpack.c.b16 %v556, %v553
    %v590 = vpack.c.b16 %v560, %v557
    %v591 = vpack.c.b16 %v561, %v558
    %v592 = vpack.c.b16 %v562, %v559
    %v593 = vpack.c.b16 %v566, %v563
    %v594 = vpack.c.b16 %v567, %v564
    %v595 = vpack.c.b16 %v568, %v565
    %v596 = vpack.c.b16 %v572, %v569
    %v597 = vpack.c.b16 %v573, %v570
    %v598 = vpack.c.b16 %v574, %v571
    %623 = vmatpush.bf16.msra.mxu0 %v596
    %624 = vmatpush.bf16.msra.mxu0 %v593
    %625 = vmatpush.bf16.msra.mxu0 %v590
    %626 = vmatpush.bf16.msra.mxu0 %v587
    %627 = vmatpush.bf16.msra.mxu0 %v584
    %628 = vmatpush.bf16.msra.mxu0 %v581
    %629 = vmatpush.bf16.msra.mxu0 %v578
    %630 = vmatpush.bf16.msra.mxu0 %v575
    %631 = vmatmul.bf16.gmra.mxu0 %v493
    %v632 = vpop.f32.mrf.mxu0
    %v633 = vadd.f32 0.0, %v632
    %v634 = vpop.f32.mrf.mxu0
    %v635 = vadd.f32 0.0, %v634
    %636 = vmatmul.bf16.gmra.mxu0 %v494
    %v637 = vpop.f32.mrf.mxu0
    %v638 = vadd.f32 0.0, %v637
    %v639 = vpop.f32.mrf.mxu0
    %v640 = vadd.f32 0.0, %v639
    %641 = vdwg.mxu0
    %642 = vmatpush.bf16.msra.mxu0 %v597
    %643 = vmatpush.bf16.msra.mxu0 %v594
    %644 = vmatpush.bf16.msra.mxu0 %v591
    %645 = vmatpush.bf16.msra.mxu0 %v588
    %646 = vmatpush.bf16.msra.mxu0 %v585
    %647 = vmatpush.bf16.msra.mxu0 %v582
    %648 = vmatpush.bf16.msra.mxu0 %v579
    %649 = vmatpush.bf16.msra.mxu0 %v576
    %650 = vmatmul.bf16.gmra.mxu0 %v493
    %v651 = vpop.f32.mrf.mxu0
    %v652 = vadd.f32 0.0, %v651
    %v653 = vpop.f32.mrf.mxu0
    %v654 = vadd.f32 0.0, %v653
    %655 = vmatmul.bf16.gmra.mxu0 %v494
    %v656 = vpop.f32.mrf.mxu0
    %v657 = vadd.f32 0.0, %v656
    %v658 = vpop.f32.mrf.mxu0
    %v659 = vadd.f32 0.0, %v658
    %660 = vdwg.mxu0
    %661 = vmatpush.bf16.msra.mxu0 %v598
    %662 = vmatpush.bf16.msra.mxu0 %v595
    %663 = vmatpush.bf16.msra.mxu0 %v592
    %664 = vmatpush.bf16.msra.mxu0 %v589
    %665 = vmatpush.bf16.msra.mxu0 %v586
    %666 = vmatpush.bf16.msra.mxu0 %v583
    %667 = vmatpush.bf16.msra.mxu0 %v580
    %668 = vmatpush.bf16.msra.mxu0 %v577
    %669 = vmatmul.bf16.gmra.mxu0 %v493
    %v670 = vpop.f32.mrf.mxu0
    %v671 = vadd.f32 0.0, %v670
    %v672 = vpop.f32.mrf.mxu0
    %v673 = vadd.f32 0.0, %v672
    %674 = vmatmul.bf16.gmra.mxu0 %v494
    %v675 = vpop.f32.mrf.mxu0
    %v676 = vadd.f32 0.0, %v675
    %v677 = vpop.f32.mrf.mxu0
    %v678 = vadd.f32 0.0, %v677
    %679 = vdwg.mxu0
    %v680 = vpack.c.bf16 %v652, %v633
    %v681 = vpack.c.bf16 %v671, %v671
    %v682 = vpack.c.bf16 %v654, %v635
    %v683 = vpack.c.bf16 %v673, %v673
    %v684 = vpack.c.bf16 %v657, %v638
    %v685 = vpack.c.bf16 %v676, %v676
    %v686 = vpack.c.bf16 %v659, %v640
    %v687 = vpack.c.bf16 %v678, %v678
    %v692 = vrot.slane %v680, 4
    %v693 = vrot.slane %v682, 4
    %v694 = vrot.slane %v684, 4
    %v695 = vrot.slane %v686, 4
    %v696 = vunpack.c.l.b16 %v680
    %v697 = vunpack.c.l.b16 %v682
    %v698 = vpack.c.b16 %v697, %v696
    %v699 = vunpack.c.l.b16 %v692
    %v700 = vunpack.c.l.b16 %v693
    %v701 = vpack.c.b16 %v700, %v699
    %vm702 = vcmask 261120
    %v704 = vsel %vm702, %v698, 0
    %v707 = vsel %vm702, %v701, 0
    %709 = vmatpush.bf16.xpose.msra.mxu0 0
    %710 = vmatpush.bf16.xpose.msra.mxu0 0
    %711 = vmatpush.bf16.xpose.msra.mxu0 0
    %712 = vmatpush.bf16.xpose.msra.mxu0 0
    %713 = vmatpush.bf16.xpose.msra.mxu0 0
    %714 = vmatpush.bf16.xpose.msra.mxu0 0
    %715 = vmatpush.bf16.xpose.msra.mxu0 0
    %716 = vmatpush.bf16.xpose.msra.mxu0 %v707
    %717 = vmatmul.bf16.gmra.mxu0 %v704
    %v718 = vpop.f32.mrf.mxu0
    %v719 = vadd.f32 %v361, %v718
    %v720 = vpop.f32.mrf.mxu0
    %v721 = vadd.f32 %v362, %v720
    %722 = vdwg.mxu0
    %v723 = vunpack.c.l.b16 %v684
    %v724 = vunpack.c.l.b16 %v686
    %v725 = vpack.c.b16 %v724, %v723
    %v726 = vunpack.c.l.b16 %v694
    %v727 = vunpack.c.l.b16 %v695
    %v728 = vpack.c.b16 %v727, %v726
    %v730 = vsel %vm702, %v725, 0
    %v733 = vsel %vm702, %v728, 0
    %735 = vmatpush.bf16.xpose.msra.mxu0 0
    %736 = vmatpush.bf16.xpose.msra.mxu0 0
    %737 = vmatpush.bf16.xpose.msra.mxu0 0
    %738 = vmatpush.bf16.xpose.msra.mxu0 0
    %739 = vmatpush.bf16.xpose.msra.mxu0 0
    %740 = vmatpush.bf16.xpose.msra.mxu0 0
    %741 = vmatpush.bf16.xpose.msra.mxu0 0
    %742 = vmatpush.bf16.xpose.msra.mxu0 %v733
    %743 = vmatmul.bf16.gmra.mxu0 %v730
    %v744 = vpop.f32.mrf.mxu0
    %v745 = vadd.f32 %v361, %v744
    %v746 = vpop.f32.mrf.mxu0
    %v747 = vadd.f32 %v362, %v746
    %748 = vdwg.mxu0
    %v749 = vsel %vm288, %v719, -inf
    %750 = vmax.xlane.f32.xlu0 %v749
    %v751 = vpop.xlane.xlu0 %750
    %v752 = vsel %vm288, %v721, -inf
    %753 = vmax.xlane.f32.xlu0 %v752
    %v754 = vpop.xlane.xlu0 %753
    %v755 = vsel %vm288, %v745, -inf
    %756 = vmax.xlane.f32.xlu0 %v755
    %v757 = vpop.xlane.xlu0 %756
    %v758 = vsel %vm288, %v747, -inf
    %759 = vmax.xlane.f32.xlu0 %v758
    %v760 = vpop.xlane.xlu0 %759
    %v761 = vsub.f32 %v719, %v751
    %v762 = vsub.f32 %v721, %v754
    %v763 = vsub.f32 %v745, %v757
    %v764 = vsub.f32 %v747, %v760
    %v765 = vmul.f32 %v761, 1.442695
    %v766 = vpow.pop %v765
    %v767 = vmul.f32 %v762, 1.442695
    %v768 = vpow.pop %v767
    %v769 = vmul.f32 %v763, 1.442695
    %v770 = vpow.pop %v769
    %v771 = vmul.f32 %v764, 1.442695
    %v772 = vpow.pop %v771
    %v773 = vsel %vm288, %v766, 0.0
    %774 = vadd.xlane.f32.xlu0 %v773
    %v775 = vpop.xlane.xlu0 %774
    %v776 = vsel %vm288, %v768, 0.0
    %777 = vadd.xlane.f32.xlu0 %v776
    %v778 = vpop.xlane.xlu0 %777
    %v779 = vsel %vm288, %v770, 0.0
    %780 = vadd.xlane.f32.xlu0 %v779
    %v781 = vpop.xlane.xlu0 %780
    %v782 = vsel %vm288, %v772, 0.0
    %783 = vadd.xlane.f32.xlu0 %v782
    %v784 = vpop.xlane.xlu0 %783
    %v785 = vrcp.pop %v775
    %v786 = vrcp.pop %v778
    %v787 = vrcp.pop %v781
    %v788 = vrcp.pop %v784
    %v789 = vmul.f32 %v766, %v785
    %v790 = vmul.f32 %v768, %v786
    %v791 = vmul.f32 %v770, %v787
    %v792 = vmul.f32 %v772, %v788
    %v793 = vpack.c.bf16 %v789, %v789
    %v794 = vpack.c.bf16 %v790, %v790
    %v795 = vpack.c.bf16 %v791, %v791
    %v796 = vpack.c.bf16 %v792, %v792
    %v799 = vunpack.c.l.b16 %v793
    %v800 = vunpack.c.l.b16 %v794
    %v801 = vpack.c.b16 %v800, %v799
    %v804 = vunpack.c.l.b16 %v681
    %v805 = vunpack.c.l.b16 %v683
    %v806 = vpack.c.b16 %v805, %v804
    %v809 = vsel %vm288, %v801, 0
    %811 = vmatpush.bf16.msra.mxu0 0
    %812 = vmatpush.bf16.msra.mxu0 0
    %813 = vmatpush.bf16.msra.mxu0 0
    %814 = vmatpush.bf16.msra.mxu0 0
    %815 = vmatpush.bf16.msra.mxu0 0
    %816 = vmatpush.bf16.msra.mxu0 0
    %817 = vmatpush.bf16.msra.mxu0 0
    %818 = vmatpush.bf16.msra.mxu0 %v806
    %819 = vmatmul.bf16.gmra.mxu0 %v809
    %v820 = vpop.f32.mrf.mxu0
    %v821 = vadd.f32 0.0, %v820
    %v822 = vpop.f32.mrf.mxu0
    %v823 = vadd.f32 0.0, %v822
    %824 = vdwg.mxu0
    %v827 = vunpack.c.l.b16 %v795
    %v828 = vunpack.c.l.b16 %v796
    %v829 = vpack.c.b16 %v828, %v827
    %v832 = vunpack.c.l.b16 %v685
    %v833 = vunpack.c.l.b16 %v687
    %v834 = vpack.c.b16 %v833, %v832
    %v837 = vsel %vm288, %v829, 0
    %839 = vmatpush.bf16.msra.mxu0 0
    %840 = vmatpush.bf16.msra.mxu0 0
    %841 = vmatpush.bf16.msra.mxu0 0
    %842 = vmatpush.bf16.msra.mxu0 0
    %843 = vmatpush.bf16.msra.mxu0 0
    %844 = vmatpush.bf16.msra.mxu0 0
    %845 = vmatpush.bf16.msra.mxu0 0
    %846 = vmatpush.bf16.msra.mxu0 %v834
    %847 = vmatmul.bf16.gmra.mxu0 %v837
    %v848 = vpop.f32.mrf.mxu0
    %v849 = vadd.f32 0.0, %v848
    %v850 = vpop.f32.mrf.mxu0
    %v851 = vadd.f32 0.0, %v850
    %852 = vdwg.mxu0
    %853 = vst.msk [vmem:[#allocation2] sm:$0xff] %vm702, %v821
    %854 = vst.msk [vmem:[#allocation2 + $0x8] sm:$0xff] %vm702, %v823
    %855 = vst.msk [vmem:[#allocation2 + $0x10] sm:$0xff] %vm702, %v849
    %856 = vst.msk [vmem:[#allocation2 + $0x18] sm:$0xff] %vm702, %v851
    %857 = vrot.lane.b32.xlu0 %v698, 96
    %v858 = vpop.permute.xlu0 %857
    %859 = vrot.lane.b32.xlu0 %v701, 96
    %v860 = vpop.permute.xlu0 %859
    %v862 = vsel %vm702, %v858, 0
    %v865 = vsel %vm702, %v860, 0
    %867 = vmatpush.bf16.xpose.msra.mxu0 0
    %868 = vmatpush.bf16.xpose.msra.mxu0 0
    %869 = vmatpush.bf16.xpose.msra.mxu0 0
    %870 = vmatpush.bf16.xpose.msra.mxu0 0
    %871 = vmatpush.bf16.xpose.msra.mxu0 0
    %872 = vmatpush.bf16.xpose.msra.mxu0 0
    %873 = vmatpush.bf16.xpose.msra.mxu0 0
    %874 = vmatpush.bf16.xpose.msra.mxu0 %v865
    %875 = vmatmul.bf16.gmra.mxu0 %v862
    %v876 = vpop.f32.mrf.mxu0
    %v877 = vadd.f32 %v361, %v876
    %v878 = vpop.f32.mrf.mxu0
    %v879 = vadd.f32 %v362, %v878
    %880 = vdwg.mxu0
    %881 = vrot.lane.b32.xlu0 %v725, 96
    %v882 = vpop.permute.xlu0 %881
    %883 = vrot.lane.b32.xlu0 %v728, 96
    %v884 = vpop.permute.xlu0 %883
    %v886 = vsel %vm702, %v882, 0
    %v889 = vsel %vm702, %v884, 0
    %891 = vmatpush.bf16.xpose.msra.mxu0 0
    %892 = vmatpush.bf16.xpose.msra.mxu0 0
    %893 = vmatpush.bf16.xpose.msra.mxu0 0
    %894 = vmatpush.bf16.xpose.msra.mxu0 0
    %895 = vmatpush.bf16.xpose.msra.mxu0 0
    %896 = vmatpush.bf16.xpose.msra.mxu0 0
    %897 = vmatpush.bf16.xpose.msra.mxu0 0
    %898 = vmatpush.bf16.xpose.msra.mxu0 %v889
    %899 = vmatmul.bf16.gmra.mxu0 %v886
    %v900 = vpop.f32.mrf.mxu0
    %v901 = vadd.f32 %v361, %v900
    %v902 = vpop.f32.mrf.mxu0
    %v903 = vadd.f32 %v362, %v902
    %904 = vdwg.mxu0
    %v905 = vsel %vm288, %v877, -inf
    %906 = vmax.xlane.f32.xlu0 %v905
    %v907 = vpop.xlane.xlu0 %906
    %v908 = vsel %vm288, %v879, -inf
    %909 = vmax.xlane.f32.xlu0 %v908
    %v910 = vpop.xlane.xlu0 %909
    %v911 = vsel %vm288, %v901, -inf
    %912 = vmax.xlane.f32.xlu0 %v911
    %v913 = vpop.xlane.xlu0 %912
    %v914 = vsel %vm288, %v903, -inf
    %915 = vmax.xlane.f32.xlu0 %v914
    %v916 = vpop.xlane.xlu0 %915
    %v917 = vsub.f32 %v877, %v907
    %v918 = vsub.f32 %v879, %v910
    %v919 = vsub.f32 %v901, %v913
    %v920 = vsub.f32 %v903, %v916
    %v921 = vmul.f32 %v917, 1.442695
    %v922 = vpow.pop %v921
    %v923 = vmul.f32 %v918, 1.442695
    %v924 = vpow.pop %v923
    %v925 = vmul.f32 %v919, 1.442695
    %v926 = vpow.pop %v925
    %v927 = vmul.f32 %v920, 1.442695
    %v928 = vpow.pop %v927
    %v929 = vsel %vm288, %v922, 0.0
    %930 = vadd.xlane.f32.xlu0 %v929
    %v931 = vpop.xlane.xlu0 %930
    %v932 = vsel %vm288, %v924, 0.0
    %933 = vadd.xlane.f32.xlu0 %v932
    %v934 = vpop.xlane.xlu0 %933
    %v935 = vsel %vm288, %v926, 0.0
    %936 = vadd.xlane.f32.xlu0 %v935
    %v937 = vpop.xlane.xlu0 %936
    %v938 = vsel %vm288, %v928, 0.0
    %939 = vadd.xlane.f32.xlu0 %v938
    %v940 = vpop.xlane.xlu0 %939
    %v941 = vrcp.pop %v931
    %v942 = vrcp.pop %v934
    %v943 = vrcp.pop %v937
    %v944 = vrcp.pop %v940
    %v945 = vmul.f32 %v922, %v941
    %v946 = vmul.f32 %v924, %v942
    %v947 = vmul.f32 %v926, %v943
    %v948 = vmul.f32 %v928, %v944
    %v949 = vpack.c.bf16 %v945, %v945
    %v950 = vpack.c.bf16 %v946, %v946
    %v951 = vpack.c.bf16 %v947, %v947
    %v952 = vpack.c.bf16 %v948, %v948
    %v955 = vunpack.c.l.b16 %v949
    %v956 = vunpack.c.l.b16 %v950
    %v957 = vpack.c.b16 %v956, %v955
    %958 = vrot.lane.b32.xlu0 %v806, 96
    %v959 = vpop.permute.xlu0 %958
    %v962 = vsel %vm288, %v957, 0
    %964 = vmatpush.bf16.msra.mxu0 0
    %965 = vmatpush.bf16.msra.mxu0 0
    %966 = vmatpush.bf16.msra.mxu0 0
    %967 = vmatpush.bf16.msra.mxu0 0
    %968 = vmatpush.bf16.msra.mxu0 0
    %969 = vmatpush.bf16.msra.mxu0 0
    %970 = vmatpush.bf16.msra.mxu0 0
    %971 = vmatpush.bf16.msra.mxu0 %v959
    %972 = vmatmul.bf16.gmra.mxu0 %v962
    %v973 = vpop.f32.mrf.mxu0
    %v974 = vadd.f32 0.0, %v973
    %v975 = vpop.f32.mrf.mxu0
    %v976 = vadd.f32 0.0, %v975
    %977 = vdwg.mxu0
    %v980 = vunpack.c.l.b16 %v951
    %v981 = vunpack.c.l.b16 %v952
    %v982 = vpack.c.b16 %v981, %v980
    %983 = vrot.lane.b32.xlu0 %v834, 96
    %v984 = vpop.permute.xlu0 %983
    %v987 = vsel %vm288, %v982, 0
    %989 = vmatpush.bf16.msra.mxu0 0
    %990 = vmatpush.bf16.msra.mxu0 0
    %991 = vmatpush.bf16.msra.mxu0 0
    %992 = vmatpush.bf16.msra.mxu0 0
    %993 = vmatpush.bf16.msra.mxu0 0
    %994 = vmatpush.bf16.msra.mxu0 0
    %995 = vmatpush.bf16.msra.mxu0 0
    %996 = vmatpush.bf16.msra.mxu0 %v984
    %997 = vmatmul.bf16.gmra.mxu0 %v987
    %v998 = vpop.f32.mrf.mxu0
    %v999 = vadd.f32 0.0, %v998
    %v1000 = vpop.f32.mrf.mxu0
    %v1001 = vadd.f32 0.0, %v1000
    %1002 = vdwg.mxu0
    %1007 = vrot.lane.b32.xlu0 %v974, 32
    %v1008 = vpop.permute.xlu0 %1007
    %1009 = vrot.lane.b32.xlu0 %v976, 32
    %v1010 = vpop.permute.xlu0 %1009
    %1011 = vrot.lane.b32.xlu0 %v999, 32
    %v1012 = vpop.permute.xlu0 %1011
    %1013 = vrot.lane.b32.xlu0 %v1001, 32
    %v1014 = vpop.permute.xlu0 %1013
    %vm1019 = vcmask 523520
    %1020 = vst.msk [vmem:[#allocation2] sm:$0xff] %vm1019, %v1008
    %1021 = vst.msk [vmem:[#allocation2 + $0x8] sm:$0xff] %vm1019, %v1010
    %1022 = vst.msk [vmem:[#allocation2 + $0x10] sm:$0xff] %vm1019, %v1012
    %1023 = vst.msk [vmem:[#allocation2 + $0x18] sm:$0xff] %vm1019, %v1014
    %1024 = vrot.lane.b32.xlu0 %v698, 64
    %v1025 = vpop.permute.xlu0 %1024
    %1026 = vrot.lane.b32.xlu0 %v701, 64
    %v1027 = vpop.permute.xlu0 %1026
    %v1029 = vsel %vm702, %v1025, 0
    %v1032 = vsel %vm702, %v1027, 0
    %1034 = vmatpush.bf16.xpose.msra.mxu0 0
    %1035 = vmatpush.bf16.xpose.msra.mxu0 0
    %1036 = vmatpush.bf16.xpose.msra.mxu0 0
    %1037 = vmatpush.bf16.xpose.msra.mxu0 0
    %1038 = vmatpush.bf16.xpose.msra.mxu0 0
    %1039 = vmatpush.bf16.xpose.msra.mxu0 0
    %1040 = vmatpush.bf16.xpose.msra.mxu0 0
    %1041 = vmatpush.bf16.xpose.msra.mxu0 %v1032
    %1042 = vmatmul.bf16.gmra.mxu0 %v1029
    %v1043 = vpop.f32.mrf.mxu0
    %v1044 = vadd.f32 %v361, %v1043
    %v1045 = vpop.f32.mrf.mxu0
    %v1046 = vadd.f32 %v362, %v1045
    %1047 = vdwg.mxu0
    %1048 = vrot.lane.b32.xlu0 %v725, 64
    %v1049 = vpop.permute.xlu0 %1048
    %1050 = vrot.lane.b32.xlu0 %v728, 64
    %v1051 = vpop.permute.xlu0 %1050
    %v1053 = vsel %vm702, %v1049, 0
    %v1056 = vsel %vm702, %v1051, 0
    %1058 = vmatpush.bf16.xpose.msra.mxu0 0
    %1059 = vmatpush.bf16.xpose.msra.mxu0 0
    %1060 = vmatpush.bf16.xpose.msra.mxu0 0
    %1061 = vmatpush.bf16.xpose.msra.mxu0 0
    %1062 = vmatpush.bf16.xpose.msra.mxu0 0
    %1063 = vmatpush.bf16.xpose.msra.mxu0 0
    %1064 = vmatpush.bf16.xpose.msra.mxu0 0
    %1065 = vmatpush.bf16.xpose.msra.mxu0 %v1056
    %1066 = vmatmul.bf16.gmra.mxu0 %v1053
    %v1067 = vpop.f32.mrf.mxu0
    %v1068 = vadd.f32 %v361, %v1067
    %v1069 = vpop.f32.mrf.mxu0
    %v1070 = vadd.f32 %v362, %v1069
    %1071 = vdwg.mxu0
    %v1072 = vsel %vm288, %v1044, -inf
    %1073 = vmax.xlane.f32.xlu0 %v1072
    %v1074 = vpop.xlane.xlu0 %1073
    %v1075 = vsel %vm288, %v1046, -inf
    %1076 = vmax.xlane.f32.xlu0 %v1075
    %v1077 = vpop.xlane.xlu0 %1076
    %v1078 = vsel %vm288, %v1068, -inf
    %1079 = vmax.xlane.f32.xlu0 %v1078
    %v1080 = vpop.xlane.xlu0 %1079
    %v1081 = vsel %vm288, %v1070, -inf
    %1082 = vmax.xlane.f32.xlu0 %v1081
    %v1083 = vpop.xlane.xlu0 %1082
    %v1084 = vsub.f32 %v1044, %v1074
    %v1085 = vsub.f32 %v1046, %v1077
    %v1086 = vsub.f32 %v1068, %v1080
    %v1087 = vsub.f32 %v1070, %v1083
    %v1088 = vmul.f32 %v1084, 1.442695
    %v1089 = vpow.pop %v1088
    %v1090 = vmul.f32 %v1085, 1.442695
    %v1091 = vpow.pop %v1090
    %v1092 = vmul.f32 %v1086, 1.442695
    %v1093 = vpow.pop %v1092
    %v1094 = vmul.f32 %v1087, 1.442695
    %v1095 = vpow.pop %v1094
    %v1096 = vsel %vm288, %v1089, 0.0
    %1097 = vadd.xlane.f32.xlu0 %v1096
    %v1098 = vpop.xlane.xlu0 %1097
    %v1099 = vsel %vm288, %v1091, 0.0
    %1100 = vadd.xlane.f32.xlu0 %v1099
    %v1101 = vpop.xlane.xlu0 %1100
    %v1102 = vsel %vm288, %v1093, 0.0
    %1103 = vadd.xlane.f32.xlu0 %v1102
    %v1104 = vpop.xlane.xlu0 %1103
    %v1105 = vsel %vm288, %v1095, 0.0
    %1106 = vadd.xlane.f32.xlu0 %v1105
    %v1107 = vpop.xlane.xlu0 %1106
    %v1108 = vrcp.pop %v1098
    %v1109 = vrcp.pop %v1101
    %v1110 = vrcp.pop %v1104
    %v1111 = vrcp.pop %v1107
    %v1112 = vmul.f32 %v1089, %v1108
    %v1113 = vmul.f32 %v1091, %v1109
    %v1114 = vmul.f32 %v1093, %v1110
    %v1115 = vmul.f32 %v1095, %v1111
    %v1116 = vpack.c.bf16 %v1112, %v1112
    %v1117 = vpack.c.bf16 %v1113, %v1113
    %v1118 = vpack.c.bf16 %v1114, %v1114
    %v1119 = vpack.c.bf16 %v1115, %v1115
    %v1122 = vunpack.c.l.b16 %v1116
    %v1123 = vunpack.c.l.b16 %v1117
    %v1124 = vpack.c.b16 %v1123, %v1122
    %1125 = vrot.lane.b32.xlu0 %v806, 64
    %v1126 = vpop.permute.xlu0 %1125
    %v1129 = vsel %vm288, %v1124, 0
    %1131 = vmatpush.bf16.msra.mxu0 0
    %1132 = vmatpush.bf16.msra.mxu0 0
    %1133 = vmatpush.bf16.msra.mxu0 0
    %1134 = vmatpush.bf16.msra.mxu0 0
    %1135 = vmatpush.bf16.msra.mxu0 0
    %1136 = vmatpush.bf16.msra.mxu0 0
    %1137 = vmatpush.bf16.msra.mxu0 0
    %1138 = vmatpush.bf16.msra.mxu0 %v1126
    %1139 = vmatmul.bf16.gmra.mxu0 %v1129
    %v1140 = vpop.f32.mrf.mxu0
    %v1141 = vadd.f32 0.0, %v1140
    %v1142 = vpop.f32.mrf.mxu0
    %v1143 = vadd.f32 0.0, %v1142
    %1144 = vdwg.mxu0
    %v1147 = vunpack.c.l.b16 %v1118
    %v1148 = vunpack.c.l.b16 %v1119
    %v1149 = vpack.c.b16 %v1148, %v1147
    %1150 = vrot.lane.b32.xlu0 %v834, 64
    %v1151 = vpop.permute.xlu0 %1150
    %v1154 = vsel %vm288, %v1149, 0
    %1156 = vmatpush.bf16.msra.mxu0 0
    %1157 = vmatpush.bf16.msra.mxu0 0
    %1158 = vmatpush.bf16.msra.mxu0 0
    %1159 = vmatpush.bf16.msra.mxu0 0
    %1160 = vmatpush.bf16.msra.mxu0 0
    %1161 = vmatpush.bf16.msra.mxu0 0
    %1162 = vmatpush.bf16.msra.mxu0 0
    %1163 = vmatpush.bf16.msra.mxu0 %v1151
    %1164 = vmatmul.bf16.gmra.mxu0 %v1154
    %v1165 = vpop.f32.mrf.mxu0
    %v1166 = vadd.f32 0.0, %v1165
    %v1167 = vpop.f32.mrf.mxu0
    %v1168 = vadd.f32 0.0, %v1167
    %1169 = vdwg.mxu0
    %1174 = vrot.lane.b32.xlu0 %v1141, 64
    %v1175 = vpop.permute.xlu0 %1174
    %1176 = vrot.lane.b32.xlu0 %v1143, 64
    %v1177 = vpop.permute.xlu0 %1176
    %1178 = vrot.lane.b32.xlu0 %v1166, 64
    %v1179 = vpop.permute.xlu0 %1178
    %1180 = vrot.lane.b32.xlu0 %v1168, 64
    %v1181 = vpop.permute.xlu0 %1180
    %vm1186 = vcmask 785920
    %1187 = vst.msk [vmem:[#allocation2] sm:$0xff] %vm1186, %v1175
    %1188 = vst.msk [vmem:[#allocation2 + $0x8] sm:$0xff] %vm1186, %v1177
    %1189 = vst.msk [vmem:[#allocation2 + $0x10] sm:$0xff] %vm1186, %v1179
    %1190 = vst.msk [vmem:[#allocation2 + $0x18] sm:$0xff] %vm1186, %v1181
    %1191 = vrot.lane.b32.xlu0 %v698, 32
    %v1192 = vpop.permute.xlu0 %1191
    %1193 = vrot.lane.b32.xlu0 %v701, 32
    %v1194 = vpop.permute.xlu0 %1193
    %v1196 = vsel %vm702, %v1192, 0
    %v1199 = vsel %vm702, %v1194, 0
    %1201 = vmatpush.bf16.xpose.msra.mxu0 0
    %1202 = vmatpush.bf16.xpose.msra.mxu0 0
    %1203 = vmatpush.bf16.xpose.msra.mxu0 0
    %1204 = vmatpush.bf16.xpose.msra.mxu0 0
    %1205 = vmatpush.bf16.xpose.msra.mxu0 0
    %1206 = vmatpush.bf16.xpose.msra.mxu0 0
    %1207 = vmatpush.bf16.xpose.msra.mxu0 0
    %1208 = vmatpush.bf16.xpose.msra.mxu0 %v1199
    %1209 = vmatmul.bf16.gmra.mxu0 %v1196
    %v1210 = vpop.f32.mrf.mxu0
    %v1211 = vadd.f32 %v361, %v1210
    %v1212 = vpop.f32.mrf.mxu0
    %v1213 = vadd.f32 %v362, %v1212
    %1214 = vdwg.mxu0
    %1215 = vrot.lane.b32.xlu0 %v725, 32
    %v1216 = vpop.permute.xlu0 %1215
    %1217 = vrot.lane.b32.xlu0 %v728, 32
    %v1218 = vpop.permute.xlu0 %1217
    %v1220 = vsel %vm702, %v1216, 0
    %v1223 = vsel %vm702, %v1218, 0
    %1225 = vmatpush.bf16.xpose.msra.mxu0 0
    %1226 = vmatpush.bf16.xpose.msra.mxu0 0
    %1227 = vmatpush.bf16.xpose.msra.mxu0 0
    %1228 = vmatpush.bf16.xpose.msra.mxu0 0
    %1229 = vmatpush.bf16.xpose.msra.mxu0 0
    %1230 = vmatpush.bf16.xpose.msra.mxu0 0
    %1231 = vmatpush.bf16.xpose.msra.mxu0 0
    %1232 = vmatpush.bf16.xpose.msra.mxu0 %v1223
    %1233 = vmatmul.bf16.gmra.mxu0 %v1220
    %v1234 = vpop.f32.mrf.mxu0
    %v1235 = vadd.f32 %v361, %v1234
    %v1236 = vpop.f32.mrf.mxu0
    %v1237 = vadd.f32 %v362, %v1236
    %1238 = vdwg.mxu0
    %v1239 = vsel %vm288, %v1211, -inf
    %1240 = vmax.xlane.f32.xlu0 %v1239
    %v1241 = vpop.xlane.xlu0 %1240
    %v1242 = vsel %vm288, %v1213, -inf
    %1243 = vmax.xlane.f32.xlu0 %v1242
    %v1244 = vpop.xlane.xlu0 %1243
    %v1245 = vsel %vm288, %v1235, -inf
    %1246 = vmax.xlane.f32.xlu0 %v1245
    %v1247 = vpop.xlane.xlu0 %1246
    %v1248 = vsel %vm288, %v1237, -inf
    %1249 = vmax.xlane.f32.xlu0 %v1248
    %v1250 = vpop.xlane.xlu0 %1249
    %v1251 = vsub.f32 %v1211, %v1241
    %v1252 = vsub.f32 %v1213, %v1244
    %v1253 = vsub.f32 %v1235, %v1247
    %v1254 = vsub.f32 %v1237, %v1250
    %v1255 = vmul.f32 %v1251, 1.442695
    %v1256 = vpow.pop %v1255
    %v1257 = vmul.f32 %v1252, 1.442695
    %v1258 = vpow.pop %v1257
    %v1259 = vmul.f32 %v1253, 1.442695
    %v1260 = vpow.pop %v1259
    %v1261 = vmul.f32 %v1254, 1.442695
    %v1262 = vpow.pop %v1261
    %v1263 = vsel %vm288, %v1256, 0.0
    %1264 = vadd.xlane.f32.xlu0 %v1263
    %v1265 = vpop.xlane.xlu0 %1264
    %v1266 = vsel %vm288, %v1258, 0.0
    %1267 = vadd.xlane.f32.xlu0 %v1266
    %v1268 = vpop.xlane.xlu0 %1267
    %v1269 = vsel %vm288, %v1260, 0.0
    %1270 = vadd.xlane.f32.xlu0 %v1269
    %v1271 = vpop.xlane.xlu0 %1270
    %v1272 = vsel %vm288, %v1262, 0.0
    %1273 = vadd.xlane.f32.xlu0 %v1272
    %v1274 = vpop.xlane.xlu0 %1273
    %v1275 = vrcp.pop %v1265
    %v1276 = vrcp.pop %v1268
    %v1277 = vrcp.pop %v1271
    %v1278 = vrcp.pop %v1274
    %v1279 = vmul.f32 %v1256, %v1275
    %v1280 = vmul.f32 %v1258, %v1276
    %v1281 = vmul.f32 %v1260, %v1277
    %v1282 = vmul.f32 %v1262, %v1278
    %v1283 = vpack.c.bf16 %v1279, %v1279
    %v1284 = vpack.c.bf16 %v1280, %v1280
    %v1285 = vpack.c.bf16 %v1281, %v1281
    %v1286 = vpack.c.bf16 %v1282, %v1282
    %v1289 = vunpack.c.l.b16 %v1283
    %v1290 = vunpack.c.l.b16 %v1284
    %v1291 = vpack.c.b16 %v1290, %v1289
    %1292 = vrot.lane.b32.xlu0 %v806, 32
    %v1293 = vpop.permute.xlu0 %1292
    %v1296 = vsel %vm288, %v1291, 0
    %1298 = vmatpush.bf16.msra.mxu0 0
    %1299 = vmatpush.bf16.msra.mxu0 0
    %1300 = vmatpush.bf16.msra.mxu0 0
    %1301 = vmatpush.bf16.msra.mxu0 0
    %1302 = vmatpush.bf16.msra.mxu0 0
    %1303 = vmatpush.bf16.msra.mxu0 0
    %1304 = vmatpush.bf16.msra.mxu0 0
    %1305 = vmatpush.bf16.msra.mxu0 %v1293
    %1306 = vmatmul.bf16.gmra.mxu0 %v1296
    %v1307 = vpop.f32.mrf.mxu0
    %v1308 = vadd.f32 0.0, %v1307
    %v1309 = vpop.f32.mrf.mxu0
    %v1310 = vadd.f32 0.0, %v1309
    %1311 = vdwg.mxu0
    %v1314 = vunpack.c.l.b16 %v1285
    %v1315 = vunpack.c.l.b16 %v1286
    %v1316 = vpack.c.b16 %v1315, %v1314
    %1317 = vrot.lane.b32.xlu0 %v834, 32
    %v1318 = vpop.permute.xlu0 %1317
    %v1321 = vsel %vm288, %v1316, 0
    %1323 = vmatpush.bf16.msra.mxu0 0
    %1324 = vmatpush.bf16.msra.mxu0 0
    %1325 = vmatpush.bf16.msra.mxu0 0
    %1326 = vmatpush.bf16.msra.mxu0 0
    %1327 = vmatpush.bf16.msra.mxu0 0
    %1328 = vmatpush.bf16.msra.mxu0 0
    %1329 = vmatpush.bf16.msra.mxu0 0
    %1330 = vmatpush.bf16.msra.mxu0 %v1318
    %1331 = vmatmul.bf16.gmra.mxu0 %v1321
    %v1332 = vpop.f32.mrf.mxu0
    %v1333 = vadd.f32 0.0, %v1332
    %v1334 = vpop.f32.mrf.mxu0
    %v1335 = vadd.f32 0.0, %v1334
    %1336 = vdwg.mxu0
    %1341 = vrot.lane.b32.xlu0 %v1308, 96
    %v1342 = vpop.permute.xlu0 %1341
    %1343 = vrot.lane.b32.xlu0 %v1310, 96
    %v1344 = vpop.permute.xlu0 %1343
    %1345 = vrot.lane.b32.xlu0 %v1333, 96
    %v1346 = vpop.permute.xlu0 %1345
    %1347 = vrot.lane.b32.xlu0 %v1335, 96
    %v1348 = vpop.permute.xlu0 %1347
    %vm1353 = vcmask 1048320
    %1354 = vst.msk [vmem:[#allocation2] sm:$0xff] %vm1353, %v1342
    %1355 = vst.msk [vmem:[#allocation2 + $0x8] sm:$0xff] %vm1353, %v1344
    %1356 = vst.msk [vmem:[#allocation2 + $0x10] sm:$0xff] %vm1353, %v1346
    %1357 = vst.msk [vmem:[#allocation2 + $0x18] sm:$0xff] %vm1353, %v1348
    %v1358 = vld [vmem:[#allocation2] sm:$0xff]
    %v1359 = vld [vmem:[#allocation2 + $0x8] sm:$0xff]
    %v1360 = vld [vmem:[#allocation2 + $0x10] sm:$0xff]
    %v1361 = vld [vmem:[#allocation2 + $0x18] sm:$0xff]
    %v1362 = vld [vmem:[#allocation8] sm:$0xf]
    %v1363 = vld [vmem:[#allocation8 + $0x4] sm:$0xf]
    %v1364 = vld [vmem:[#allocation8 + $0x8] sm:$0xf]
    %v1365 = vld [vmem:[#allocation8 + $0xc] sm:$0xf]
    %v1366 = vld [vmem:[#allocation8 + $0x10] sm:$0xf]
    %v1367 = vld [vmem:[#allocation8 + $0x14] sm:$0xf]
    %v1368 = vld [vmem:[#allocation8 + $0x18] sm:$0xf]
    %v1369 = vld [vmem:[#allocation8 + $0x1c] sm:$0xf]
    %v1370 = vld [vmem:[#allocation8 + $0x20] sm:$0xf]
    %v1371 = vld [vmem:[#allocation8 + $0x24] sm:$0xf]
    %v1372 = vld [vmem:[#allocation8 + $0x28] sm:$0xf]
    %v1373 = vld [vmem:[#allocation8 + $0x2c] sm:$0xf]
    %v1374 = vld [vmem:[#allocation8 + $0x30] sm:$0xf]
    %v1375 = vld [vmem:[#allocation8 + $0x34] sm:$0xf]
    %v1376 = vld [vmem:[#allocation8 + $0x38] sm:$0xf]
    %v1377 = vld [vmem:[#allocation8 + $0x3c] sm:$0xf]
    %v1378 = vpack.c.bf16 %v1359, %v1358
    %v1379 = vpack.c.bf16 %v1361, %v1360
    %v1396 = vunpack.c.l.b16 %v1362
    %v1397 = vunpack.c.l.b16 %v1363
    %v1398 = vunpack.c.l.b16 %v1364
    %v1399 = vunpack.c.l.b16 %v1365
    %v1400 = vunpack.c.l.b16 %v1366
    %v1401 = vunpack.c.l.b16 %v1367
    %v1402 = vunpack.c.l.b16 %v1368
    %v1403 = vunpack.c.l.b16 %v1369
    %v1404 = vunpack.c.l.b16 %v1370
    %v1405 = vunpack.c.l.b16 %v1371
    %v1406 = vunpack.c.l.b16 %v1372
    %v1407 = vunpack.c.l.b16 %v1373
    %v1408 = vunpack.c.l.b16 %v1374
    %v1409 = vunpack.c.l.b16 %v1375
    %v1410 = vunpack.c.l.b16 %v1376
    %v1411 = vunpack.c.l.b16 %v1377
    %v1412 = vpack.c.b16 %v1397, %v1396
    %v1413 = vpack.c.b16 %v1399, %v1398
    %v1414 = vpack.c.b16 %v1401, %v1400
    %v1415 = vpack.c.b16 %v1403, %v1402
    %v1416 = vpack.c.b16 %v1405, %v1404
    %v1417 = vpack.c.b16 %v1407, %v1406
    %v1418 = vpack.c.b16 %v1409, %v1408
    %v1419 = vpack.c.b16 %v1411, %v1410
    %1428 = vmatpush.bf16.msra.mxu0 %v1419
    %1429 = vmatpush.bf16.msra.mxu0 %v1418
    %1430 = vmatpush.bf16.msra.mxu0 %v1417
    %1431 = vmatpush.bf16.msra.mxu0 %v1416
    %1432 = vmatpush.bf16.msra.mxu0 %v1415
    %1433 = vmatpush.bf16.msra.mxu0 %v1414
    %1434 = vmatpush.bf16.msra.mxu0 %v1413
    %1435 = vmatpush.bf16.msra.mxu0 %v1412
    %1436 = vmatmul.bf16.gmra.mxu0 %v1378
    %v1437 = vpop.f32.mrf.mxu0
    %v1438 = vadd.f32 0.0, %v1437
    %v1439 = vpop.f32.mrf.mxu0
    %v1440 = vadd.f32 0.0, %v1439
    %1441 = vmatmul.bf16.gmra.mxu0 %v1379
    %v1442 = vpop.f32.mrf.mxu0
    %v1443 = vadd.f32 0.0, %v1442
    %v1444 = vpop.f32.mrf.mxu0
    %v1445 = vadd.f32 0.0, %v1444
    %1446 = vdwg.mxu0
    %v1447 = vadd.f32 %v348, %v1438
    %v1448 = vadd.f32 %v351, %v1440
    %v1449 = vadd.f32 %v354, %v1443
    %v1450 = vadd.f32 %v357, %v1445
    %v1451 = vperm.slane %v363, 2
    %v1452 = vadd.f32 %v1447, %v1451
    %v1453 = vadd.f32 %v1448, %v1451
    %v1454 = vadd.f32 %v1449, %v1451
    %v1455 = vadd.f32 %v1450, %v1451
    %1456 = vadd.xlane.f32.xlu0 %v1452
    %v1457 = vpop.xlane.xlu0 %1456
    %1458 = vadd.xlane.f32.xlu0 %v1453
    %v1459 = vpop.xlane.xlu0 %1458
    %1460 = vadd.xlane.f32.xlu0 %v1454
    %v1461 = vpop.xlane.xlu0 %1460
    %1462 = vadd.xlane.f32.xlu0 %v1455
    %v1463 = vpop.xlane.xlu0 %1462
    %v1464 = vmul.f32 %v1457, %v378
    %v1465 = vmul.f32 %v1459, %v378
    %v1466 = vmul.f32 %v1461, %v378
    %v1467 = vmul.f32 %v1463, %v378
    %v1468 = vsub.f32 %v1452, %v1464
    %v1469 = vsub.f32 %v1453, %v1465
    %v1470 = vsub.f32 %v1454, %v1466
    %v1471 = vsub.f32 %v1455, %v1467
    %v1472 = vmul.f32 %v1468, %v1468
    %v1473 = vmul.f32 %v1469, %v1469
    %v1474 = vmul.f32 %v1470, %v1470
    %v1475 = vmul.f32 %v1471, %v1471
    %1476 = vadd.xlane.f32.xlu0 %v1472
    %v1477 = vpop.xlane.xlu0 %1476
    %1478 = vadd.xlane.f32.xlu0 %v1473
    %v1479 = vpop.xlane.xlu0 %1478
    %1480 = vadd.xlane.f32.xlu0 %v1474
    %v1481 = vpop.xlane.xlu0 %1480
    %1482 = vadd.xlane.f32.xlu0 %v1475
    %v1483 = vpop.xlane.xlu0 %1482
    %v1484 = vmul.f32 %v1477, %v378
    %v1485 = vmul.f32 %v1479, %v378
    %v1486 = vmul.f32 %v1481, %v378
    %v1487 = vmul.f32 %v1483, %v378
    %v1488 = vadd.f32 %v1484, 1e-05
    %v1489 = vadd.f32 %v1485, 1e-05
    %v1490 = vadd.f32 %v1486, 1e-05
    %v1491 = vadd.f32 %v1487, 1e-05
    %v1492 = vrsqrt.pop %v1488
    %v1493 = vmul.f32 %v1492, %v1488
    %v1494 = vmul.f32 %v1493, %v1492
    %v1495 = vmul.f32 0.5, %v1494
    %v1496 = vsub.f32 1.5, %v1495
    %v1497 = vmul.f32 %v1492, %v1496
    %vm1498 = vweird.f32 %v1488
    %vm1499 = vweird.f32 %v1492
    %vm1500 = vmor %vm1498, %vm1499
    %v1501 = vsel %vm1500, %v1492, %v1497
    %v1502 = vrsqrt.pop %v1489
    %v1503 = vmul.f32 %v1502, %v1489
    %v1504 = vmul.f32 %v1503, %v1502
    %v1505 = vmul.f32 0.5, %v1504
    %v1506 = vsub.f32 1.5, %v1505
    %v1507 = vmul.f32 %v1502, %v1506
    %vm1508 = vweird.f32 %v1489
    %vm1509 = vweird.f32 %v1502
    %vm1510 = vmor %vm1508, %vm1509
    %v1511 = vsel %vm1510, %v1502, %v1507
    %v1512 = vrsqrt.pop %v1490
    %v1513 = vmul.f32 %v1512, %v1490
    %v1514 = vmul.f32 %v1513, %v1512
    %v1515 = vmul.f32 0.5, %v1514
    %v1516 = vsub.f32 1.5, %v1515
    %v1517 = vmul.f32 %v1512, %v1516
    %vm1518 = vweird.f32 %v1490
    %vm1519 = vweird.f32 %v1512
    %vm1520 = vmor %vm1518, %vm1519
    %v1521 = vsel %vm1520, %v1512, %v1517
    %v1522 = vrsqrt.pop %v1491
    %v1523 = vmul.f32 %v1522, %v1491
    %v1524 = vmul.f32 %v1523, %v1522
    %v1525 = vmul.f32 0.5, %v1524
    %v1526 = vsub.f32 1.5, %v1525
    %v1527 = vmul.f32 %v1522, %v1526
    %vm1528 = vweird.f32 %v1491
    %vm1529 = vweird.f32 %v1522
    %vm1530 = vmor %vm1528, %vm1529
    %v1531 = vsel %vm1530, %v1522, %v1527
    %v1532 = vmul.f32 %v1468, %v1501
    %v1533 = vmul.f32 %v1469, %v1511
    %v1534 = vmul.f32 %v1470, %v1521
    %v1535 = vmul.f32 %v1471, %v1531
    %v1536 = vperm.slane %v363, 3
    %v1537 = vmul.f32 %v1532, %v1536
    %v1538 = vmul.f32 %v1533, %v1536
    %v1539 = vmul.f32 %v1534, %v1536
    %v1540 = vmul.f32 %v1535, %v1536
    %v1541 = vperm.slane %v363, 4
    %v1542 = vadd.f32 %v1537, %v1541
    %v1543 = vadd.f32 %v1538, %v1541
    %v1544 = vadd.f32 %v1539, %v1541
    %v1545 = vadd.f32 %v1540, %v1541
    %v1546 = vld [vmem:[#allocation9] sm:$0xff]
    %v1547 = vld [vmem:[#allocation9 + $0x8] sm:$0xff]
    %v1548 = vld [vmem:[#allocation9 + $0x10] sm:$0xff]
    %v1549 = vld [vmem:[#allocation9 + $0x18] sm:$0xff]
    %v1550 = vld [vmem:[#allocation9 + $0x20] sm:$0xff]
    %v1551 = vld [vmem:[#allocation9 + $0x28] sm:$0xff]
    %v1552 = vld [vmem:[#allocation9 + $0x30] sm:$0xff]
    %v1553 = vld [vmem:[#allocation9 + $0x38] sm:$0xff]
    %v1554 = vld [vmem:[#allocation9 + $0x40] sm:$0xff]
    %v1555 = vld [vmem:[#allocation9 + $0x48] sm:$0xff]
    %v1556 = vld [vmem:[#allocation9 + $0x50] sm:$0xff]
    %v1557 = vld [vmem:[#allocation9 + $0x58] sm:$0xff]
    %v1558 = vld [vmem:[#allocation9 + $0x60] sm:$0xff]
    %v1559 = vld [vmem:[#allocation9 + $0x68] sm:$0xff]
    %v1560 = vld [vmem:[#allocation9 + $0x70] sm:$0xff]
    %v1561 = vld [vmem:[#allocation9 + $0x78] sm:$0xff]
    %v1562 = vld [vmem:[#allocation9 + $0x80] sm:$0xff]
    %v1563 = vld [vmem:[#allocation9 + $0x88] sm:$0xff]
    %v1564 = vld [vmem:[#allocation9 + $0x90] sm:$0xff]
    %v1565 = vld [vmem:[#allocation9 + $0x98] sm:$0xff]
    %v1566 = vld [vmem:[#allocation9 + $0xa0] sm:$0xff]
    %v1567 = vld [vmem:[#allocation9 + $0xa8] sm:$0xff]
    %v1568 = vld [vmem:[#allocation9 + $0xb0] sm:$0xff]
    %v1569 = vld [vmem:[#allocation9 + $0xb8] sm:$0xff]
    %v1570 = vld [vmem:[#allocation9 + $0xc0] sm:$0xff]
    %v1571 = vld [vmem:[#allocation9 + $0xc8] sm:$0xff]
    %v1572 = vld [vmem:[#allocation9 + $0xd0] sm:$0xff]
    %v1573 = vld [vmem:[#allocation9 + $0xd8] sm:$0xff]
    %v1574 = vld [vmem:[#allocation9 + $0xe0] sm:$0xff]
    %v1575 = vld [vmem:[#allocation9 + $0xe8] sm:$0xff]
    %v1576 = vld [vmem:[#allocation9 + $0xf0] sm:$0xff]
    %v1577 = vld [vmem:[#allocation9 + $0xf8] sm:$0xff]
    %v1578 = vpack.c.bf16 %v1543, %v1542
    %v1579 = vpack.c.bf16 %v1545, %v1544
    %v1580 = vld [vmem:[%s6] sm:$0xf]
    %v1582 = vperm.slane %v1580, 0
    %v1583 = vperm.slane %v1580, 1
    %v1584 = vperm.slane %v1580, 2
    %v1585 = vperm.slane %v1580, 3
    %v1622 = vunpack.c.l.b16 %v1546
    %v1623 = vunpack.c.h.b16 %v1546
    %v1624 = vunpack.c.l.b16 %v1547
    %v1625 = vunpack.c.h.b16 %v1547
    %v1626 = vunpack.c.l.b16 %v1548
    %v1627 = vunpack.c.h.b16 %v1548
    %v1628 = vunpack.c.l.b16 %v1549
    %v1629 = vunpack.c.h.b16 %v1549
    %v1630 = vunpack.c.l.b16 %v1550
    %v1631 = vunpack.c.h.b16 %v1550
    %v1632 = vunpack.c.l.b16 %v1551
    %v1633 = vunpack.c.h.b16 %v1551
    %v1634 = vunpack.c.l.b16 %v1552
    %v1635 = vunpack.c.h.b16 %v1552
    %v1636 = vunpack.c.l.b16 %v1553
    %v1637 = vunpack.c.h.b16 %v1553
    %v1638 = vunpack.c.l.b16 %v1554
    %v1639 = vunpack.c.h.b16 %v1554
    %v1640 = vunpack.c.l.b16 %v1555
    %v1641 = vunpack.c.h.b16 %v1555
    %v1642 = vunpack.c.l.b16 %v1556
    %v1643 = vunpack.c.h.b16 %v1556
    %v1644 = vunpack.c.l.b16 %v1557
    %v1645 = vunpack.c.h.b16 %v1557
    %v1646 = vunpack.c.l.b16 %v1558
    %v1647 = vunpack.c.h.b16 %v1558
    %v1648 = vunpack.c.l.b16 %v1559
    %v1649 = vunpack.c.h.b16 %v1559
    %v1650 = vunpack.c.l.b16 %v1560
    %v1651 = vunpack.c.h.b16 %v1560
    %v1652 = vunpack.c.l.b16 %v1561
    %v1653 = vunpack.c.h.b16 %v1561
    %v1654 = vunpack.c.l.b16 %v1562
    %v1655 = vunpack.c.h.b16 %v1562
    %v1656 = vunpack.c.l.b16 %v1563
    %v1657 = vunpack.c.h.b16 %v1563
    %v1658 = vunpack.c.l.b16 %v1564
    %v1659 = vunpack.c.h.b16 %v1564
    %v1660 = vunpack.c.l.b16 %v1565
    %v1661 = vunpack.c.h.b16 %v1565
    %v1662 = vunpack.c.l.b16 %v1566
    %v1663 = vunpack.c.h.b16 %v1566
    %v1664 = vunpack.c.l.b16 %v1567
    %v1665 = vunpack.c.h.b16 %v1567
    %v1666 = vunpack.c.l.b16 %v1568
    %v1667 = vunpack.c.h.b16 %v1568
    %v1668 = vunpack.c.l.b16 %v1569
    %v1669 = vunpack.c.h.b16 %v1569
    %v1670 = vunpack.c.l.b16 %v1570
    %v1671 = vunpack.c.h.b16 %v1570
    %v1672 = vunpack.c.l.b16 %v1571
    %v1673 = vunpack.c.h.b16 %v1571
    %v1674 = vunpack.c.l.b16 %v1572
    %v1675 = vunpack.c.h.b16 %v1572
    %v1676 = vunpack.c.l.b16 %v1573
    %v1677 = vunpack.c.h.b16 %v1573
    %v1678 = vunpack.c.l.b16 %v1574
    %v1679 = vunpack.c.h.b16 %v1574
    %v1680 = vunpack.c.l.b16 %v1575
    %v1681 = vunpack.c.h.b16 %v1575
    %v1682 = vunpack.c.l.b16 %v1576
    %v1683 = vunpack.c.h.b16 %v1576
    %v1684 = vunpack.c.l.b16 %v1577
    %v1685 = vunpack.c.h.b16 %v1577
    %v1686 = vpack.c.b16 %v1626, %v1622
    %v1687 = vpack.c.b16 %v1627, %v1623
    %v1688 = vpack.c.b16 %v1628, %v1624
    %v1689 = vpack.c.b16 %v1629, %v1625
    %v1690 = vpack.c.b16 %v1634, %v1630
    %v1691 = vpack.c.b16 %v1635, %v1631
    %v1692 = vpack.c.b16 %v1636, %v1632
    %v1693 = vpack.c.b16 %v1637, %v1633
    %v1694 = vpack.c.b16 %v1642, %v1638
    %v1695 = vpack.c.b16 %v1643, %v1639
    %v1696 = vpack.c.b16 %v1644, %v1640
    %v1697 = vpack.c.b16 %v1645, %v1641
    %v1698 = vpack.c.b16 %v1650, %v1646
    %v1699 = vpack.c.b16 %v1651, %v1647
    %v1700 = vpack.c.b16 %v1652, %v1648
    %v1701 = vpack.c.b16 %v1653, %v1649
    %v1702 = vpack.c.b16 %v1658, %v1654
    %v1703 = vpack.c.b16 %v1659, %v1655
    %v1704 = vpack.c.b16 %v1660, %v1656
    %v1705 = vpack.c.b16 %v1661, %v1657
    %v1706 = vpack.c.b16 %v1666, %v1662
    %v1707 = vpack.c.b16 %v1667, %v1663
    %v1708 = vpack.c.b16 %v1668, %v1664
    %v1709 = vpack.c.b16 %v1669, %v1665
    %v1710 = vpack.c.b16 %v1674, %v1670
    %v1711 = vpack.c.b16 %v1675, %v1671
    %v1712 = vpack.c.b16 %v1676, %v1672
    %v1713 = vpack.c.b16 %v1677, %v1673
    %v1714 = vpack.c.b16 %v1682, %v1678
    %v1715 = vpack.c.b16 %v1683, %v1679
    %v1716 = vpack.c.b16 %v1684, %v1680
    %v1717 = vpack.c.b16 %v1685, %v1681
    %1750 = vmatpush.bf16.msra.mxu0 %v1714
    %1751 = vmatpush.bf16.msra.mxu0 %v1710
    %1752 = vmatpush.bf16.msra.mxu0 %v1706
    %1753 = vmatpush.bf16.msra.mxu0 %v1702
    %1754 = vmatpush.bf16.msra.mxu0 %v1698
    %1755 = vmatpush.bf16.msra.mxu0 %v1694
    %1756 = vmatpush.bf16.msra.mxu0 %v1690
    %1757 = vmatpush.bf16.msra.mxu0 %v1686
    %1758 = vmatmul.bf16.gmra.mxu0 %v1578
    %v1759 = vpop.f32.mrf.mxu0
    %v1760 = vadd.f32 %v1582, %v1759
    %v1761 = vpop.f32.mrf.mxu0
    %v1762 = vadd.f32 %v1582, %v1761
    %1763 = vmatmul.bf16.gmra.mxu0 %v1579
    %v1764 = vpop.f32.mrf.mxu0
    %v1765 = vadd.f32 %v1582, %v1764
    %v1766 = vpop.f32.mrf.mxu0
    %v1767 = vadd.f32 %v1582, %v1766
    %1768 = vdwg.mxu0
    %1769 = vmatpush.bf16.msra.mxu0 %v1715
    %1770 = vmatpush.bf16.msra.mxu0 %v1711
    %1771 = vmatpush.bf16.msra.mxu0 %v1707
    %1772 = vmatpush.bf16.msra.mxu0 %v1703
    %1773 = vmatpush.bf16.msra.mxu0 %v1699
    %1774 = vmatpush.bf16.msra.mxu0 %v1695
    %1775 = vmatpush.bf16.msra.mxu0 %v1691
    %1776 = vmatpush.bf16.msra.mxu0 %v1687
    %1777 = vmatmul.bf16.gmra.mxu0 %v1578
    %v1778 = vpop.f32.mrf.mxu0
    %v1779 = vadd.f32 %v1583, %v1778
    %v1780 = vpop.f32.mrf.mxu0
    %v1781 = vadd.f32 %v1583, %v1780
    %1782 = vmatmul.bf16.gmra.mxu0 %v1579
    %v1783 = vpop.f32.mrf.mxu0
    %v1784 = vadd.f32 %v1583, %v1783
    %v1785 = vpop.f32.mrf.mxu0
    %v1786 = vadd.f32 %v1583, %v1785
    %1787 = vdwg.mxu0
    %1788 = vmatpush.bf16.msra.mxu0 %v1716
    %1789 = vmatpush.bf16.msra.mxu0 %v1712
    %1790 = vmatpush.bf16.msra.mxu0 %v1708
    %1791 = vmatpush.bf16.msra.mxu0 %v1704
    %1792 = vmatpush.bf16.msra.mxu0 %v1700
    %1793 = vmatpush.bf16.msra.mxu0 %v1696
    %1794 = vmatpush.bf16.msra.mxu0 %v1692
    %1795 = vmatpush.bf16.msra.mxu0 %v1688
    %1796 = vmatmul.bf16.gmra.mxu0 %v1578
    %v1797 = vpop.f32.mrf.mxu0
    %v1798 = vadd.f32 %v1584, %v1797
    %v1799 = vpop.f32.mrf.mxu0
    %v1800 = vadd.f32 %v1584, %v1799
    %1801 = vmatmul.bf16.gmra.mxu0 %v1579
    %v1802 = vpop.f32.mrf.mxu0
    %v1803 = vadd.f32 %v1584, %v1802
    %v1804 = vpop.f32.mrf.mxu0
    %v1805 = vadd.f32 %v1584, %v1804
    %1806 = vdwg.mxu0
    %1807 = vmatpush.bf16.msra.mxu0 %v1717
    %1808 = vmatpush.bf16.msra.mxu0 %v1713
    %1809 = vmatpush.bf16.msra.mxu0 %v1709
    %1810 = vmatpush.bf16.msra.mxu0 %v1705
    %1811 = vmatpush.bf16.msra.mxu0 %v1701
    %1812 = vmatpush.bf16.msra.mxu0 %v1697
    %1813 = vmatpush.bf16.msra.mxu0 %v1693
    %1814 = vmatpush.bf16.msra.mxu0 %v1689
    %1815 = vmatmul.bf16.gmra.mxu0 %v1578
    %v1816 = vpop.f32.mrf.mxu0
    %v1817 = vadd.f32 %v1585, %v1816
    %v1818 = vpop.f32.mrf.mxu0
    %v1819 = vadd.f32 %v1585, %v1818
    %1820 = vmatmul.bf16.gmra.mxu0 %v1579
    %v1821 = vpop.f32.mrf.mxu0
    %v1822 = vadd.f32 %v1585, %v1821
    %v1823 = vpop.f32.mrf.mxu0
    %v1824 = vadd.f32 %v1585, %v1823
    %1825 = vdwg.mxu0
    %v1826 = vmax.f32 %v1760, 0.0
    %v1827 = vmax.f32 %v1779, 0.0
    %v1828 = vmax.f32 %v1798, 0.0
    %v1829 = vmax.f32 %v1817, 0.0
    %v1830 = vmax.f32 %v1762, 0.0
    %v1831 = vmax.f32 %v1781, 0.0
    %v1832 = vmax.f32 %v1800, 0.0
    %v1833 = vmax.f32 %v1819, 0.0
    %v1834 = vmax.f32 %v1765, 0.0
    %v1835 = vmax.f32 %v1784, 0.0
    %v1836 = vmax.f32 %v1803, 0.0
    %v1837 = vmax.f32 %v1822, 0.0
    %v1838 = vmax.f32 %v1767, 0.0
    %v1839 = vmax.f32 %v1786, 0.0
    %v1840 = vmax.f32 %v1805, 0.0
    %v1841 = vmax.f32 %v1824, 0.0
    %v1842 = vld [vmem:[#allocation11] sm:$0xf]
    %v1843 = vld [vmem:[#allocation11 + $0x4] sm:$0xf]
    %v1844 = vld [vmem:[#allocation11 + $0x8] sm:$0xf]
    %v1845 = vld [vmem:[#allocation11 + $0xc] sm:$0xf]
    %v1846 = vld [vmem:[#allocation11 + $0x10] sm:$0xf]
    %v1847 = vld [vmem:[#allocation11 + $0x14] sm:$0xf]
    %v1848 = vld [vmem:[#allocation11 + $0x18] sm:$0xf]
    %v1849 = vld [vmem:[#allocation11 + $0x1c] sm:$0xf]
    %v1850 = vld [vmem:[#allocation11 + $0x20] sm:$0xf]
    %v1851 = vld [vmem:[#allocation11 + $0x24] sm:$0xf]
    %v1852 = vld [vmem:[#allocation11 + $0x28] sm:$0xf]
    %v1853 = vld [vmem:[#allocation11 + $0x2c] sm:$0xf]
    %v1854 = vld [vmem:[#allocation11 + $0x30] sm:$0xf]
    %v1855 = vld [vmem:[#allocation11 + $0x34] sm:$0xf]
    %v1856 = vld [vmem:[#allocation11 + $0x38] sm:$0xf]
    %v1857 = vld [vmem:[#allocation11 + $0x3c] sm:$0xf]
    %v1858 = vld [vmem:[#allocation11 + $0x40] sm:$0xf]
    %v1859 = vld [vmem:[#allocation11 + $0x44] sm:$0xf]
    %v1860 = vld [vmem:[#allocation11 + $0x48] sm:$0xf]
    %v1861 = vld [vmem:[#allocation11 + $0x4c] sm:$0xf]
    %v1862 = vld [vmem:[#allocation11 + $0x50] sm:$0xf]
    %v1863 = vld [vmem:[#allocation11 + $0x54] sm:$0xf]
    %v1864 = vld [vmem:[#allocation11 + $0x58] sm:$0xf]
    %v1865 = vld [vmem:[#allocation11 + $0x5c] sm:$0xf]
    %v1866 = vld [vmem:[#allocation11 + $0x60] sm:$0xf]
    %v1867 = vld [vmem:[#allocation11 + $0x64] sm:$0xf]
    %v1868 = vld [vmem:[#allocation11 + $0x68] sm:$0xf]
    %v1869 = vld [vmem:[#allocation11 + $0x6c] sm:$0xf]
    %v1870 = vld [vmem:[#allocation11 + $0x70] sm:$0xf]
    %v1871 = vld [vmem:[#allocation11 + $0x74] sm:$0xf]
    %v1872 = vld [vmem:[#allocation11 + $0x78] sm:$0xf]
    %v1873 = vld [vmem:[#allocation11 + $0x7c] sm:$0xf]
    %v1874 = vld [vmem:[#allocation11 + $0x80] sm:$0xf]
    %v1875 = vld [vmem:[#allocation11 + $0x84] sm:$0xf]
    %v1876 = vld [vmem:[#allocation11 + $0x88] sm:$0xf]
    %v1877 = vld [vmem:[#allocation11 + $0x8c] sm:$0xf]
    %v1878 = vld [vmem:[#allocation11 + $0x90] sm:$0xf]
    %v1879 = vld [vmem:[#allocation11 + $0x94] sm:$0xf]
    %v1880 = vld [vmem:[#allocation11 + $0x98] sm:$0xf]
    %v1881 = vld [vmem:[#allocation11 + $0x9c] sm:$0xf]
    %v1882 = vld [vmem:[#allocation11 + $0xa0] sm:$0xf]
    %v1883 = vld [vmem:[#allocation11 + $0xa4] sm:$0xf]
    %v1884 = vld [vmem:[#allocation11 + $0xa8] sm:$0xf]
    %v1885 = vld [vmem:[#allocation11 + $0xac] sm:$0xf]
    %v1886 = vld [vmem:[#allocation11 + $0xb0] sm:$0xf]
    %v1887 = vld [vmem:[#allocation11 + $0xb4] sm:$0xf]
    %v1888 = vld [vmem:[#allocation11 + $0xb8] sm:$0xf]
    %v1889 = vld [vmem:[#allocation11 + $0xbc] sm:$0xf]
    %v1890 = vld [vmem:[#allocation11 + $0xc0] sm:$0xf]
    %v1891 = vld [vmem:[#allocation11 + $0xc4] sm:$0xf]
    %v1892 = vld [vmem:[#allocation11 + $0xc8] sm:$0xf]
    %v1893 = vld [vmem:[#allocation11 + $0xcc] sm:$0xf]
    %v1894 = vld [vmem:[#allocation11 + $0xd0] sm:$0xf]
    %v1895 = vld [vmem:[#allocation11 + $0xd4] sm:$0xf]
    %v1896 = vld [vmem:[#allocation11 + $0xd8] sm:$0xf]
    %v1897 = vld [vmem:[#allocation11 + $0xdc] sm:$0xf]
    %v1898 = vld [vmem:[#allocation11 + $0xe0] sm:$0xf]
    %v1899 = vld [vmem:[#allocation11 + $0xe4] sm:$0xf]
    %v1900 = vld [vmem:[#allocation11 + $0xe8] sm:$0xf]
    %v1901 = vld [vmem:[#allocation11 + $0xec] sm:$0xf]
    %v1902 = vld [vmem:[#allocation11 + $0xf0] sm:$0xf]
    %v1903 = vld [vmem:[#allocation11 + $0xf4] sm:$0xf]
    %v1904 = vld [vmem:[#allocation11 + $0xf8] sm:$0xf]
    %v1905 = vld [vmem:[#allocation11 + $0xfc] sm:$0xf]
    %v1906 = vpack.c.bf16 %v1830, %v1826
    %v1907 = vpack.c.bf16 %v1831, %v1827
    %v1908 = vpack.c.bf16 %v1832, %v1828
    %v1909 = vpack.c.bf16 %v1833, %v1829
    %v1910 = vpack.c.bf16 %v1838, %v1834
    %v1911 = vpack.c.bf16 %v1839, %v1835
    %v1912 = vpack.c.bf16 %v1840, %v1836
    %v1913 = vpack.c.bf16 %v1841, %v1837
    %v1978 = vunpack.c.l.b16 %v1842
    %v1979 = vunpack.c.l.b16 %v1843
    %v1980 = vunpack.c.l.b16 %v1844
    %v1981 = vunpack.c.l.b16 %v1845
    %v1982 = vunpack.c.l.b16 %v1846
    %v1983 = vunpack.c.l.b16 %v1847
    %v1984 = vunpack.c.l.b16 %v1848
    %v1985 = vunpack.c.l.b16 %v1849
    %v1986 = vunpack.c.l.b16 %v1850
    %v1987 = vunpack.c.l.b16 %v1851
    %v1988 = vunpack.c.l.b16 %v1852
    %v1989 = vunpack.c.l.b16 %v1853
    %v1990 = vunpack.c.l.b16 %v1854
    %v1991 = vunpack.c.l.b16 %v1855
    %v1992 = vunpack.c.l.b16 %v1856
    %v1993 = vunpack.c.l.b16 %v1857
    %v1994 = vunpack.c.l.b16 %v1858
    %v1995 = vunpack.c.l.b16 %v1859
    %v1996 = vunpack.c.l.b16 %v1860
    %v1997 = vunpack.c.l.b16 %v1861
    %v1998 = vunpack.c.l.b16 %v1862
    %v1999 = vunpack.c.l.b16 %v1863
    %v2000 = vunpack.c.l.b16 %v1864
    %v2001 = vunpack.c.l.b16 %v1865
    %v2002 = vunpack.c.l.b16 %v1866
    %v2003 = vunpack.c.l.b16 %v1867
    %v2004 = vunpack.c.l.b16 %v1868
    %v2005 = vunpack.c.l.b16 %v1869
    %v2006 = vunpack.c.l.b16 %v1870
    %v2007 = vunpack.c.l.b16 %v1871
    %v2008 = vunpack.c.l.b16 %v1872
    %v2009 = vunpack.c.l.b16 %v1873
    %v2010 = vunpack.c.l.b16 %v1874
    %v2011 = vunpack.c.l.b16 %v1875
    %v2012 = vunpack.c.l.b16 %v1876
    %v2013 = vunpack.c.l.b16 %v1877
    %v2014 = vunpack.c.l.b16 %v1878
    %v2015 = vunpack.c.l.b16 %v1879
    %v2016 = vunpack.c.l.b16 %v1880
    %v2017 = vunpack.c.l.b16 %v1881
    %v2018 = vunpack.c.l.b16 %v1882
    %v2019 = vunpack.c.l.b16 %v1883
    %v2020 = vunpack.c.l.b16 %v1884
    %v2021 = vunpack.c.l.b16 %v1885
    %v2022 = vunpack.c.l.b16 %v1886
    %v2023 = vunpack.c.l.b16 %v1887
    %v2024 = vunpack.c.l.b16 %v1888
    %v2025 = vunpack.c.l.b16 %v1889
    %v2026 = vunpack.c.l.b16 %v1890
    %v2027 = vunpack.c.l.b16 %v1891
    %v2028 = vunpack.c.l.b16 %v1892
    %v2029 = vunpack.c.l.b16 %v1893
    %v2030 = vunpack.c.l.b16 %v1894
    %v2031 = vunpack.c.l.b16 %v1895
    %v2032 = vunpack.c.l.b16 %v1896
    %v2033 = vunpack.c.l.b16 %v1897
    %v2034 = vunpack.c.l.b16 %v1898
    %v2035 = vunpack.c.l.b16 %v1899
    %v2036 = vunpack.c.l.b16 %v1900
    %v2037 = vunpack.c.l.b16 %v1901
    %v2038 = vunpack.c.l.b16 %v1902
    %v2039 = vunpack.c.l.b16 %v1903
    %v2040 = vunpack.c.l.b16 %v1904
    %v2041 = vunpack.c.l.b16 %v1905
    %v2042 = vpack.c.b16 %v1979, %v1978
    %v2043 = vpack.c.b16 %v1981, %v1980
    %v2044 = vpack.c.b16 %v1983, %v1982
    %v2045 = vpack.c.b16 %v1985, %v1984
    %v2046 = vpack.c.b16 %v1987, %v1986
    %v2047 = vpack.c.b16 %v1989, %v1988
    %v2048 = vpack.c.b16 %v1991, %v1990
    %v2049 = vpack.c.b16 %v1993, %v1992
    %v2050 = vpack.c.b16 %v1995, %v1994
    %v2051 = vpack.c.b16 %v1997, %v1996
    %v2052 = vpack.c.b16 %v1999, %v1998
    %v2053 = vpack.c.b16 %v2001, %v2000
    %v2054 = vpack.c.b16 %v2003, %v2002
    %v2055 = vpack.c.b16 %v2005, %v2004
    %v2056 = vpack.c.b16 %v2007, %v2006
    %v2057 = vpack.c.b16 %v2009, %v2008
    %v2058 = vpack.c.b16 %v2011, %v2010
    %v2059 = vpack.c.b16 %v2013, %v2012
    %v2060 = vpack.c.b16 %v2015, %v2014
    %v2061 = vpack.c.b16 %v2017, %v2016
    %v2062 = vpack.c.b16 %v2019, %v2018
    %v2063 = vpack.c.b16 %v2021, %v2020
    %v2064 = vpack.c.b16 %v2023, %v2022
    %v2065 = vpack.c.b16 %v2025, %v2024
    %v2066 = vpack.c.b16 %v2027, %v2026
    %v2067 = vpack.c.b16 %v2029, %v2028
    %v2068 = vpack.c.b16 %v2031, %v2030
    %v2069 = vpack.c.b16 %v2033, %v2032
    %v2070 = vpack.c.b16 %v2035, %v2034
    %v2071 = vpack.c.b16 %v2037, %v2036
    %v2072 = vpack.c.b16 %v2039, %v2038
    %v2073 = vpack.c.b16 %v2041, %v2040
    %2106 = vmatpush.bf16.msra.mxu0 %v2049
    %2107 = vmatpush.bf16.msra.mxu0 %v2048
    %2108 = vmatpush.bf16.msra.mxu0 %v2047
    %2109 = vmatpush.bf16.msra.mxu0 %v2046
    %2110 = vmatpush.bf16.msra.mxu0 %v2045
    %2111 = vmatpush.bf16.msra.mxu0 %v2044
    %2112 = vmatpush.bf16.msra.mxu0 %v2043
    %2113 = vmatpush.bf16.msra.mxu0 %v2042
    %2114 = vmatmul.bf16.gmra.mxu0 %v1906
    %v2115 = vpop.f32.mrf.mxu0
    %v2116 = vadd.f32 0.0, %v2115
    %v2117 = vpop.f32.mrf.mxu0
    %v2118 = vadd.f32 0.0, %v2117
    %2119 = vmatmul.bf16.gmra.mxu0 %v1910
    %v2120 = vpop.f32.mrf.mxu0
    %v2121 = vadd.f32 0.0, %v2120
    %v2122 = vpop.f32.mrf.mxu0
    %v2123 = vadd.f32 0.0, %v2122
    %2124 = vdwg.mxu0
    %2125 = vmatpush.bf16.msra.mxu0 %v2057
    %2126 = vmatpush.bf16.msra.mxu0 %v2056
    %2127 = vmatpush.bf16.msra.mxu0 %v2055
    %2128 = vmatpush.bf16.msra.mxu0 %v2054
    %2129 = vmatpush.bf16.msra.mxu0 %v2053
    %2130 = vmatpush.bf16.msra.mxu0 %v2052
    %2131 = vmatpush.bf16.msra.mxu0 %v2051
    %2132 = vmatpush.bf16.msra.mxu0 %v2050
    %2133 = vmatmul.bf16.gmra.mxu0 %v1907
    %v2134 = vpop.f32.mrf.mxu0
    %v2135 = vadd.f32 %v2116, %v2134
    %v2136 = vpop.f32.mrf.mxu0
    %v2137 = vadd.f32 %v2118, %v2136
    %2138 = vmatmul.bf16.gmra.mxu0 %v1911
    %v2139 = vpop.f32.mrf.mxu0
    %v2140 = vadd.f32 %v2121, %v2139
    %v2141 = vpop.f32.mrf.mxu0
    %v2142 = vadd.f32 %v2123, %v2141
    %2143 = vdwg.mxu0
    %2144 = vmatpush.bf16.msra.mxu0 %v2065
    %2145 = vmatpush.bf16.msra.mxu0 %v2064
    %2146 = vmatpush.bf16.msra.mxu0 %v2063
    %2147 = vmatpush.bf16.msra.mxu0 %v2062
    %2148 = vmatpush.bf16.msra.mxu0 %v2061
    %2149 = vmatpush.bf16.msra.mxu0 %v2060
    %2150 = vmatpush.bf16.msra.mxu0 %v2059
    %2151 = vmatpush.bf16.msra.mxu0 %v2058
    %2152 = vmatmul.bf16.gmra.mxu0 %v1908
    %v2153 = vpop.f32.mrf.mxu0
    %v2154 = vadd.f32 %v2135, %v2153
    %v2155 = vpop.f32.mrf.mxu0
    %v2156 = vadd.f32 %v2137, %v2155
    %2157 = vmatmul.bf16.gmra.mxu0 %v1912
    %v2158 = vpop.f32.mrf.mxu0
    %v2159 = vadd.f32 %v2140, %v2158
    %v2160 = vpop.f32.mrf.mxu0
    %v2161 = vadd.f32 %v2142, %v2160
    %2162 = vdwg.mxu0
    %2163 = vmatpush.bf16.msra.mxu0 %v2073
    %2164 = vmatpush.bf16.msra.mxu0 %v2072
    %2165 = vmatpush.bf16.msra.mxu0 %v2071
    %2166 = vmatpush.bf16.msra.mxu0 %v2070
    %2167 = vmatpush.bf16.msra.mxu0 %v2069
    %2168 = vmatpush.bf16.msra.mxu0 %v2068
    %2169 = vmatpush.bf16.msra.mxu0 %v2067
    %2170 = vmatpush.bf16.msra.mxu0 %v2066
    %2171 = vmatmul.bf16.gmra.mxu0 %v1909
    %v2172 = vpop.f32.mrf.mxu0
    %v2173 = vadd.f32 %v2154, %v2172
    %v2174 = vpop.f32.mrf.mxu0
    %v2175 = vadd.f32 %v2156, %v2174
    %2176 = vmatmul.bf16.gmra.mxu0 %v1913
    %v2177 = vpop.f32.mrf.mxu0
    %v2178 = vadd.f32 %v2159, %v2177
    %v2179 = vpop.f32.mrf.mxu0
    %v2180 = vadd.f32 %v2161, %v2179
    %2181 = vdwg.mxu0
    %v2182 = vadd.f32 %v1452, %v2173
    %v2183 = vadd.f32 %v1453, %v2175
    %v2184 = vadd.f32 %v1454, %v2178
    %v2185 = vadd.f32 %v1455, %v2180
    %v2186 = vperm.slane %v363, 5
    %v2187 = vadd.f32 %v2182, %v2186
    %v2188 = vadd.f32 %v2183, %v2186
    %v2189 = vadd.f32 %v2184, %v2186
    %v2190 = vadd.f32 %v2185, %v2186
    %s2191 = scalar_lea.vmem %s2, 8
    %v2192 = vld [vmem:[%s2191] sm:$0x3f]
    %2193 = vadd.xlane.f32.xlu0 %v2187
    %v2194 = vpop.xlane.xlu0 %2193
    %2195 = vadd.xlane.f32.xlu0 %v2188
    %v2196 = vpop.xlane.xlu0 %2195
    %2197 = vadd.xlane.f32.xlu0 %v2189
    %v2198 = vpop.xlane.xlu0 %2197
    %2199 = vadd.xlane.f32.xlu0 %v2190
    %v2200 = vpop.xlane.xlu0 %2199
    %v2201 = vmul.f32 %v2194, %v378
    %v2202 = vmul.f32 %v2196, %v378
    %v2203 = vmul.f32 %v2198, %v378
    %v2204 = vmul.f32 %v2200, %v378
    %v2205 = vsub.f32 %v2187, %v2201
    %v2206 = vsub.f32 %v2188, %v2202
    %v2207 = vsub.f32 %v2189, %v2203
    %v2208 = vsub.f32 %v2190, %v2204
    %v2209 = vmul.f32 %v2205, %v2205
    %v2210 = vmul.f32 %v2206, %v2206
    %v2211 = vmul.f32 %v2207, %v2207
    %v2212 = vmul.f32 %v2208, %v2208
    %2213 = vadd.xlane.f32.xlu0 %v2209
    %v2214 = vpop.xlane.xlu0 %2213
    %2215 = vadd.xlane.f32.xlu0 %v2210
    %v2216 = vpop.xlane.xlu0 %2215
    %2217 = vadd.xlane.f32.xlu0 %v2211
    %v2218 = vpop.xlane.xlu0 %2217
    %2219 = vadd.xlane.f32.xlu0 %v2212
    %v2220 = vpop.xlane.xlu0 %2219
    %v2221 = vmul.f32 %v2214, %v378
    %v2222 = vmul.f32 %v2216, %v378
    %v2223 = vmul.f32 %v2218, %v378
    %v2224 = vmul.f32 %v2220, %v378
    %v2225 = vadd.f32 %v2221, 1e-05
    %v2226 = vadd.f32 %v2222, 1e-05
    %v2227 = vadd.f32 %v2223, 1e-05
    %v2228 = vadd.f32 %v2224, 1e-05
    %v2229 = vrsqrt.pop %v2225
    %v2230 = vmul.f32 %v2229, %v2225
    %v2231 = vmul.f32 %v2230, %v2229
    %v2232 = vmul.f32 0.5, %v2231
    %v2233 = vsub.f32 1.5, %v2232
    %v2234 = vmul.f32 %v2229, %v2233
    %vm2235 = vweird.f32 %v2225
    %vm2236 = vweird.f32 %v2229
    %vm2237 = vmor %vm2235, %vm2236
    %v2238 = vsel %vm2237, %v2229, %v2234
    %v2239 = vrsqrt.pop %v2226
    %v2240 = vmul.f32 %v2239, %v2226
    %v2241 = vmul.f32 %v2240, %v2239
    %v2242 = vmul.f32 0.5, %v2241
    %v2243 = vsub.f32 1.5, %v2242
    %v2244 = vmul.f32 %v2239, %v2243
    %vm2245 = vweird.f32 %v2226
    %vm2246 = vweird.f32 %v2239
    %vm2247 = vmor %vm2245, %vm2246
    %v2248 = vsel %vm2247, %v2239, %v2244
    %v2249 = vrsqrt.pop %v2227
    %v2250 = vmul.f32 %v2249, %v2227
    %v2251 = vmul.f32 %v2250, %v2249
    %v2252 = vmul.f32 0.5, %v2251
    %v2253 = vsub.f32 1.5, %v2252
    %v2254 = vmul.f32 %v2249, %v2253
    %vm2255 = vweird.f32 %v2227
    %vm2256 = vweird.f32 %v2249
    %vm2257 = vmor %vm2255, %vm2256
    %v2258 = vsel %vm2257, %v2249, %v2254
    %v2259 = vrsqrt.pop %v2228
    %v2260 = vmul.f32 %v2259, %v2228
    %v2261 = vmul.f32 %v2260, %v2259
    %v2262 = vmul.f32 0.5, %v2261
    %v2263 = vsub.f32 1.5, %v2262
    %v2264 = vmul.f32 %v2259, %v2263
    %vm2265 = vweird.f32 %v2228
    %vm2266 = vweird.f32 %v2259
    %vm2267 = vmor %vm2265, %vm2266
    %v2268 = vsel %vm2267, %v2259, %v2264
    %v2269 = vmul.f32 %v2205, %v2238
    %v2270 = vmul.f32 %v2206, %v2248
    %v2271 = vmul.f32 %v2207, %v2258
    %v2272 = vmul.f32 %v2208, %v2268
    %v2273 = vperm.slane %v2192, 0
    %v2274 = vmul.f32 %v2269, %v2273
    %v2275 = vmul.f32 %v2270, %v2273
    %v2276 = vmul.f32 %v2271, %v2273
    %v2277 = vmul.f32 %v2272, %v2273
    %v2278 = vperm.slane %v2192, 1
    %v2279 = vadd.f32 %v2274, %v2278
    %v2280 = vadd.f32 %v2275, %v2278
    %v2281 = vadd.f32 %v2276, %v2278
    %v2282 = vadd.f32 %v2277, %v2278
    %s2283 = scalar_lea.vmem [#allocation6], 192
    %v2284 = vld [vmem:[%s2283] sm:$0xff]
    %v2285 = vld [vmem:[%s2283 + $0x8] sm:$0xf]
    %v2286 = vld [vmem:[%s2283 + $0xc] sm:$0xff]
    %v2287 = vld [vmem:[%s2283 + $0x14] sm:$0xf]
    %v2288 = vld [vmem:[%s2283 + $0x18] sm:$0xff]
    %v2289 = vld [vmem:[%s2283 + $0x20] sm:$0xf]
    %v2290 = vld [vmem:[%s2283 + $0x24] sm:$0xff]
    %v2291 = vld [vmem:[%s2283 + $0x2c] sm:$0xf]
    %v2292 = vld [vmem:[%s2283 + $0x30] sm:$0xff]
    %v2293 = vld [vmem:[%s2283 + $0x38] sm:$0xf]
    %v2294 = vld [vmem:[%s2283 + $0x3c] sm:$0xff]
    %v2295 = vld [vmem:[%s2283 + $0x44] sm:$0xf]
    %v2296 = vld [vmem:[%s2283 + $0x48] sm:$0xff]
    %v2297 = vld [vmem:[%s2283 + $0x50] sm:$0xf]
    %v2298 = vld [vmem:[%s2283 + $0x54] sm:$0xff]
    %v2299 = vld [vmem:[%s2283 + $0x5c] sm:$0xf]
    %v2300 = vld [vmem:[%s2283 + $0x60] sm:$0xff]
    %v2301 = vld [vmem:[%s2283 + $0x68] sm:$0xf]
    %v2302 = vld [vmem:[%s2283 + $0x6c] sm:$0xff]
    %v2303 = vld [vmem:[%s2283 + $0x74] sm:$0xf]
    %v2304 = vld [vmem:[%s2283 + $0x78] sm:$0xff]
    %v2305 = vld [vmem:[%s2283 + $0x80] sm:$0xf]
    %v2306 = vld [vmem:[%s2283 + $0x84] sm:$0xff]
    %v2307 = vld [vmem:[%s2283 + $0x8c] sm:$0xf]
    %v2308 = vld [vmem:[%s2283 + $0x90] sm:$0xff]
    %v2309 = vld [vmem:[%s2283 + $0x98] sm:$0xf]
    %v2310 = vld [vmem:[%s2283 + $0x9c] sm:$0xff]
    %v2311 = vld [vmem:[%s2283 + $0xa4] sm:$0xf]
    %v2312 = vld [vmem:[%s2283 + $0xa8] sm:$0xff]
    %v2313 = vld [vmem:[%s2283 + $0xb0] sm:$0xf]
    %v2314 = vld [vmem:[%s2283 + $0xb4] sm:$0xff]
    %v2315 = vld [vmem:[%s2283 + $0xbc] sm:$0xf]
    %v2316 = vpack.c.bf16 %v2280, %v2279
    %v2317 = vpack.c.bf16 %v2282, %v2281
    %v2350 = vunpack.c.l.b16 %v2284
    %v2351 = vunpack.c.h.b16 %v2284
    %v2352 = vunpack.c.l.b16 %v2285
    %v2353 = vunpack.c.l.b16 %v2286
    %v2354 = vunpack.c.h.b16 %v2286
    %v2355 = vunpack.c.l.b16 %v2287
    %v2356 = vunpack.c.l.b16 %v2288
    %v2357 = vunpack.c.h.b16 %v2288
    %v2358 = vunpack.c.l.b16 %v2289
    %v2359 = vunpack.c.l.b16 %v2290
    %v2360 = vunpack.c.h.b16 %v2290
    %v2361 = vunpack.c.l.b16 %v2291
    %v2362 = vunpack.c.l.b16 %v2292
    %v2363 = vunpack.c.h.b16 %v2292
    %v2364 = vunpack.c.l.b16 %v2293
    %v2365 = vunpack.c.l.b16 %v2294
    %v2366 = vunpack.c.h.b16 %v2294
    %v2367 = vunpack.c.l.b16 %v2295
    %v2368 = vunpack.c.l.b16 %v2296
    %v2369 = vunpack.c.h.b16 %v2296
    %v2370 = vunpack.c.l.b16 %v2297
    %v2371 = vunpack.c.l.b16 %v2298
    %v2372 = vunpack.c.h.b16 %v2298
    %v2373 = vunpack.c.l.b16 %v2299
    %v2374 = vunpack.c.l.b16 %v2300
    %v2375 = vunpack.c.h.b16 %v2300
    %v2376 = vunpack.c.l.b16 %v2301
    %v2377 = vunpack.c.l.b16 %v2302
    %v2378 = vunpack.c.h.b16 %v2302
    %v2379 = vunpack.c.l.b16 %v2303
    %v2380 = vunpack.c.l.b16 %v2304
    %v2381 = vunpack.c.h.b16 %v2304
    %v2382 = vunpack.c.l.b16 %v2305
    %v2383 = vunpack.c.l.b16 %v2306
    %v2384 = vunpack.c.h.b16 %v2306
    %v2385 = vunpack.c.l.b16 %v2307
    %v2386 = vunpack.c.l.b16 %v2308
    %v2387 = vunpack.c.h.b16 %v2308
    %v2388 = vunpack.c.l.b16 %v2309
    %v2389 = vunpack.c.l.b16 %v2310
    %v2390 = vunpack.c.h.b16 %v2310
    %v2391 = vunpack.c.l.b16 %v2311
    %v2392 = vunpack.c.l.b16 %v2312
    %v2393 = vunpack.c.h.b16 %v2312
    %v2394 = vunpack.c.l.b16 %v2313
    %v2395 = vunpack.c.l.b16 %v2314
    %v2396 = vunpack.c.h.b16 %v2314
    %v2397 = vunpack.c.l.b16 %v2315
    %v2398 = vpack.c.b16 %v2353, %v2350
    %v2399 = vpack.c.b16 %v2354, %v2351
    %v2400 = vpack.c.b16 %v2355, %v2352
    %v2401 = vpack.c.b16 %v2359, %v2356
    %v2402 = vpack.c.b16 %v2360, %v2357
    %v2403 = vpack.c.b16 %v2361, %v2358
    %v2404 = vpack.c.b16 %v2365, %v2362
    %v2405 = vpack.c.b16 %v2366, %v2363
    %v2406 = vpack.c.b16 %v2367, %v2364
    %v2407 = vpack.c.b16 %v2371, %v2368
    %v2408 = vpack.c.b16 %v2372, %v2369
    %v2409 = vpack.c.b16 %v2373, %v2370
    %v2410 = vpack.c.b16 %v2377, %v2374
    %v2411 = vpack.c.b16 %v2378, %v2375
    %v2412 = vpack.c.b16 %v2379, %v2376
    %v2413 = vpack.c.b16 %v2383, %v2380
    %v2414 = vpack.c.b16 %v2384, %v2381
    %v2415 = vpack.c.b16 %v2385, %v2382
    %v2416 = vpack.c.b16 %v2389, %v2386
    %v2417 = vpack.c.b16 %v2390, %v2387
    %v2418 = vpack.c.b16 %v2391, %v2388
    %v2419 = vpack.c.b16 %v2395, %v2392
    %v2420 = vpack.c.b16 %v2396, %v2393
    %v2421 = vpack.c.b16 %v2397, %v2394
    %2446 = vmatpush.bf16.msra.mxu0 %v2419
    %2447 = vmatpush.bf16.msra.mxu0 %v2416
    %2448 = vmatpush.bf16.msra.mxu0 %v2413
    %2449 = vmatpush.bf16.msra.mxu0 %v2410
    %2450 = vmatpush.bf16.msra.mxu0 %v2407
    %2451 = vmatpush.bf16.msra.mxu0 %v2404
    %2452 = vmatpush.bf16.msra.mxu0 %v2401
    %2453 = vmatpush.bf16.msra.mxu0 %v2398
    %2454 = vmatmul.bf16.gmra.mxu0 %v2316
    %v2455 = vpop.f32.mrf.mxu0
    %v2456 = vadd.f32 0.0, %v2455
    %v2457 = vpop.f32.mrf.mxu0
    %v2458 = vadd.f32 0.0, %v2457
    %2459 = vmatmul.bf16.gmra.mxu0 %v2317
    %v2460 = vpop.f32.mrf.mxu0
    %v2461 = vadd.f32 0.0, %v2460
    %v2462 = vpop.f32.mrf.mxu0
    %v2463 = vadd.f32 0.0, %v2462
    %2464 = vdwg.mxu0
    %2465 = vmatpush.bf16.msra.mxu0 %v2420
    %2466 = vmatpush.bf16.msra.mxu0 %v2417
    %2467 = vmatpush.bf16.msra.mxu0 %v2414
    %2468 = vmatpush.bf16.msra.mxu0 %v2411
    %2469 = vmatpush.bf16.msra.mxu0 %v2408
    %2470 = vmatpush.bf16.msra.mxu0 %v2405
    %2471 = vmatpush.bf16.msra.mxu0 %v2402
    %2472 = vmatpush.bf16.msra.mxu0 %v2399
    %2473 = vmatmul.bf16.gmra.mxu0 %v2316
    %v2474 = vpop.f32.mrf.mxu0
    %v2475 = vadd.f32 0.0, %v2474
    %v2476 = vpop.f32.mrf.mxu0
    %v2477 = vadd.f32 0.0, %v2476
    %2478 = vmatmul.bf16.gmra.mxu0 %v2317
    %v2479 = vpop.f32.mrf.mxu0
    %v2480 = vadd.f32 0.0, %v2479
    %v2481 = vpop.f32.mrf.mxu0
    %v2482 = vadd.f32 0.0, %v2481
    %2483 = vdwg.mxu0
    %2484 = vmatpush.bf16.msra.mxu0 %v2421
    %2485 = vmatpush.bf16.msra.mxu0 %v2418
    %2486 = vmatpush.bf16.msra.mxu0 %v2415
    %2487 = vmatpush.bf16.msra.mxu0 %v2412
    %2488 = vmatpush.bf16.msra.mxu0 %v2409
    %2489 = vmatpush.bf16.msra.mxu0 %v2406
    %2490 = vmatpush.bf16.msra.mxu0 %v2403
    %2491 = vmatpush.bf16.msra.mxu0 %v2400
    %2492 = vmatmul.bf16.gmra.mxu0 %v2316
    %v2493 = vpop.f32.mrf.mxu0
    %v2494 = vadd.f32 0.0, %v2493
    %v2495 = vpop.f32.mrf.mxu0
    %v2496 = vadd.f32 0.0, %v2495
    %2497 = vmatmul.bf16.gmra.mxu0 %v2317
    %v2498 = vpop.f32.mrf.mxu0
    %v2499 = vadd.f32 0.0, %v2498
    %v2500 = vpop.f32.mrf.mxu0
    %v2501 = vadd.f32 0.0, %v2500
    %2502 = vdwg.mxu0
    %v2503 = vpack.c.bf16 %v2475, %v2456
    %v2504 = vpack.c.bf16 %v2494, %v2494
    %v2505 = vpack.c.bf16 %v2477, %v2458
    %v2506 = vpack.c.bf16 %v2496, %v2496
    %v2507 = vpack.c.bf16 %v2480, %v2461
    %v2508 = vpack.c.bf16 %v2499, %v2499
    %v2509 = vpack.c.bf16 %v2482, %v2463
    %v2510 = vpack.c.bf16 %v2501, %v2501
    %v2515 = vrot.slane %v2503, 4
    %v2516 = vrot.slane %v2505, 4
    %v2517 = vrot.slane %v2507, 4
    %v2518 = vrot.slane %v2509, 4
    %v2519 = vunpack.c.l.b16 %v2503
    %v2520 = vunpack.c.l.b16 %v2505
    %v2521 = vpack.c.b16 %v2520, %v2519
    %v2522 = vunpack.c.l.b16 %v2515
    %v2523 = vunpack.c.l.b16 %v2516
    %v2524 = vpack.c.b16 %v2523, %v2522
    %v2526 = vsel %vm702, %v2521, 0
    %v2529 = vsel %vm702, %v2524, 0
    %2531 = vmatpush.bf16.xpose.msra.mxu0 0
    %2532 = vmatpush.bf16.xpose.msra.mxu0 0
    %2533 = vmatpush.bf16.xpose.msra.mxu0 0
    %2534 = vmatpush.bf16.xpose.msra.mxu0 0
    %2535 = vmatpush.bf16.xpose.msra.mxu0 0
    %2536 = vmatpush.bf16.xpose.msra.mxu0 0
    %2537 = vmatpush.bf16.xpose.msra.mxu0 0
    %2538 = vmatpush.bf16.xpose.msra.mxu0 %v2529
    %2539 = vmatmul.bf16.gmra.mxu0 %v2526
    %v2540 = vpop.f32.mrf.mxu0
    %v2541 = vadd.f32 %v361, %v2540
    %v2542 = vpop.f32.mrf.mxu0
    %v2543 = vadd.f32 %v362, %v2542
    %2544 = vdwg.mxu0
    %v2545 = vunpack.c.l.b16 %v2507
    %v2546 = vunpack.c.l.b16 %v2509
    %v2547 = vpack.c.b16 %v2546, %v2545
    %v2548 = vunpack.c.l.b16 %v2517
    %v2549 = vunpack.c.l.b16 %v2518
    %v2550 = vpack.c.b16 %v2549, %v2548
    %v2552 = vsel %vm702, %v2547, 0
    %v2555 = vsel %vm702, %v2550, 0
    %2557 = vmatpush.bf16.xpose.msra.mxu0 0
    %2558 = vmatpush.bf16.xpose.msra.mxu0 0
    %2559 = vmatpush.bf16.xpose.msra.mxu0 0
    %2560 = vmatpush.bf16.xpose.msra.mxu0 0
    %2561 = vmatpush.bf16.xpose.msra.mxu0 0
    %2562 = vmatpush.bf16.xpose.msra.mxu0 0
    %2563 = vmatpush.bf16.xpose.msra.mxu0 0
    %2564 = vmatpush.bf16.xpose.msra.mxu0 %v2555
    %2565 = vmatmul.bf16.gmra.mxu0 %v2552
    %v2566 = vpop.f32.mrf.mxu0
    %v2567 = vadd.f32 %v361, %v2566
    %v2568 = vpop.f32.mrf.mxu0
    %v2569 = vadd.f32 %v362, %v2568
    %2570 = vdwg.mxu0
    %v2571 = vsel %vm288, %v2541, -inf
    %2572 = vmax.xlane.f32.xlu0 %v2571
    %v2573 = vpop.xlane.xlu0 %2572
    %v2574 = vsel %vm288, %v2543, -inf
    %2575 = vmax.xlane.f32.xlu0 %v2574
    %v2576 = vpop.xlane.xlu0 %2575
    %v2577 = vsel %vm288, %v2567, -inf
    %2578 = vmax.xlane.f32.xlu0 %v2577
    %v2579 = vpop.xlane.xlu0 %2578
    %v2580 = vsel %vm288, %v2569, -inf
    %2581 = vmax.xlane.f32.xlu0 %v2580
    %v2582 = vpop.xlane.xlu0 %2581
    %v2583 = vsub.f32 %v2541, %v2573
    %v2584 = vsub.f32 %v2543, %v2576
    %v2585 = vsub.f32 %v2567, %v2579
    %v2586 = vsub.f32 %v2569, %v2582
    %v2587 = vmul.f32 %v2583, 1.442695
    %v2588 = vpow.pop %v2587
    %v2589 = vmul.f32 %v2584, 1.442695
    %v2590 = vpow.pop %v2589
    %v2591 = vmul.f32 %v2585, 1.442695
    %v2592 = vpow.pop %v2591
    %v2593 = vmul.f32 %v2586, 1.442695
    %v2594 = vpow.pop %v2593
    %v2595 = vsel %vm288, %v2588, 0.0
    %2596 = vadd.xlane.f32.xlu0 %v2595
    %v2597 = vpop.xlane.xlu0 %2596
    %v2598 = vsel %vm288, %v2590, 0.0
    %2599 = vadd.xlane.f32.xlu0 %v2598
    %v2600 = vpop.xlane.xlu0 %2599
    %v2601 = vsel %vm288, %v2592, 0.0
    %2602 = vadd.xlane.f32.xlu0 %v2601
    %v2603 = vpop.xlane.xlu0 %2602
    %v2604 = vsel %vm288, %v2594, 0.0
    %2605 = vadd.xlane.f32.xlu0 %v2604
    %v2606 = vpop.xlane.xlu0 %2605
    %v2607 = vrcp.pop %v2597
    %v2608 = vrcp.pop %v2600
    %v2609 = vrcp.pop %v2603
    %v2610 = vrcp.pop %v2606
    %v2611 = vmul.f32 %v2588, %v2607
    %v2612 = vmul.f32 %v2590, %v2608
    %v2613 = vmul.f32 %v2592, %v2609
    %v2614 = vmul.f32 %v2594, %v2610
    %v2615 = vpack.c.bf16 %v2611, %v2611
    %v2616 = vpack.c.bf16 %v2612, %v2612
    %v2617 = vpack.c.bf16 %v2613, %v2613
    %v2618 = vpack.c.bf16 %v2614, %v2614
    %v2621 = vunpack.c.l.b16 %v2615
    %v2622 = vunpack.c.l.b16 %v2616
    %v2623 = vpack.c.b16 %v2622, %v2621
    %v2626 = vunpack.c.l.b16 %v2504
    %v2627 = vunpack.c.l.b16 %v2506
    %v2628 = vpack.c.b16 %v2627, %v2626
    %v2631 = vsel %vm288, %v2623, 0
    %2633 = vmatpush.bf16.msra.mxu0 0
    %2634 = vmatpush.bf16.msra.mxu0 0
    %2635 = vmatpush.bf16.msra.mxu0 0
    %2636 = vmatpush.bf16.msra.mxu0 0
    %2637 = vmatpush.bf16.msra.mxu0 0
    %2638 = vmatpush.bf16.msra.mxu0 0
    %2639 = vmatpush.bf16.msra.mxu0 0
    %2640 = vmatpush.bf16.msra.mxu0 %v2628
    %2641 = vmatmul.bf16.gmra.mxu0 %v2631
    %v2642 = vpop.f32.mrf.mxu0
    %v2643 = vadd.f32 0.0, %v2642
    %v2644 = vpop.f32.mrf.mxu0
    %v2645 = vadd.f32 0.0, %v2644
    %2646 = vdwg.mxu0
    %v2649 = vunpack.c.l.b16 %v2617
    %v2650 = vunpack.c.l.b16 %v2618
    %v2651 = vpack.c.b16 %v2650, %v2649
    %v2654 = vunpack.c.l.b16 %v2508
    %v2655 = vunpack.c.l.b16 %v2510
    %v2656 = vpack.c.b16 %v2655, %v2654
    %v2659 = vsel %vm288, %v2651, 0
    %2661 = vmatpush.bf16.msra.mxu0 0
    %2662 = vmatpush.bf16.msra.mxu0 0
    %2663 = vmatpush.bf16.msra.mxu0 0
    %2664 = vmatpush.bf16.msra.mxu0 0
    %2665 = vmatpush.bf16.msra.mxu0 0
    %2666 = vmatpush.bf16.msra.mxu0 0
    %2667 = vmatpush.bf16.msra.mxu0 0
    %2668 = vmatpush.bf16.msra.mxu0 %v2656
    %2669 = vmatmul.bf16.gmra.mxu0 %v2659
    %v2670 = vpop.f32.mrf.mxu0
    %v2671 = vadd.f32 0.0, %v2670
    %v2672 = vpop.f32.mrf.mxu0
    %v2673 = vadd.f32 0.0, %v2672
    %2674 = vdwg.mxu0
    %2675 = vst.msk [vmem:[#allocation2] sm:$0xff] %vm702, %v2643
    %2676 = vst.msk [vmem:[#allocation2 + $0x8] sm:$0xff] %vm702, %v2645
    %2677 = vst.msk [vmem:[#allocation2 + $0x10] sm:$0xff] %vm702, %v2671
    %2678 = vst.msk [vmem:[#allocation2 + $0x18] sm:$0xff] %vm702, %v2673
    %2679 = vrot.lane.b32.xlu0 %v2521, 96
    %v2680 = vpop.permute.xlu0 %2679
    %2681 = vrot.lane.b32.xlu0 %v2524, 96
    %v2682 = vpop.permute.xlu0 %2681
    %v2684 = vsel %vm702, %v2680, 0
    %v2687 = vsel %vm702, %v2682, 0
    %2689 = vmatpush.bf16.xpose.msra.mxu0 0
    %2690 = vmatpush.bf16.xpose.msra.mxu0 0
    %2691 = vmatpush.bf16.xpose.msra.mxu0 0
    %2692 = vmatpush.bf16.xpose.msra.mxu0 0
    %2693 = vmatpush.bf16.xpose.msra.mxu0 0
    %2694 = vmatpush.bf16.xpose.msra.mxu0 0
    %2695 = vmatpush.bf16.xpose.msra.mxu0 0
    %2696 = vmatpush.bf16.xpose.msra.mxu0 %v2687
    %2697 = vmatmul.bf16.gmra.mxu0 %v2684
    %v2698 = vpop.f32.mrf.mxu0
    %v2699 = vadd.f32 %v361, %v2698
    %v2700 = vpop.f32.mrf.mxu0
    %v2701 = vadd.f32 %v362, %v2700
    %2702 = vdwg.mxu0
    %2703 = vrot.lane.b32.xlu0 %v2547, 96
    %v2704 = vpop.permute.xlu0 %2703
    %2705 = vrot.lane.b32.xlu0 %v2550, 96
    %v2706 = vpop.permute.xlu0 %2705
    %v2708 = vsel %vm702, %v2704, 0
    %v2711 = vsel %vm702, %v2706, 0
    %2713 = vmatpush.bf16.xpose.msra.mxu0 0
    %2714 = vmatpush.bf16.xpose.msra.mxu0 0
    %2715 = vmatpush.bf16.xpose.msra.mxu0 0
    %2716 = vmatpush.bf16.xpose.msra.mxu0 0
    %2717 = vmatpush.bf16.xpose.msra.mxu0 0
    %2718 = vmatpush.bf16.xpose.msra.mxu0 0
    %2719 = vmatpush.bf16.xpose.msra.mxu0 0
    %2720 = vmatpush.bf16.xpose.msra.mxu0 %v2711
    %2721 = vmatmul.bf16.gmra.mxu0 %v2708
    %v2722 = vpop.f32.mrf.mxu0
    %v2723 = vadd.f32 %v361, %v2722
    %v2724 = vpop.f32.mrf.mxu0
    %v2725 = vadd.f32 %v362, %v2724
    %2726 = vdwg.mxu0
    %v2727 = vsel %vm288, %v2699, -inf
    %2728 = vmax.xlane.f32.xlu0 %v2727
    %v2729 = vpop.xlane.xlu0 %2728
    %v2730 = vsel %vm288, %v2701, -inf
    %2731 = vmax.xlane.f32.xlu0 %v2730
    %v2732 = vpop.xlane.xlu0 %2731
    %v2733 = vsel %vm288, %v2723, -inf
    %2734 = vmax.xlane.f32.xlu0 %v2733
    %v2735 = vpop.xlane.xlu0 %2734
    %v2736 = vsel %vm288, %v2725, -inf
    %2737 = vmax.xlane.f32.xlu0 %v2736
    %v2738 = vpop.xlane.xlu0 %2737
    %v2739 = vsub.f32 %v2699, %v2729
    %v2740 = vsub.f32 %v2701, %v2732
    %v2741 = vsub.f32 %v2723, %v2735
    %v2742 = vsub.f32 %v2725, %v2738
    %v2743 = vmul.f32 %v2739, 1.442695
    %v2744 = vpow.pop %v2743
    %v2745 = vmul.f32 %v2740, 1.442695
    %v2746 = vpow.pop %v2745
    %v2747 = vmul.f32 %v2741, 1.442695
    %v2748 = vpow.pop %v2747
    %v2749 = vmul.f32 %v2742, 1.442695
    %v2750 = vpow.pop %v2749
    %v2751 = vsel %vm288, %v2744, 0.0
    %2752 = vadd.xlane.f32.xlu0 %v2751
    %v2753 = vpop.xlane.xlu0 %2752
    %v2754 = vsel %vm288, %v2746, 0.0
    %2755 = vadd.xlane.f32.xlu0 %v2754
    %v2756 = vpop.xlane.xlu0 %2755
    %v2757 = vsel %vm288, %v2748, 0.0
    %2758 = vadd.xlane.f32.xlu0 %v2757
    %v2759 = vpop.xlane.xlu0 %2758
    %v2760 = vsel %vm288, %v2750, 0.0
    %2761 = vadd.xlane.f32.xlu0 %v2760
    %v2762 = vpop.xlane.xlu0 %2761
    %v2763 = vrcp.pop %v2753
    %v2764 = vrcp.pop %v2756
    %v2765 = vrcp.pop %v2759
    %v2766 = vrcp.pop %v2762
    %v2767 = vmul.f32 %v2744, %v2763
    %v2768 = vmul.f32 %v2746, %v2764
    %v2769 = vmul.f32 %v2748, %v2765
    %v2770 = vmul.f32 %v2750, %v2766
    %v2771 = vpack.c.bf16 %v2767, %v2767
    %v2772 = vpack.c.bf16 %v2768, %v2768
    %v2773 = vpack.c.bf16 %v2769, %v2769
    %v2774 = vpack.c.bf16 %v2770, %v2770
    %v2777 = vunpack.c.l.b16 %v2771
    %v2778 = vunpack.c.l.b16 %v2772
    %v2779 = vpack.c.b16 %v2778, %v2777
    %2780 = vrot.lane.b32.xlu0 %v2628, 96
    %v2781 = vpop.permute.xlu0 %2780
    %v2784 = vsel %vm288, %v2779, 0
    %2786 = vmatpush.bf16.msra.mxu0 0
    %2787 = vmatpush.bf16.msra.mxu0 0
    %2788 = vmatpush.bf16.msra.mxu0 0
    %2789 = vmatpush.bf16.msra.mxu0 0
    %2790 = vmatpush.bf16.msra.mxu0 0
    %2791 = vmatpush.bf16.msra.mxu0 0
    %2792 = vmatpush.bf16.msra.mxu0 0
    %2793 = vmatpush.bf16.msra.mxu0 %v2781
    %2794 = vmatmul.bf16.gmra.mxu0 %v2784
    %v2795 = vpop.f32.mrf.mxu0
    %v2796 = vadd.f32 0.0, %v2795
    %v2797 = vpop.f32.mrf.mxu0
    %v2798 = vadd.f32 0.0, %v2797
    %2799 = vdwg.mxu0
    %v2802 = vunpack.c.l.b16 %v2773
    %v2803 = vunpack.c.l.b16 %v2774
    %v2804 = vpack.c.b16 %v2803, %v2802
    %2805 = vrot.lane.b32.xlu0 %v2656, 96
    %v2806 = vpop.permute.xlu0 %2805
    %v2809 = vsel %vm288, %v2804, 0
    %2811 = vmatpush.bf16.msra.mxu0 0
    %2812 = vmatpush.bf16.msra.mxu0 0
    %2813 = vmatpush.bf16.msra.mxu0 0
    %2814 = vmatpush.bf16.msra.mxu0 0
    %2815 = vmatpush.bf16.msra.mxu0 0
    %2816 = vmatpush.bf16.msra.mxu0 0
    %2817 = vmatpush.bf16.msra.mxu0 0
    %2818 = vmatpush.bf16.msra.mxu0 %v2806
    %2819 = vmatmul.bf16.gmra.mxu0 %v2809
    %v2820 = vpop.f32.mrf.mxu0
    %v2821 = vadd.f32 0.0, %v2820
    %v2822 = vpop.f32.mrf.mxu0
    %v2823 = vadd.f32 0.0, %v2822
    %2824 = vdwg.mxu0
    %2829 = vrot.lane.b32.xlu0 %v2796, 32
    %v2830 = vpop.permute.xlu0 %2829
    %2831 = vrot.lane.b32.xlu0 %v2798, 32
    %v2832 = vpop.permute.xlu0 %2831
    %2833 = vrot.lane.b32.xlu0 %v2821, 32
    %v2834 = vpop.permute.xlu0 %2833
    %2835 = vrot.lane.b32.xlu0 %v2823, 32
    %v2836 = vpop.permute.xlu0 %2835
    %2841 = vst.msk [vmem:[#allocation2] sm:$0xff] %vm1019, %v2830
    %2842 = vst.msk [vmem:[#allocation2 + $0x8] sm:$0xff] %vm1019, %v2832
    %2843 = vst.msk [vmem:[#allocation2 + $0x10] sm:$0xff] %vm1019, %v2834
    %2844 = vst.msk [vmem:[#allocation2 + $0x18] sm:$0xff] %vm1019, %v2836
    %2845 = vrot.lane.b32.xlu0 %v2521, 64
    %v2846 = vpop.permute.xlu0 %2845
    %2847 = vrot.lane.b32.xlu0 %v2524, 64
    %v2848 = vpop.permute.xlu0 %2847
    %v2850 = vsel %vm702, %v2846, 0
    %v2853 = vsel %vm702, %v2848, 0
    %2855 = vmatpush.bf16.xpose.msra.mxu0 0
    %2856 = vmatpush.bf16.xpose.msra.mxu0 0
    %2857 = vmatpush.bf16.xpose.msra.mxu0 0
    %2858 = vmatpush.bf16.xpose.msra.mxu0 0
    %2859 = vmatpush.bf16.xpose.msra.mxu0 0
    %2860 = vmatpush.bf16.xpose.msra.mxu0 0
    %2861 = vmatpush.bf16.xpose.msra.mxu0 0
    %2862 = vmatpush.bf16.xpose.msra.mxu0 %v2853
    %2863 = vmatmul.bf16.gmra.mxu0 %v2850
    %v2864 = vpop.f32.mrf.mxu0
    %v2865 = vadd.f32 %v361, %v2864
    %v2866 = vpop.f32.mrf.mxu0
    %v2867 = vadd.f32 %v362, %v2866
    %2868 = vdwg.mxu0
    %2869 = vrot.lane.b32.xlu0 %v2547, 64
    %v2870 = vpop.permute.xlu0 %2869
    %2871 = vrot.lane.b32.xlu0 %v2550, 64
    %v2872 = vpop.permute.xlu0 %2871
    %v2874 = vsel %vm702, %v2870, 0
    %v2877 = vsel %vm702, %v2872, 0
    %2879 = vmatpush.bf16.xpose.msra.mxu0 0
    %2880 = vmatpush.bf16.xpose.msra.mxu0 0
    %2881 = vmatpush.bf16.xpose.msra.mxu0 0
    %2882 = vmatpush.bf16.xpose.msra.mxu0 0
    %2883 = vmatpush.bf16.xpose.msra.mxu0 0
    %2884 = vmatpush.bf16.xpose.msra.mxu0 0
    %2885 = vmatpush.bf16.xpose.msra.mxu0 0
    %2886 = vmatpush.bf16.xpose.msra.mxu0 %v2877
    %2887 = vmatmul.bf16.gmra.mxu0 %v2874
    %v2888 = vpop.f32.mrf.mxu0
    %v2889 = vadd.f32 %v361, %v2888
    %v2890 = vpop.f32.mrf.mxu0
    %v2891 = vadd.f32 %v362, %v2890
    %2892 = vdwg.mxu0
    %v2893 = vsel %vm288, %v2865, -inf
    %2894 = vmax.xlane.f32.xlu0 %v2893
    %v2895 = vpop.xlane.xlu0 %2894
    %v2896 = vsel %vm288, %v2867, -inf
    %2897 = vmax.xlane.f32.xlu0 %v2896
    %v2898 = vpop.xlane.xlu0 %2897
    %v2899 = vsel %vm288, %v2889, -inf
    %2900 = vmax.xlane.f32.xlu0 %v2899
    %v2901 = vpop.xlane.xlu0 %2900
    %v2902 = vsel %vm288, %v2891, -inf
    %2903 = vmax.xlane.f32.xlu0 %v2902
    %v2904 = vpop.xlane.xlu0 %2903
    %v2905 = vsub.f32 %v2865, %v2895
    %v2906 = vsub.f32 %v2867, %v2898
    %v2907 = vsub.f32 %v2889, %v2901
    %v2908 = vsub.f32 %v2891, %v2904
    %v2909 = vmul.f32 %v2905, 1.442695
    %v2910 = vpow.pop %v2909
    %v2911 = vmul.f32 %v2906, 1.442695
    %v2912 = vpow.pop %v2911
    %v2913 = vmul.f32 %v2907, 1.442695
    %v2914 = vpow.pop %v2913
    %v2915 = vmul.f32 %v2908, 1.442695
    %v2916 = vpow.pop %v2915
    %v2917 = vsel %vm288, %v2910, 0.0
    %2918 = vadd.xlane.f32.xlu0 %v2917
    %v2919 = vpop.xlane.xlu0 %2918
    %v2920 = vsel %vm288, %v2912, 0.0
    %2921 = vadd.xlane.f32.xlu0 %v2920
    %v2922 = vpop.xlane.xlu0 %2921
    %v2923 = vsel %vm288, %v2914, 0.0
    %2924 = vadd.xlane.f32.xlu0 %v2923
    %v2925 = vpop.xlane.xlu0 %2924
    %v2926 = vsel %vm288, %v2916, 0.0
    %2927 = vadd.xlane.f32.xlu0 %v2926
    %v2928 = vpop.xlane.xlu0 %2927
    %v2929 = vrcp.pop %v2919
    %v2930 = vrcp.pop %v2922
    %v2931 = vrcp.pop %v2925
    %v2932 = vrcp.pop %v2928
    %v2933 = vmul.f32 %v2910, %v2929
    %v2934 = vmul.f32 %v2912, %v2930
    %v2935 = vmul.f32 %v2914, %v2931
    %v2936 = vmul.f32 %v2916, %v2932
    %v2937 = vpack.c.bf16 %v2933, %v2933
    %v2938 = vpack.c.bf16 %v2934, %v2934
    %v2939 = vpack.c.bf16 %v2935, %v2935
    %v2940 = vpack.c.bf16 %v2936, %v2936
    %v2943 = vunpack.c.l.b16 %v2937
    %v2944 = vunpack.c.l.b16 %v2938
    %v2945 = vpack.c.b16 %v2944, %v2943
    %2946 = vrot.lane.b32.xlu0 %v2628, 64
    %v2947 = vpop.permute.xlu0 %2946
    %v2950 = vsel %vm288, %v2945, 0
    %2952 = vmatpush.bf16.msra.mxu0 0
    %2953 = vmatpush.bf16.msra.mxu0 0
    %2954 = vmatpush.bf16.msra.mxu0 0
    %2955 = vmatpush.bf16.msra.mxu0 0
    %2956 = vmatpush.bf16.msra.mxu0 0
    %2957 = vmatpush.bf16.msra.mxu0 0
    %2958 = vmatpush.bf16.msra.mxu0 0
    %2959 = vmatpush.bf16.msra.mxu0 %v2947
    %2960 = vmatmul.bf16.gmra.mxu0 %v2950
    %v2961 = vpop.f32.mrf.mxu0
    %v2962 = vadd.f32 0.0, %v2961
    %v2963 = vpop.f32.mrf.mxu0
    %v2964 = vadd.f32 0.0, %v2963
    %2965 = vdwg.mxu0
    %v2968 = vunpack.c.l.b16 %v2939
    %v2969 = vunpack.c.l.b16 %v2940
    %v2970 = vpack.c.b16 %v2969, %v2968
    %2971 = vrot.lane.b32.xlu0 %v2656, 64
    %v2972 = vpop.permute.xlu0 %2971
    %v2975 = vsel %vm288, %v2970, 0
    %2977 = vmatpush.bf16.msra.mxu0 0
    %2978 = vmatpush.bf16.msra.mxu0 0
    %2979 = vmatpush.bf16.msra.mxu0 0
    %2980 = vmatpush.bf16.msra.mxu0 0
    %2981 = vmatpush.bf16.msra.mxu0 0
    %2982 = vmatpush.bf16.msra.mxu0 0
    %2983 = vmatpush.bf16.msra.mxu0 0
    %2984 = vmatpush.bf16.msra.mxu0 %v2972
    %2985 = vmatmul.bf16.gmra.mxu0 %v2975
    %v2986 = vpop.f32.mrf.mxu0
    %v2987 = vadd.f32 0.0, %v2986
    %v2988 = vpop.f32.mrf.mxu0
    %v2989 = vadd.f32 0.0, %v2988
    %2990 = vdwg.mxu0
    %2995 = vrot.lane.b32.xlu0 %v2962, 64
    %v2996 = vpop.permute.xlu0 %2995
    %2997 = vrot.lane.b32.xlu0 %v2964, 64
    %v2998 = vpop.permute.xlu0 %2997
    %2999 = vrot.lane.b32.xlu0 %v2987, 64
    %v3000 = vpop.permute.xlu0 %2999
    %3001 = vrot.lane.b32.xlu0 %v2989, 64
    %v3002 = vpop.permute.xlu0 %3001
    %3007 = vst.msk [vmem:[#allocation2] sm:$0xff] %vm1186, %v2996
    %3008 = vst.msk [vmem:[#allocation2 + $0x8] sm:$0xff] %vm1186, %v2998
    %3009 = vst.msk [vmem:[#allocation2 + $0x10] sm:$0xff] %vm1186, %v3000
    %3010 = vst.msk [vmem:[#allocation2 + $0x18] sm:$0xff] %vm1186, %v3002
    %3011 = vrot.lane.b32.xlu0 %v2521, 32
    %v3012 = vpop.permute.xlu0 %3011
    %3013 = vrot.lane.b32.xlu0 %v2524, 32
    %v3014 = vpop.permute.xlu0 %3013
    %v3016 = vsel %vm702, %v3012, 0
    %v3019 = vsel %vm702, %v3014, 0
    %3021 = vmatpush.bf16.xpose.msra.mxu0 0
    %3022 = vmatpush.bf16.xpose.msra.mxu0 0
    %3023 = vmatpush.bf16.xpose.msra.mxu0 0
    %3024 = vmatpush.bf16.xpose.msra.mxu0 0
    %3025 = vmatpush.bf16.xpose.msra.mxu0 0
    %3026 = vmatpush.bf16.xpose.msra.mxu0 0
    %3027 = vmatpush.bf16.xpose.msra.mxu0 0
    %3028 = vmatpush.bf16.xpose.msra.mxu0 %v3019
    %3029 = vmatmul.bf16.gmra.mxu0 %v3016
    %v3030 = vpop.f32.mrf.mxu0
    %v3031 = vadd.f32 %v361, %v3030
    %v3032 = vpop.f32.mrf.mxu0
    %v3033 = vadd.f32 %v362, %v3032
    %3034 = vdwg.mxu0
    %3035 = vrot.lane.b32.xlu0 %v2547, 32
    %v3036 = vpop.permute.xlu0 %3035
    %3037 = vrot.lane.b32.xlu0 %v2550, 32
    %v3038 = vpop.permute.xlu0 %3037
    %v3040 = vsel %vm702, %v3036, 0
    %v3043 = vsel %vm702, %v3038, 0
    %3045 = vmatpush.bf16.xpose.msra.mxu0 0
    %3046 = vmatpush.bf16.xpose.msra.mxu0 0
    %3047 = vmatpush.bf16.xpose.msra.mxu0 0
    %3048 = vmatpush.bf16.xpose.msra.mxu0 0
    %3049 = vmatpush.bf16.xpose.msra.mxu0 0
    %3050 = vmatpush.bf16.xpose.msra.mxu0 0
    %3051 = vmatpush.bf16.xpose.msra.mxu0 0
    %3052 = vmatpush.bf16.xpose.msra.mxu0 %v3043
    %3053 = vmatmul.bf16.gmra.mxu0 %v3040
    %v3054 = vpop.f32.mrf.mxu0
    %v3055 = vadd.f32 %v361, %v3054
    %v3056 = vpop.f32.mrf.mxu0
    %v3057 = vadd.f32 %v362, %v3056
    %3058 = vdwg.mxu0
    %v3059 = vsel %vm288, %v3031, -inf
    %3060 = vmax.xlane.f32.xlu0 %v3059
    %v3061 = vpop.xlane.xlu0 %3060
    %v3062 = vsel %vm288, %v3033, -inf
    %3063 = vmax.xlane.f32.xlu0 %v3062
    %v3064 = vpop.xlane.xlu0 %3063
    %v3065 = vsel %vm288, %v3055, -inf
    %3066 = vmax.xlane.f32.xlu0 %v3065
    %v3067 = vpop.xlane.xlu0 %3066
    %v3068 = vsel %vm288, %v3057, -inf
    %3069 = vmax.xlane.f32.xlu0 %v3068
    %v3070 = vpop.xlane.xlu0 %3069
    %v3071 = vsub.f32 %v3031, %v3061
    %v3072 = vsub.f32 %v3033, %v3064
    %v3073 = vsub.f32 %v3055, %v3067
    %v3074 = vsub.f32 %v3057, %v3070
    %v3075 = vmul.f32 %v3071, 1.442695
    %v3076 = vpow.pop %v3075
    %v3077 = vmul.f32 %v3072, 1.442695
    %v3078 = vpow.pop %v3077
    %v3079 = vmul.f32 %v3073, 1.442695
    %v3080 = vpow.pop %v3079
    %v3081 = vmul.f32 %v3074, 1.442695
    %v3082 = vpow.pop %v3081
    %v3083 = vsel %vm288, %v3076, 0.0
    %3084 = vadd.xlane.f32.xlu0 %v3083
    %v3085 = vpop.xlane.xlu0 %3084
    %v3086 = vsel %vm288, %v3078, 0.0
    %3087 = vadd.xlane.f32.xlu0 %v3086
    %v3088 = vpop.xlane.xlu0 %3087
    %v3089 = vsel %vm288, %v3080, 0.0
    %3090 = vadd.xlane.f32.xlu0 %v3089
    %v3091 = vpop.xlane.xlu0 %3090
    %v3092 = vsel %vm288, %v3082, 0.0
    %3093 = vadd.xlane.f32.xlu0 %v3092
    %v3094 = vpop.xlane.xlu0 %3093
    %v3095 = vrcp.pop %v3085
    %v3096 = vrcp.pop %v3088
    %v3097 = vrcp.pop %v3091
    %v3098 = vrcp.pop %v3094
    %v3099 = vmul.f32 %v3076, %v3095
    %v3100 = vmul.f32 %v3078, %v3096
    %v3101 = vmul.f32 %v3080, %v3097
    %v3102 = vmul.f32 %v3082, %v3098
    %v3103 = vpack.c.bf16 %v3099, %v3099
    %v3104 = vpack.c.bf16 %v3100, %v3100
    %v3105 = vpack.c.bf16 %v3101, %v3101
    %v3106 = vpack.c.bf16 %v3102, %v3102
    %v3109 = vunpack.c.l.b16 %v3103
    %v3110 = vunpack.c.l.b16 %v3104
    %v3111 = vpack.c.b16 %v3110, %v3109
    %3112 = vrot.lane.b32.xlu0 %v2628, 32
    %v3113 = vpop.permute.xlu0 %3112
    %v3116 = vsel %vm288, %v3111, 0
    %3118 = vmatpush.bf16.msra.mxu0 0
    %3119 = vmatpush.bf16.msra.mxu0 0
    %3120 = vmatpush.bf16.msra.mxu0 0
    %3121 = vmatpush.bf16.msra.mxu0 0
    %3122 = vmatpush.bf16.msra.mxu0 0
    %3123 = vmatpush.bf16.msra.mxu0 0
    %3124 = vmatpush.bf16.msra.mxu0 0
    %3125 = vmatpush.bf16.msra.mxu0 %v3113
    %3126 = vmatmul.bf16.gmra.mxu0 %v3116
    %v3127 = vpop.f32.mrf.mxu0
    %v3128 = vadd.f32 0.0, %v3127
    %v3129 = vpop.f32.mrf.mxu0
    %v3130 = vadd.f32 0.0, %v3129
    %3131 = vdwg.mxu0
    %v3134 = vunpack.c.l.b16 %v3105
    %v3135 = vunpack.c.l.b16 %v3106
    %v3136 = vpack.c.b16 %v3135, %v3134
    %3137 = vrot.lane.b32.xlu0 %v2656, 32
    %v3138 = vpop.permute.xlu0 %3137
    %v3141 = vsel %vm288, %v3136, 0
    %3143 = vmatpush.bf16.msra.mxu0 0
    %3144 = vmatpush.bf16.msra.mxu0 0
    %3145 = vmatpush.bf16.msra.mxu0 0
    %3146 = vmatpush.bf16.msra.mxu0 0
    %3147 = vmatpush.bf16.msra.mxu0 0
    %3148 = vmatpush.bf16.msra.mxu0 0
    %3149 = vmatpush.bf16.msra.mxu0 0
    %3150 = vmatpush.bf16.msra.mxu0 %v3138
    %3151 = vmatmul.bf16.gmra.mxu0 %v3141
    %v3152 = vpop.f32.mrf.mxu0
    %v3153 = vadd.f32 0.0, %v3152
    %v3154 = vpop.f32.mrf.mxu0
    %v3155 = vadd.f32 0.0, %v3154
    %3156 = vdwg.mxu0
    %3161 = vrot.lane.b32.xlu0 %v3128, 96
    %v3162 = vpop.permute.xlu0 %3161
    %3163 = vrot.lane.b32.xlu0 %v3130, 96
    %v3164 = vpop.permute.xlu0 %3163
    %3165 = vrot.lane.b32.xlu0 %v3153, 96
    %v3166 = vpop.permute.xlu0 %3165
    %3167 = vrot.lane.b32.xlu0 %v3155, 96
    %v3168 = vpop.permute.xlu0 %3167
    %3173 = vst.msk [vmem:[#allocation2] sm:$0xff] %vm1353, %v3162
    %3174 = vst.msk [vmem:[#allocation2 + $0x8] sm:$0xff] %vm1353, %v3164
    %3175 = vst.msk [vmem:[#allocation2 + $0x10] sm:$0xff] %vm1353, %v3166
    %3176 = vst.msk [vmem:[#allocation2 + $0x18] sm:$0xff] %vm1353, %v3168
    %v3177 = vld [vmem:[#allocation2] sm:$0xff]
    %v3178 = vld [vmem:[#allocation2 + $0x8] sm:$0xff]
    %v3179 = vld [vmem:[#allocation2 + $0x10] sm:$0xff]
    %v3180 = vld [vmem:[#allocation2 + $0x18] sm:$0xff]
    %s3181 = scalar_lea.vmem [#allocation8], 64
    %v3182 = vld [vmem:[%s3181] sm:$0xf]
    %v3183 = vld [vmem:[%s3181 + $0x4] sm:$0xf]
    %v3184 = vld [vmem:[%s3181 + $0x8] sm:$0xf]
    %v3185 = vld [vmem:[%s3181 + $0xc] sm:$0xf]
    %v3186 = vld [vmem:[%s3181 + $0x10] sm:$0xf]
    %v3187 = vld [vmem:[%s3181 + $0x14] sm:$0xf]
    %v3188 = vld [vmem:[%s3181 + $0x18] sm:$0xf]
    %v3189 = vld [vmem:[%s3181 + $0x1c] sm:$0xf]
    %v3190 = vld [vmem:[%s3181 + $0x20] sm:$0xf]
    %v3191 = vld [vmem:[%s3181 + $0x24] sm:$0xf]
    %v3192 = vld [vmem:[%s3181 + $0x28] sm:$0xf]
    %v3193 = vld [vmem:[%s3181 + $0x2c] sm:$0xf]
    %v3194 = vld [vmem:[%s3181 + $0x30] sm:$0xf]
    %v3195 = vld [vmem:[%s3181 + $0x34] sm:$0xf]
    %v3196 = vld [vmem:[%s3181 + $0x38] sm:$0xf]
    %v3197 = vld [vmem:[%s3181 + $0x3c] sm:$0xf]
    %v3198 = vpack.c.bf16 %v3178, %v3177
    %v3199 = vpack.c.bf16 %v3180, %v3179
    %v3216 = vunpack.c.l.b16 %v3182
    %v3217 = vunpack.c.l.b16 %v3183
    %v3218 = vunpack.c.l.b16 %v3184
    %v3219 = vunpack.c.l.b16 %v3185
    %v3220 = vunpack.c.l.b16 %v3186
    %v3221 = vunpack.c.l.b16 %v3187
    %v3222 = vunpack.c.l.b16 %v3188
    %v3223 = vunpack.c.l.b16 %v3189
    %v3224 = vunpack.c.l.b16 %v3190
    %v3225 = vunpack.c.l.b16 %v3191
    %v3226 = vunpack.c.l.b16 %v3192
    %v3227 = vunpack.c.l.b16 %v3193
    %v3228 = vunpack.c.l.b16 %v3194
    %v3229 = vunpack.c.l.b16 %v3195
    %v3230 = vunpack.c.l.b16 %v3196
    %v3231 = vunpack.c.l.b16 %v3197
    %v3232 = vpack.c.b16 %v3217, %v3216
    %v3233 = vpack.c.b16 %v3219, %v3218
    %v3234 = vpack.c.b16 %v3221, %v3220
    %v3235 = vpack.c.b16 %v3223, %v3222
    %v3236 = vpack.c.b16 %v3225, %v3224
    %v3237 = vpack.c.b16 %v3227, %v3226
    %v3238 = vpack.c.b16 %v3229, %v3228
    %v3239 = vpack.c.b16 %v3231, %v3230
    %3248 = vmatpush.bf16.msra.mxu0 %v3239
    %3249 = vmatpush.bf16.msra.mxu0 %v3238
    %3250 = vmatpush.bf16.msra.mxu0 %v3237
    %3251 = vmatpush.bf16.msra.mxu0 %v3236
    %3252 = vmatpush.bf16.msra.mxu0 %v3235
    %3253 = vmatpush.bf16.msra.mxu0 %v3234
    %3254 = vmatpush.bf16.msra.mxu0 %v3233
    %3255 = vmatpush.bf16.msra.mxu0 %v3232
    %3256 = vmatmul.bf16.gmra.mxu0 %v3198
    %v3257 = vpop.f32.mrf.mxu0
    %v3258 = vadd.f32 0.0, %v3257
    %v3259 = vpop.f32.mrf.mxu0
    %v3260 = vadd.f32 0.0, %v3259
    %3261 = vmatmul.bf16.gmra.mxu0 %v3199
    %v3262 = vpop.f32.mrf.mxu0
    %v3263 = vadd.f32 0.0, %v3262
    %v3264 = vpop.f32.mrf.mxu0
    %v3265 = vadd.f32 0.0, %v3264
    %3266 = vdwg.mxu0
    %v3267 = vadd.f32 %v2187, %v3258
    %v3268 = vadd.f32 %v2188, %v3260
    %v3269 = vadd.f32 %v2189, %v3263
    %v3270 = vadd.f32 %v2190, %v3265
    %v3271 = vperm.slane %v2192, 2
    %v3272 = vadd.f32 %v3267, %v3271
    %v3273 = vadd.f32 %v3268, %v3271
    %v3274 = vadd.f32 %v3269, %v3271
    %v3275 = vadd.f32 %v3270, %v3271
    %3276 = vadd.xlane.f32.xlu0 %v3272
    %v3277 = vpop.xlane.xlu0 %3276
    %3278 = vadd.xlane.f32.xlu0 %v3273
    %v3279 = vpop.xlane.xlu0 %3278
    %3280 = vadd.xlane.f32.xlu0 %v3274
    %v3281 = vpop.xlane.xlu0 %3280
    %3282 = vadd.xlane.f32.xlu0 %v3275
    %v3283 = vpop.xlane.xlu0 %3282
    %v3284 = vmul.f32 %v3277, %v378
    %v3285 = vmul.f32 %v3279, %v378
    %v3286 = vmul.f32 %v3281, %v378
    %v3287 = vmul.f32 %v3283, %v378
    %v3288 = vsub.f32 %v3272, %v3284
    %v3289 = vsub.f32 %v3273, %v3285
    %v3290 = vsub.f32 %v3274, %v3286
    %v3291 = vsub.f32 %v3275, %v3287
    %v3292 = vmul.f32 %v3288, %v3288
    %v3293 = vmul.f32 %v3289, %v3289
    %v3294 = vmul.f32 %v3290, %v3290
    %v3295 = vmul.f32 %v3291, %v3291
    %3296 = vadd.xlane.f32.xlu0 %v3292
    %v3297 = vpop.xlane.xlu0 %3296
    %3298 = vadd.xlane.f32.xlu0 %v3293
    %v3299 = vpop.xlane.xlu0 %3298
    %3300 = vadd.xlane.f32.xlu0 %v3294
    %v3301 = vpop.xlane.xlu0 %3300
    %3302 = vadd.xlane.f32.xlu0 %v3295
    %v3303 = vpop.xlane.xlu0 %3302
    %v3304 = vmul.f32 %v3297, %v378
    %v3305 = vmul.f32 %v3299, %v378
    %v3306 = vmul.f32 %v3301, %v378
    %v3307 = vmul.f32 %v3303, %v378
    %v3308 = vadd.f32 %v3304, 1e-05
    %v3309 = vadd.f32 %v3305, 1e-05
    %v3310 = vadd.f32 %v3306, 1e-05
    %v3311 = vadd.f32 %v3307, 1e-05
    %v3312 = vrsqrt.pop %v3308
    %v3313 = vmul.f32 %v3312, %v3308
    %v3314 = vmul.f32 %v3313, %v3312
    %v3315 = vmul.f32 0.5, %v3314
    %v3316 = vsub.f32 1.5, %v3315
    %v3317 = vmul.f32 %v3312, %v3316
    %vm3318 = vweird.f32 %v3308
    %vm3319 = vweird.f32 %v3312
    %vm3320 = vmor %vm3318, %vm3319
    %v3321 = vsel %vm3320, %v3312, %v3317
    %v3322 = vrsqrt.pop %v3309
    %v3323 = vmul.f32 %v3322, %v3309
    %v3324 = vmul.f32 %v3323, %v3322
    %v3325 = vmul.f32 0.5, %v3324
    %v3326 = vsub.f32 1.5, %v3325
    %v3327 = vmul.f32 %v3322, %v3326
    %vm3328 = vweird.f32 %v3309
    %vm3329 = vweird.f32 %v3322
    %vm3330 = vmor %vm3328, %vm3329
    %v3331 = vsel %vm3330, %v3322, %v3327
    %v3332 = vrsqrt.pop %v3310
    %v3333 = vmul.f32 %v3332, %v3310
    %v3334 = vmul.f32 %v3333, %v3332
    %v3335 = vmul.f32 0.5, %v3334
    %v3336 = vsub.f32 1.5, %v3335
    %v3337 = vmul.f32 %v3332, %v3336
    %vm3338 = vweird.f32 %v3310
    %vm3339 = vweird.f32 %v3332
    %vm3340 = vmor %vm3338, %vm3339
    %v3341 = vsel %vm3340, %v3332, %v3337
    %v3342 = vrsqrt.pop %v3311
    %v3343 = vmul.f32 %v3342, %v3311
    %v3344 = vmul.f32 %v3343, %v3342
    %v3345 = vmul.f32 0.5, %v3344
    %v3346 = vsub.f32 1.5, %v3345
    %v3347 = vmul.f32 %v3342, %v3346
    %vm3348 = vweird.f32 %v3311
    %vm3349 = vweird.f32 %v3342
    %vm3350 = vmor %vm3348, %vm3349
    %v3351 = vsel %vm3350, %v3342, %v3347
    %v3352 = vmul.f32 %v3288, %v3321
    %v3353 = vmul.f32 %v3289, %v3331
    %v3354 = vmul.f32 %v3290, %v3341
    %v3355 = vmul.f32 %v3291, %v3351
    %v3356 = vperm.slane %v2192, 3
    %v3357 = vmul.f32 %v3352, %v3356
    %v3358 = vmul.f32 %v3353, %v3356
    %v3359 = vmul.f32 %v3354, %v3356
    %v3360 = vmul.f32 %v3355, %v3356
    %v3361 = vperm.slane %v2192, 4
    %v3362 = vadd.f32 %v3357, %v3361
    %v3363 = vadd.f32 %v3358, %v3361
    %v3364 = vadd.f32 %v3359, %v3361
    %v3365 = vadd.f32 %v3360, %v3361
    %s3366 = scalar_lea.vmem [#allocation9], 256
    %v3367 = vld [vmem:[%s3366] sm:$0xff]
    %v3368 = vld [vmem:[%s3366 + $0x8] sm:$0xff]
    %v3369 = vld [vmem:[%s3366 + $0x10] sm:$0xff]
    %v3370 = vld [vmem:[%s3366 + $0x18] sm:$0xff]
    %v3371 = vld [vmem:[%s3366 + $0x20] sm:$0xff]
    %v3372 = vld [vmem:[%s3366 + $0x28] sm:$0xff]
    %v3373 = vld [vmem:[%s3366 + $0x30] sm:$0xff]
    %v3374 = vld [vmem:[%s3366 + $0x38] sm:$0xff]
    %v3375 = vld [vmem:[%s3366 + $0x40] sm:$0xff]
    %v3376 = vld [vmem:[%s3366 + $0x48] sm:$0xff]
    %v3377 = vld [vmem:[%s3366 + $0x50] sm:$0xff]
    %v3378 = vld [vmem:[%s3366 + $0x58] sm:$0xff]
    %v3379 = vld [vmem:[%s3366 + $0x60] sm:$0xff]
    %v3380 = vld [vmem:[%s3366 + $0x68] sm:$0xff]
    %v3381 = vld [vmem:[%s3366 + $0x70] sm:$0xff]
    %v3382 = vld [vmem:[%s3366 + $0x78] sm:$0xff]
    %v3383 = vld [vmem:[%s3366 + $0x80] sm:$0xff]
    %v3384 = vld [vmem:[%s3366 + $0x88] sm:$0xff]
    %v3385 = vld [vmem:[%s3366 + $0x90] sm:$0xff]
    %v3386 = vld [vmem:[%s3366 + $0x98] sm:$0xff]
    %v3387 = vld [vmem:[%s3366 + $0xa0] sm:$0xff]
    %v3388 = vld [vmem:[%s3366 + $0xa8] sm:$0xff]
    %v3389 = vld [vmem:[%s3366 + $0xb0] sm:$0xff]
    %v3390 = vld [vmem:[%s3366 + $0xb8] sm:$0xff]
    %v3391 = vld [vmem:[%s3366 + $0xc0] sm:$0xff]
    %v3392 = vld [vmem:[%s3366 + $0xc8] sm:$0xff]
    %v3393 = vld [vmem:[%s3366 + $0xd0] sm:$0xff]
    %v3394 = vld [vmem:[%s3366 + $0xd8] sm:$0xff]
    %v3395 = vld [vmem:[%s3366 + $0xe0] sm:$0xff]
    %v3396 = vld [vmem:[%s3366 + $0xe8] sm:$0xff]
    %v3397 = vld [vmem:[%s3366 + $0xf0] sm:$0xff]
    %v3398 = vld [vmem:[%s3366 + $0xf8] sm:$0xff]
    %v3399 = vpack.c.bf16 %v3363, %v3362
    %v3400 = vpack.c.bf16 %v3365, %v3364
    %s3401 = scalar_lea.vmem %s6, 4
    %v3402 = vld [vmem:[%s3401] sm:$0xf]
    %v3404 = vperm.slane %v3402, 0
    %v3405 = vperm.slane %v3402, 1
    %v3406 = vperm.slane %v3402, 2
    %v3407 = vperm.slane %v3402, 3
    %v3444 = vunpack.c.l.b16 %v3367
    %v3445 = vunpack.c.h.b16 %v3367
    %v3446 = vunpack.c.l.b16 %v3368
    %v3447 = vunpack.c.h.b16 %v3368
    %v3448 = vunpack.c.l.b16 %v3369
    %v3449 = vunpack.c.h.b16 %v3369
    %v3450 = vunpack.c.l.b16 %v3370
    %v3451 = vunpack.c.h.b16 %v3370
    %v3452 = vunpack.c.l.b16 %v3371
    %v3453 = vunpack.c.h.b16 %v3371
    %v3454 = vunpack.c.l.b16 %v3372
    %v3455 = vunpack.c.h.b16 %v3372
    %v3456 = vunpack.c.l.b16 %v3373
    %v3457 = vunpack.c.h.b16 %v3373
    %v3458 = vunpack.c.l.b16 %v3374
    %v3459 = vunpack.c.h.b16 %v3374
    %v3460 = vunpack.c.l.b16 %v3375
    %v3461 = vunpack.c.h.b16 %v3375
    %v3462 = vunpack.c.l.b16 %v3376
    %v3463 = vunpack.c.h.b16 %v3376
    %v3464 = vunpack.c.l.b16 %v3377
    %v3465 = vunpack.c.h.b16 %v3377
    %v3466 = vunpack.c.l.b16 %v3378
    %v3467 = vunpack.c.h.b16 %v3378
    %v3468 = vunpack.c.l.b16 %v3379
    %v3469 = vunpack.c.h.b16 %v3379
    %v3470 = vunpack.c.l.b16 %v3380
    %v3471 = vunpack.c.h.b16 %v3380
    %v3472 = vunpack.c.l.b16 %v3381
    %v3473 = vunpack.c.h.b16 %v3381
    %v3474 = vunpack.c.l.b16 %v3382
    %v3475 = vunpack.c.h.b16 %v3382
    %v3476 = vunpack.c.l.b16 %v3383
    %v3477 = vunpack.c.h.b16 %v3383
    %v3478 = vunpack.c.l.b16 %v3384
    %v3479 = vunpack.c.h.b16 %v3384
    %v3480 = vunpack.c.l.b16 %v3385
    %v3481 = vunpack.c.h.b16 %v3385
    %v3482 = vunpack.c.l.b16 %v3386
    %v3483 = vunpack.c.h.b16 %v3386
    %v3484 = vunpack.c.l.b16 %v3387
    %v3485 = vunpack.c.h.b16 %v3387
    %v3486 = vunpack.c.l.b16 %v3388
    %v3487 = vunpack.c.h.b16 %v3388
    %v3488 = vunpack.c.l.b16 %v3389
    %v3489 = vunpack.c.h.b16 %v3389
    %v3490 = vunpack.c.l.b16 %v3390
    %v3491 = vunpack.c.h.b16 %v3390
    %v3492 = vunpack.c.l.b16 %v3391
    %v3493 = vunpack.c.h.b16 %v3391
    %v3494 = vunpack.c.l.b16 %v3392
    %v3495 = vunpack.c.h.b16 %v3392
    %v3496 = vunpack.c.l.b16 %v3393
    %v3497 = vunpack.c.h.b16 %v3393
    %v3498 = vunpack.c.l.b16 %v3394
    %v3499 = vunpack.c.h.b16 %v3394
    %v3500 = vunpack.c.l.b16 %v3395
    %v3501 = vunpack.c.h.b16 %v3395
    %v3502 = vunpack.c.l.b16 %v3396
    %v3503 = vunpack.c.h.b16 %v3396
    %v3504 = vunpack.c.l.b16 %v3397
    %v3505 = vunpack.c.h.b16 %v3397
    %v3506 = vunpack.c.l.b16 %v3398
    %v3507 = vunpack.c.h.b16 %v3398
    %v3508 = vpack.c.b16 %v3448, %v3444
    %v3509 = vpack.c.b16 %v3449, %v3445
    %v3510 = vpack.c.b16 %v3450, %v3446
    %v3511 = vpack.c.b16 %v3451, %v3447
    %v3512 = vpack.c.b16 %v3456, %v3452
    %v3513 = vpack.c.b16 %v3457, %v3453
    %v3514 = vpack.c.b16 %v3458, %v3454
    %v3515 = vpack.c.b16 %v3459, %v3455
    %v3516 = vpack.c.b16 %v3464, %v3460
    %v3517 = vpack.c.b16 %v3465, %v3461
    %v3518 = vpack.c.b16 %v3466, %v3462
    %v3519 = vpack.c.b16 %v3467, %v3463
    %v3520 = vpack.c.b16 %v3472, %v3468
    %v3521 = vpack.c.b16 %v3473, %v3469
    %v3522 = vpack.c.b16 %v3474, %v3470
    %v3523 = vpack.c.b16 %v3475, %v3471
    %v3524 = vpack.c.b16 %v3480, %v3476
    %v3525 = vpack.c.b16 %v3481, %v3477
    %v3526 = vpack.c.b16 %v3482, %v3478
    %v3527 = vpack.c.b16 %v3483, %v3479
    %v3528 = vpack.c.b16 %v3488, %v3484
    %v3529 = vpack.c.b16 %v3489, %v3485
    %v3530 = vpack.c.b16 %v3490, %v3486
    %v3531 = vpack.c.b16 %v3491, %v3487
    %v3532 = vpack.c.b16 %v3496, %v3492
    %v3533 = vpack.c.b16 %v3497, %v3493
    %v3534 = vpack.c.b16 %v3498, %v3494
    %v3535 = vpack.c.b16 %v3499, %v3495
    %v3536 = vpack.c.b16 %v3504, %v3500
    %v3537 = vpack.c.b16 %v3505, %v3501
    %v3538 = vpack.c.b16 %v3506, %v3502
    %v3539 = vpack.c.b16 %v3507, %v3503
    %3572 = vmatpush.bf16.msra.mxu0 %v3536
    %3573 = vmatpush.bf16.msra.mxu0 %v3532
    %3574 = vmatpush.bf16.msra.mxu0 %v3528
    %3575 = vmatpush.bf16.msra.mxu0 %v3524
    %3576 = vmatpush.bf16.msra.mxu0 %v3520
    %3577 = vmatpush.bf16.msra.mxu0 %v3516
    %3578 = vmatpush.bf16.msra.mxu0 %v3512
    %3579 = vmatpush.bf16.msra.mxu0 %v3508
    %3580 = vmatmul.bf16.gmra.mxu0 %v3399
    %v3581 = vpop.f32.mrf.mxu0
    %v3582 = vadd.f32 %v3404, %v3581
    %v3583 = vpop.f32.mrf.mxu0
    %v3584 = vadd.f32 %v3404, %v3583
    %3585 = vmatmul.bf16.gmra.mxu0 %v3400
    %v3586 = vpop.f32.mrf.mxu0
    %v3587 = vadd.f32 %v3404, %v3586
    %v3588 = vpop.f32.mrf.mxu0
    %v3589 = vadd.f32 %v3404, %v3588
    %3590 = vdwg.mxu0
    %3591 = vmatpush.bf16.msra.mxu0 %v3537
    %3592 = vmatpush.bf16.msra.mxu0 %v3533
    %3593 = vmatpush.bf16.msra.mxu0 %v3529
    %3594 = vmatpush.bf16.msra.mxu0 %v3525
    %3595 = vmatpush.bf16.msra.mxu0 %v3521
    %3596 = vmatpush.bf16.msra.mxu0 %v3517
    %3597 = vmatpush.bf16.msra.mxu0 %v3513
    %3598 = vmatpush.bf16.msra.mxu0 %v3509
    %3599 = vmatmul.bf16.gmra.mxu0 %v3399
    %v3600 = vpop.f32.mrf.mxu0
    %v3601 = vadd.f32 %v3405, %v3600
    %v3602 = vpop.f32.mrf.mxu0
    %v3603 = vadd.f32 %v3405, %v3602
    %3604 = vmatmul.bf16.gmra.mxu0 %v3400
    %v3605 = vpop.f32.mrf.mxu0
    %v3606 = vadd.f32 %v3405, %v3605
    %v3607 = vpop.f32.mrf.mxu0
    %v3608 = vadd.f32 %v3405, %v3607
    %3609 = vdwg.mxu0
    %3610 = vmatpush.bf16.msra.mxu0 %v3538
    %3611 = vmatpush.bf16.msra.mxu0 %v3534
    %3612 = vmatpush.bf16.msra.mxu0 %v3530
    %3613 = vmatpush.bf16.msra.mxu0 %v3526
    %3614 = vmatpush.bf16.msra.mxu0 %v3522
    %3615 = vmatpush.bf16.msra.mxu0 %v3518
    %3616 = vmatpush.bf16.msra.mxu0 %v3514
    %3617 = vmatpush.bf16.msra.mxu0 %v3510
    %3618 = vmatmul.bf16.gmra.mxu0 %v3399
    %v3619 = vpop.f32.mrf.mxu0
    %v3620 = vadd.f32 %v3406, %v3619
    %v3621 = vpop.f32.mrf.mxu0
    %v3622 = vadd.f32 %v3406, %v3621
    %3623 = vmatmul.bf16.gmra.mxu0 %v3400
    %v3624 = vpop.f32.mrf.mxu0
    %v3625 = vadd.f32 %v3406, %v3624
    %v3626 = vpop.f32.mrf.mxu0
    %v3627 = vadd.f32 %v3406, %v3626
    %3628 = vdwg.mxu0
    %3629 = vmatpush.bf16.msra.mxu0 %v3539
    %3630 = vmatpush.bf16.msra.mxu0 %v3535
    %3631 = vmatpush.bf16.msra.mxu0 %v3531
    %3632 = vmatpush.bf16.msra.mxu0 %v3527
    %3633 = vmatpush.bf16.msra.mxu0 %v3523
    %3634 = vmatpush.bf16.msra.mxu0 %v3519
    %3635 = vmatpush.bf16.msra.mxu0 %v3515
    %3636 = vmatpush.bf16.msra.mxu0 %v3511
    %3637 = vmatmul.bf16.gmra.mxu0 %v3399
    %v3638 = vpop.f32.mrf.mxu0
    %v3639 = vadd.f32 %v3407, %v3638
    %v3640 = vpop.f32.mrf.mxu0
    %v3641 = vadd.f32 %v3407, %v3640
    %3642 = vmatmul.bf16.gmra.mxu0 %v3400
    %v3643 = vpop.f32.mrf.mxu0
    %v3644 = vadd.f32 %v3407, %v3643
    %v3645 = vpop.f32.mrf.mxu0
    %v3646 = vadd.f32 %v3407, %v3645
    %3647 = vdwg.mxu0
    %v3648 = vmax.f32 %v3582, 0.0
    %v3649 = vmax.f32 %v3601, 0.0
    %v3650 = vmax.f32 %v3620, 0.0
    %v3651 = vmax.f32 %v3639, 0.0
    %v3652 = vmax.f32 %v3584, 0.0
    %v3653 = vmax.f32 %v3603, 0.0
    %v3654 = vmax.f32 %v3622, 0.0
    %v3655 = vmax.f32 %v3641, 0.0
    %v3656 = vmax.f32 %v3587, 0.0
    %v3657 = vmax.f32 %v3606, 0.0
    %v3658 = vmax.f32 %v3625, 0.0
    %v3659 = vmax.f32 %v3644, 0.0
    %v3660 = vmax.f32 %v3589, 0.0
    %v3661 = vmax.f32 %v3608, 0.0
    %v3662 = vmax.f32 %v3627, 0.0
    %v3663 = vmax.f32 %v3646, 0.0
    %s3664 = scalar_lea.vmem [#allocation11], 256
    %v3665 = vld [vmem:[%s3664] sm:$0xf]
    %v3666 = vld [vmem:[%s3664 + $0x4] sm:$0xf]
    %v3667 = vld [vmem:[%s3664 + $0x8] sm:$0xf]
    %v3668 = vld [vmem:[%s3664 + $0xc] sm:$0xf]
    %v3669 = vld [vmem:[%s3664 + $0x10] sm:$0xf]
    %v3670 = vld [vmem:[%s3664 + $0x14] sm:$0xf]
    %v3671 = vld [vmem:[%s3664 + $0x18] sm:$0xf]
    %v3672 = vld [vmem:[%s3664 + $0x1c] sm:$0xf]
    %v3673 = vld [vmem:[%s3664 + $0x20] sm:$0xf]
    %v3674 = vld [vmem:[%s3664 + $0x24] sm:$0xf]
    %v3675 = vld [vmem:[%s3664 + $0x28] sm:$0xf]
    %v3676 = vld [vmem:[%s3664 + $0x2c] sm:$0xf]
    %v3677 = vld [vmem:[%s3664 + $0x30] sm:$0xf]
    %v3678 = vld [vmem:[%s3664 + $0x34] sm:$0xf]
    %v3679 = vld [vmem:[%s3664 + $0x38] sm:$0xf]
    %v3680 = vld [vmem:[%s3664 + $0x3c] sm:$0xf]
    %v3681 = vld [vmem:[%s3664 + $0x40] sm:$0xf]
    %v3682 = vld [vmem:[%s3664 + $0x44] sm:$0xf]
    %v3683 = vld [vmem:[%s3664 + $0x48] sm:$0xf]
    %v3684 = vld [vmem:[%s3664 + $0x4c] sm:$0xf]
    %v3685 = vld [vmem:[%s3664 + $0x50] sm:$0xf]
    %v3686 = vld [vmem:[%s3664 + $0x54] sm:$0xf]
    %v3687 = vld [vmem:[%s3664 + $0x58] sm:$0xf]
    %v3688 = vld [vmem:[%s3664 + $0x5c] sm:$0xf]
    %v3689 = vld [vmem:[%s3664 + $0x60] sm:$0xf]
    %v3690 = vld [vmem:[%s3664 + $0x64] sm:$0xf]
    %v3691 = vld [vmem:[%s3664 + $0x68] sm:$0xf]
    %v3692 = vld [vmem:[%s3664 + $0x6c] sm:$0xf]
    %v3693 = vld [vmem:[%s3664 + $0x70] sm:$0xf]
    %v3694 = vld [vmem:[%s3664 + $0x74] sm:$0xf]
    %v3695 = vld [vmem:[%s3664 + $0x78] sm:$0xf]
    %v3696 = vld [vmem:[%s3664 + $0x7c] sm:$0xf]
    %v3697 = vld [vmem:[%s3664 + $0x80] sm:$0xf]
    %v3698 = vld [vmem:[%s3664 + $0x84] sm:$0xf]
    %v3699 = vld [vmem:[%s3664 + $0x88] sm:$0xf]
    %v3700 = vld [vmem:[%s3664 + $0x8c] sm:$0xf]
    %v3701 = vld [vmem:[%s3664 + $0x90] sm:$0xf]
    %v3702 = vld [vmem:[%s3664 + $0x94] sm:$0xf]
    %v3703 = vld [vmem:[%s3664 + $0x98] sm:$0xf]
    %v3704 = vld [vmem:[%s3664 + $0x9c] sm:$0xf]
    %v3705 = vld [vmem:[%s3664 + $0xa0] sm:$0xf]
    %v3706 = vld [vmem:[%s3664 + $0xa4] sm:$0xf]
    %v3707 = vld [vmem:[%s3664 + $0xa8] sm:$0xf]
    %v3708 = vld [vmem:[%s3664 + $0xac] sm:$0xf]
    %v3709 = vld [vmem:[%s3664 + $0xb0] sm:$0xf]
    %v3710 = vld [vmem:[%s3664 + $0xb4] sm:$0xf]
    %v3711 = vld [vmem:[%s3664 + $0xb8] sm:$0xf]
    %v3712 = vld [vmem:[%s3664 + $0xbc] sm:$0xf]
    %v3713 = vld [vmem:[%s3664 + $0xc0] sm:$0xf]
    %v3714 = vld [vmem:[%s3664 + $0xc4] sm:$0xf]
    %v3715 = vld [vmem:[%s3664 + $0xc8] sm:$0xf]
    %v3716 = vld [vmem:[%s3664 + $0xcc] sm:$0xf]
    %v3717 = vld [vmem:[%s3664 + $0xd0] sm:$0xf]
    %v3718 = vld [vmem:[%s3664 + $0xd4] sm:$0xf]
    %v3719 = vld [vmem:[%s3664 + $0xd8] sm:$0xf]
    %v3720 = vld [vmem:[%s3664 + $0xdc] sm:$0xf]
    %v3721 = vld [vmem:[%s3664 + $0xe0] sm:$0xf]
    %v3722 = vld [vmem:[%s3664 + $0xe4] sm:$0xf]
    %v3723 = vld [vmem:[%s3664 + $0xe8] sm:$0xf]
    %v3724 = vld [vmem:[%s3664 + $0xec] sm:$0xf]
    %v3725 = vld [vmem:[%s3664 + $0xf0] sm:$0xf]
    %v3726 = vld [vmem:[%s3664 + $0xf4] sm:$0xf]
    %v3727 = vld [vmem:[%s3664 + $0xf8] sm:$0xf]
    %v3728 = vld [vmem:[%s3664 + $0xfc] sm:$0xf]
    %v3729 = vpack.c.bf16 %v3652, %v3648
    %v3730 = vpack.c.bf16 %v3653, %v3649
    %v3731 = vpack.c.bf16 %v3654, %v3650
    %v3732 = vpack.c.bf16 %v3655, %v3651
    %v3733 = vpack.c.bf16 %v3660, %v3656
    %v3734 = vpack.c.bf16 %v3661, %v3657
    %v3735 = vpack.c.bf16 %v3662, %v3658
    %v3736 = vpack.c.bf16 %v3663, %v3659
    %v3801 = vunpack.c.l.b16 %v3665
    %v3802 = vunpack.c.l.b16 %v3666
    %v3803 = vunpack.c.l.b16 %v3667
    %v3804 = vunpack.c.l.b16 %v3668
    %v3805 = vunpack.c.l.b16 %v3669
    %v3806 = vunpack.c.l.b16 %v3670
    %v3807 = vunpack.c.l.b16 %v3671
    %v3808 = vunpack.c.l.b16 %v3672
    %v3809 = vunpack.c.l.b16 %v3673
    %v3810 = vunpack.c.l.b16 %v3674
    %v3811 = vunpack.c.l.b16 %v3675
    %v3812 = vunpack.c.l.b16 %v3676
    %v3813 = vunpack.c.l.b16 %v3677
    %v3814 = vunpack.c.l.b16 %v3678
    %v3815 = vunpack.c.l.b16 %v3679
    %v3816 = vunpack.c.l.b16 %v3680
    %v3817 = vunpack.c.l.b16 %v3681
    %v3818 = vunpack.c.l.b16 %v3682
    %v3819 = vunpack.c.l.b16 %v3683
    %v3820 = vunpack.c.l.b16 %v3684
    %v3821 = vunpack.c.l.b16 %v3685
    %v3822 = vunpack.c.l.b16 %v3686
    %v3823 = vunpack.c.l.b16 %v3687
    %v3824 = vunpack.c.l.b16 %v3688
    %v3825 = vunpack.c.l.b16 %v3689
    %v3826 = vunpack.c.l.b16 %v3690
    %v3827 = vunpack.c.l.b16 %v3691
    %v3828 = vunpack.c.l.b16 %v3692
    %v3829 = vunpack.c.l.b16 %v3693
    %v3830 = vunpack.c.l.b16 %v3694
    %v3831 = vunpack.c.l.b16 %v3695
    %v3832 = vunpack.c.l.b16 %v3696
    %v3833 = vunpack.c.l.b16 %v3697
    %v3834 = vunpack.c.l.b16 %v3698
    %v3835 = vunpack.c.l.b16 %v3699
    %v3836 = vunpack.c.l.b16 %v3700
    %v3837 = vunpack.c.l.b16 %v3701
    %v3838 = vunpack.c.l.b16 %v3702
    %v3839 = vunpack.c.l.b16 %v3703
    %v3840 = vunpack.c.l.b16 %v3704
    %v3841 = vunpack.c.l.b16 %v3705
    %v3842 = vunpack.c.l.b16 %v3706
    %v3843 = vunpack.c.l.b16 %v3707
    %v3844 = vunpack.c.l.b16 %v3708
    %v3845 = vunpack.c.l.b16 %v3709
    %v3846 = vunpack.c.l.b16 %v3710
    %v3847 = vunpack.c.l.b16 %v3711
    %v3848 = vunpack.c.l.b16 %v3712
    %v3849 = vunpack.c.l.b16 %v3713
    %v3850 = vunpack.c.l.b16 %v3714
    %v3851 = vunpack.c.l.b16 %v3715
    %v3852 = vunpack.c.l.b16 %v3716
    %v3853 = vunpack.c.l.b16 %v3717
    %v3854 = vunpack.c.l.b16 %v3718
    %v3855 = vunpack.c.l.b16 %v3719
    %v3856 = vunpack.c.l.b16 %v3720
    %v3857 = vunpack.c.l.b16 %v3721
    %v3858 = vunpack.c.l.b16 %v3722
    %v3859 = vunpack.c.l.b16 %v3723
    %v3860 = vunpack.c.l.b16 %v3724
    %v3861 = vunpack.c.l.b16 %v3725
    %v3862 = vunpack.c.l.b16 %v3726
    %v3863 = vunpack.c.l.b16 %v3727
    %v3864 = vunpack.c.l.b16 %v3728
    %v3865 = vpack.c.b16 %v3802, %v3801
    %v3866 = vpack.c.b16 %v3804, %v3803
    %v3867 = vpack.c.b16 %v3806, %v3805
    %v3868 = vpack.c.b16 %v3808, %v3807
    %v3869 = vpack.c.b16 %v3810, %v3809
    %v3870 = vpack.c.b16 %v3812, %v3811
    %v3871 = vpack.c.b16 %v3814, %v3813
    %v3872 = vpack.c.b16 %v3816, %v3815
    %v3873 = vpack.c.b16 %v3818, %v3817
    %v3874 = vpack.c.b16 %v3820, %v3819
    %v3875 = vpack.c.b16 %v3822, %v3821
    %v3876 = vpack.c.b16 %v3824, %v3823
    %v3877 = vpack.c.b16 %v3826, %v3825
    %v3878 = vpack.c.b16 %v3828, %v3827
    %v3879 = vpack.c.b16 %v3830, %v3829
    %v3880 = vpack.c.b16 %v3832, %v3831
    %v3881 = vpack.c.b16 %v3834, %v3833
    %v3882 = vpack.c.b16 %v3836, %v3835
    %v3883 = vpack.c.b16 %v3838, %v3837
    %v3884 = vpack.c.b16 %v3840, %v3839
    %v3885 = vpack.c.b16 %v3842, %v3841
    %v3886 = vpack.c.b16 %v3844, %v3843
    %v3887 = vpack.c.b16 %v3846, %v3845
    %v3888 = vpack.c.b16 %v3848, %v3847
    %v3889 = vpack.c.b16 %v3850, %v3849
    %v3890 = vpack.c.b16 %v3852, %v3851
    %v3891 = vpack.c.b16 %v3854, %v3853
    %v3892 = vpack.c.b16 %v3856, %v3855
    %v3893 = vpack.c.b16 %v3858, %v3857
    %v3894 = vpack.c.b16 %v3860, %v3859
    %v3895 = vpack.c.b16 %v3862, %v3861
    %v3896 = vpack.c.b16 %v3864, %v3863
    %3929 = vmatpush.bf16.msra.mxu0 %v3872
    %3930 = vmatpush.bf16.msra.mxu0 %v3871
    %3931 = vmatpush.bf16.msra.mxu0 %v3870
    %3932 = vmatpush.bf16.msra.mxu0 %v3869
    %3933 = vmatpush.bf16.msra.mxu0 %v3868
    %3934 = vmatpush.bf16.msra.mxu0 %v3867
    %3935 = vmatpush.bf16.msra.mxu0 %v3866
    %3936 = vmatpush.bf16.msra.mxu0 %v3865
    %3937 = vmatmul.bf16.gmra.mxu0 %v3729
    %v3938 = vpop.f32.mrf.mxu0
    %v3939 = vadd.f32 0.0, %v3938
    %v3940 = vpop.f32.mrf.mxu0
    %v3941 = vadd.f32 0.0, %v3940
    %3942 = vmatmul.bf16.gmra.mxu0 %v3733
    %v3943 = vpop.f32.mrf.mxu0
    %v3944 = vadd.f32 0.0, %v3943
    %v3945 = vpop.f32.mrf.mxu0
    %v3946 = vadd.f32 0.0, %v3945
    %3947 = vdwg.mxu0
    %3948 = vmatpush.bf16.msra.mxu0 %v3880
    %3949 = vmatpush.bf16.msra.mxu0 %v3879
    %3950 = vmatpush.bf16.msra.mxu0 %v3878
    %3951 = vmatpush.bf16.msra.mxu0 %v3877
    %3952 = vmatpush.bf16.msra.mxu0 %v3876
    %3953 = vmatpush.bf16.msra.mxu0 %v3875
    %3954 = vmatpush.bf16.msra.mxu0 %v3874
    %3955 = vmatpush.bf16.msra.mxu0 %v3873
    %3956 = vmatmul.bf16.gmra.mxu0 %v3730
    %v3957 = vpop.f32.mrf.mxu0
    %v3958 = vadd.f32 %v3939, %v3957
    %v3959 = vpop.f32.mrf.mxu0
    %v3960 = vadd.f32 %v3941, %v3959
    %3961 = vmatmul.bf16.gmra.mxu0 %v3734
    %v3962 = vpop.f32.mrf.mxu0
    %v3963 = vadd.f32 %v3944, %v3962
    %v3964 = vpop.f32.mrf.mxu0
    %v3965 = vadd.f32 %v3946, %v3964
    %3966 = vdwg.mxu0
    %3967 = vmatpush.bf16.msra.mxu0 %v3888
    %3968 = vmatpush.bf16.msra.mxu0 %v3887
    %3969 = vmatpush.bf16.msra.mxu0 %v3886
    %3970 = vmatpush.bf16.msra.mxu0 %v3885
    %3971 = vmatpush.bf16.msra.mxu0 %v3884
    %3972 = vmatpush.bf16.msra.mxu0 %v3883
    %3973 = vmatpush.bf16.msra.mxu0 %v3882
    %3974 = vmatpush.bf16.msra.mxu0 %v3881
    %3975 = vmatmul.bf16.gmra.mxu0 %v3731
    %v3976 = vpop.f32.mrf.mxu0
    %v3977 = vadd.f32 %v3958, %v3976
    %v3978 = vpop.f32.mrf.mxu0
    %v3979 = vadd.f32 %v3960, %v3978
    %3980 = vmatmul.bf16.gmra.mxu0 %v3735
    %v3981 = vpop.f32.mrf.mxu0
    %v3982 = vadd.f32 %v3963, %v3981
    %v3983 = vpop.f32.mrf.mxu0
    %v3984 = vadd.f32 %v3965, %v3983
    %3985 = vdwg.mxu0
    %3986 = vmatpush.bf16.msra.mxu0 %v3896
    %3987 = vmatpush.bf16.msra.mxu0 %v3895
    %3988 = vmatpush.bf16.msra.mxu0 %v3894
    %3989 = vmatpush.bf16.msra.mxu0 %v3893
    %3990 = vmatpush.bf16.msra.mxu0 %v3892
    %3991 = vmatpush.bf16.msra.mxu0 %v3891
    %3992 = vmatpush.bf16.msra.mxu0 %v3890
    %3993 = vmatpush.bf16.msra.mxu0 %v3889
    %3994 = vmatmul.bf16.gmra.mxu0 %v3732
    %v3995 = vpop.f32.mrf.mxu0
    %v3996 = vadd.f32 %v3977, %v3995
    %v3997 = vpop.f32.mrf.mxu0
    %v3998 = vadd.f32 %v3979, %v3997
    %3999 = vmatmul.bf16.gmra.mxu0 %v3736
    %v4000 = vpop.f32.mrf.mxu0
    %v4001 = vadd.f32 %v3982, %v4000
    %v4002 = vpop.f32.mrf.mxu0
    %v4003 = vadd.f32 %v3984, %v4002
    %4004 = vdwg.mxu0
    %v4005 = vadd.f32 %v3272, %v3996
    %v4006 = vadd.f32 %v3273, %v3998
    %v4007 = vadd.f32 %v3274, %v4001
    %v4008 = vadd.f32 %v3275, %v4003
    %v4009 = vperm.slane %v2192, 5
    %v4010 = vadd.f32 %v4005, %v4009
    %v4011 = vadd.f32 %v4006, %v4009
    %v4012 = vadd.f32 %v4007, %v4009
    %v4013 = vadd.f32 %v4008, %v4009
    %v4014 = vld [vmem:[%s8] sm:$0x1]
    %v4015 = vld [vmem:[%s8 + $0x1] sm:$0x1]
    %4016 = vadd.xlane.f32.xlu0 %v4010
    %v4017 = vpop.xlane.xlu0 %4016
    %4018 = vadd.xlane.f32.xlu0 %v4011
    %v4019 = vpop.xlane.xlu0 %4018
    %4020 = vadd.xlane.f32.xlu0 %v4012
    %v4021 = vpop.xlane.xlu0 %4020
    %4022 = vadd.xlane.f32.xlu0 %v4013
    %v4023 = vpop.xlane.xlu0 %4022
    %v4024 = vmul.f32 %v4017, %v378
    %v4025 = vmul.f32 %v4019, %v378
    %v4026 = vmul.f32 %v4021, %v378
    %v4027 = vmul.f32 %v4023, %v378
    %v4028 = vsub.f32 %v4010, %v4024
    %v4029 = vsub.f32 %v4011, %v4025
    %v4030 = vsub.f32 %v4012, %v4026
    %v4031 = vsub.f32 %v4013, %v4027
    %v4032 = vmul.f32 %v4028, %v4028
    %v4033 = vmul.f32 %v4029, %v4029
    %v4034 = vmul.f32 %v4030, %v4030
    %v4035 = vmul.f32 %v4031, %v4031
    %4036 = vadd.xlane.f32.xlu0 %v4032
    %v4037 = vpop.xlane.xlu0 %4036
    %4038 = vadd.xlane.f32.xlu0 %v4033
    %v4039 = vpop.xlane.xlu0 %4038
    %4040 = vadd.xlane.f32.xlu0 %v4034
    %v4041 = vpop.xlane.xlu0 %4040
    %4042 = vadd.xlane.f32.xlu0 %v4035
    %v4043 = vpop.xlane.xlu0 %4042
    %v4044 = vmul.f32 %v4037, %v378
    %v4045 = vmul.f32 %v4039, %v378
    %v4046 = vmul.f32 %v4041, %v378
    %v4047 = vmul.f32 %v4043, %v378
    %v4048 = vadd.f32 %v4044, 1e-05
    %v4049 = vadd.f32 %v4045, 1e-05
    %v4050 = vadd.f32 %v4046, 1e-05
    %v4051 = vadd.f32 %v4047, 1e-05
    %v4052 = vrsqrt.pop %v4048
    %v4053 = vmul.f32 %v4052, %v4048
    %v4054 = vmul.f32 %v4053, %v4052
    %v4055 = vmul.f32 0.5, %v4054
    %v4056 = vsub.f32 1.5, %v4055
    %v4057 = vmul.f32 %v4052, %v4056
    %vm4058 = vweird.f32 %v4048
    %vm4059 = vweird.f32 %v4052
    %vm4060 = vmor %vm4058, %vm4059
    %v4061 = vsel %vm4060, %v4052, %v4057
    %v4062 = vrsqrt.pop %v4049
    %v4063 = vmul.f32 %v4062, %v4049
    %v4064 = vmul.f32 %v4063, %v4062
    %v4065 = vmul.f32 0.5, %v4064
    %v4066 = vsub.f32 1.5, %v4065
    %v4067 = vmul.f32 %v4062, %v4066
    %vm4068 = vweird.f32 %v4049
    %vm4069 = vweird.f32 %v4062
    %vm4070 = vmor %vm4068, %vm4069
    %v4071 = vsel %vm4070, %v4062, %v4067
    %v4072 = vrsqrt.pop %v4050
    %v4073 = vmul.f32 %v4072, %v4050
    %v4074 = vmul.f32 %v4073, %v4072
    %v4075 = vmul.f32 0.5, %v4074
    %v4076 = vsub.f32 1.5, %v4075
    %v4077 = vmul.f32 %v4072, %v4076
    %vm4078 = vweird.f32 %v4050
    %vm4079 = vweird.f32 %v4072
    %vm4080 = vmor %vm4078, %vm4079
    %v4081 = vsel %vm4080, %v4072, %v4077
    %v4082 = vrsqrt.pop %v4051
    %v4083 = vmul.f32 %v4082, %v4051
    %v4084 = vmul.f32 %v4083, %v4082
    %v4085 = vmul.f32 0.5, %v4084
    %v4086 = vsub.f32 1.5, %v4085
    %v4087 = vmul.f32 %v4082, %v4086
    %vm4088 = vweird.f32 %v4051
    %vm4089 = vweird.f32 %v4082
    %vm4090 = vmor %vm4088, %vm4089
    %v4091 = vsel %vm4090, %v4082, %v4087
    %v4092 = vmul.f32 %v4028, %v4061
    %v4093 = vmul.f32 %v4029, %v4071
    %v4094 = vmul.f32 %v4030, %v4081
    %v4095 = vmul.f32 %v4031, %v4091
    %v4096 = vperm.slane %v4014, 0
    %v4097 = vmul.f32 %v4092, %v4096
    %v4098 = vmul.f32 %v4093, %v4096
    %v4099 = vmul.f32 %v4094, %v4096
    %v4100 = vmul.f32 %v4095, %v4096
    %v4101 = vperm.slane %v4015, 0
    %v4102 = vadd.f32 %v4097, %v4101
    %v4103 = vadd.f32 %v4098, %v4101
    %v4104 = vadd.f32 %v4099, %v4101
    %v4105 = vadd.f32 %v4100, %v4101
    %v4106 = vld [vmem:[#allocation12] sm:$0xf]
    %v4107 = vld [vmem:[#allocation12 + $0x4] sm:$0xf]
    %v4108 = vld [vmem:[#allocation12 + $0x8] sm:$0xf]
    %v4109 = vld [vmem:[#allocation12 + $0xc] sm:$0xf]
    %v4110 = vld [vmem:[#allocation12 + $0x10] sm:$0xf]
    %v4111 = vld [vmem:[#allocation12 + $0x14] sm:$0xf]
    %v4112 = vld [vmem:[#allocation12 + $0x18] sm:$0xf]
    %v4113 = vld [vmem:[#allocation12 + $0x1c] sm:$0xf]
    %v4114 = vld [vmem:[#allocation12 + $0x20] sm:$0xf]
    %v4115 = vld [vmem:[#allocation12 + $0x24] sm:$0xf]
    %v4116 = vld [vmem:[#allocation12 + $0x28] sm:$0xf]
    %v4117 = vld [vmem:[#allocation12 + $0x2c] sm:$0xf]
    %v4118 = vld [vmem:[#allocation12 + $0x30] sm:$0xf]
    %v4119 = vld [vmem:[#allocation12 + $0x34] sm:$0xf]
    %v4120 = vld [vmem:[#allocation12 + $0x38] sm:$0xf]
    %v4121 = vld [vmem:[#allocation12 + $0x3c] sm:$0xf]
    %v4122 = vpack.c.bf16 %v4103, %v4102
    %v4123 = vpack.c.bf16 %v4105, %v4104
    %v4124 = vld [vmem:[%s10] sm:$0x1]
    %v4126 = vperm.slane %v4124, 0
    %v4144 = vunpack.c.l.b16 %v4106
    %v4145 = vunpack.c.l.b16 %v4107
    %v4146 = vunpack.c.l.b16 %v4108
    %v4147 = vunpack.c.l.b16 %v4109
    %v4148 = vunpack.c.l.b16 %v4110
    %v4149 = vunpack.c.l.b16 %v4111
    %v4150 = vunpack.c.l.b16 %v4112
    %v4151 = vunpack.c.l.b16 %v4113
    %v4152 = vunpack.c.l.b16 %v4114
    %v4153 = vunpack.c.l.b16 %v4115
    %v4154 = vunpack.c.l.b16 %v4116
    %v4155 = vunpack.c.l.b16 %v4117
    %v4156 = vunpack.c.l.b16 %v4118
    %v4157 = vunpack.c.l.b16 %v4119
    %v4158 = vunpack.c.l.b16 %v4120
    %v4159 = vunpack.c.l.b16 %v4121
    %v4160 = vpack.c.b16 %v4145, %v4144
    %v4161 = vpack.c.b16 %v4147, %v4146
    %v4162 = vpack.c.b16 %v4149, %v4148
    %v4163 = vpack.c.b16 %v4151, %v4150
    %v4164 = vpack.c.b16 %v4153, %v4152
    %v4165 = vpack.c.b16 %v4155, %v4154
    %v4166 = vpack.c.b16 %v4157, %v4156
    %v4167 = vpack.c.b16 %v4159, %v4158
    %4176 = vmatpush.bf16.msra.mxu0 %v4167
    %4177 = vmatpush.bf16.msra.mxu0 %v4166
    %4178 = vmatpush.bf16.msra.mxu0 %v4165
    %4179 = vmatpush.bf16.msra.mxu0 %v4164
    %4180 = vmatpush.bf16.msra.mxu0 %v4163
    %4181 = vmatpush.bf16.msra.mxu0 %v4162
    %4182 = vmatpush.bf16.msra.mxu0 %v4161
    %4183 = vmatpush.bf16.msra.mxu0 %v4160
    %4184 = vmatmul.bf16.gmra.mxu0 %v4122
    %v4185 = vpop.f32.mrf.mxu0
    %v4186 = vadd.f32 %v4126, %v4185
    %v4187 = vpop.f32.mrf.mxu0
    %v4188 = vadd.f32 %v4126, %v4187
    %4189 = vmatmul.bf16.gmra.mxu0 %v4123
    %v4190 = vpop.f32.mrf.mxu0
    %v4191 = vadd.f32 %v4126, %v4190
    %v4192 = vpop.f32.mrf.mxu0
    %v4193 = vadd.f32 %v4126, %v4192
    %4194 = vdwg.mxu0
    %4195 = vst [vmem:[#allocation14] sm:$0xff] %v4186
    %4196 = vst [vmem:[#allocation14 + $0x8] sm:$0xff] %v4188
    %4197 = vst [vmem:[#allocation14 + $0x10] sm:$0xff] %v4191
    %4198 = vst [vmem:[#allocation14 + $0x18] sm:$0xff] %v4193
    // Predicated region
    $region70: #{tpu_custom_call.1} parent=1 // pred_check
      _
    $region71: #{tpu_custom_call.1} parent=1 // pred_check_branch
      %4200 = sbr.rel (0) target = $region73
    $region72: #{tpu_custom_call.1} parent=1 // pred_region
      %4202 = vsyncadd [#allocation5], 0
      %s4203 = sshll.u32 [#allocation14], 4
      %s4204 = int_to_ptr.vmem [resolvable:$true] %s4203
      %s4205 = sshll.u32 %s11, 4
      %s4206 = int_to_ptr.hbm [resolvable:$true] %s4205
      %4211 = dma.vmem_to_hbm [thread:$0]  %s4204, 512, %s4206, [#allocation5], 128, 128, 8
    $region73: #{tpu_custom_call.1} parent=1 // pred_fallthru
      _
    // Predicated region
    $region74: #{tpu_custom_call.1} parent=1 // pred_check
      _
    $region75: #{tpu_custom_call.1} parent=1 // pred_check_branch
      %4213 = sbr.rel (0) target = $region77
    $region76: #{tpu_custom_call.1} parent=1 // pred_region
      %4215 = dma.done [#allocation5], 512
    $region77: #{tpu_custom_call.1} parent=1 // pred_fallthru
      _
    %4216 = vsyncpa [#allocation4], 1
    %4217 = vsyncpa [#allocation7], 1
    %4218 = vsyncpa [#allocation10], 1
    %4219 = vsyncpa [#allocation13], 1
    %4220 = vsyncpa [#allocation5], 1

</llo_original>
